<compile_context>
chip_gen: v6e
topology: v6e:2x2x1
jax: 0.10.0
libtpu: 0.0.40
codegen_flags: <defaults>
</compile_context>

<pallas_src>
import functools

import jax
import jax.numpy as jnp
from jax.experimental import pallas as pl
from jax.experimental.pallas import tpu as pltpu

IN_FEATURES = 10 * 16        # 160
H1 = 512
H2 = 1024
OUT_FEATURES = 1 * 28 * 28   # 784


def _mlp_kernel(x_ref, w1_ref, b1_ref, w2_ref, b2_ref, w3_ref, b3_ref, o_ref):
    # x arrives f32; cast the (tm, 160) tile to bf16 in VMEM (cheap, hidden under MXU).
    x = x_ref[...].astype(jnp.bfloat16)
    # fc1 + relu (bf16 operands, f32 MXU accumulation)
    h1 = jnp.dot(x, w1_ref[...], preferred_element_type=jnp.float32)
    h1 = jnp.maximum(h1 + b1_ref[...], 0.0).astype(jnp.bfloat16)
    # fc2 + relu
    h2 = jnp.dot(h1, w2_ref[...], preferred_element_type=jnp.float32)
    h2 = jnp.maximum(h2 + b2_ref[...], 0.0).astype(jnp.bfloat16)
    # fc3 + sigmoid: exp and the reciprocal both run on the EUP slot (no VALU divide).
    z = jnp.dot(h2, w3_ref[...], preferred_element_type=jnp.float32) + b3_ref[...]
    o_ref[...] = pl.reciprocal(1.0 + jnp.exp(-z), approx=True).astype(o_ref.dtype)


def init_params(key):
    """Deterministic init mimicking nn.Linear defaults: U(-1/sqrt(fan_in), 1/sqrt(fan_in)).
    Weights are stored already transposed as (in, out) so the kernel does x @ W."""
    def linear(key, fan_in, fan_out):
        kw, kb = jax.random.split(key)
        bound = 1.0 / jnp.sqrt(fan_in)
        w = jax.random.uniform(kw, (fan_in, fan_out), jnp.float32, -bound, bound)
        b = jax.random.uniform(kb, (1, fan_out), jnp.float32, -bound, bound)
        return w, b

    k1, k2, k3 = jax.random.split(key, 3)
    w1, b1 = linear(k1, IN_FEATURES, H1)
    w2, b2 = linear(k2, H1, H2)
    w3, b3 = linear(k3, H2, OUT_FEATURES)
    return (w1, b1, w2, b2, w3, b3)


def prepare_params(params):
    """f32 (in, out) params -> kernel params: bf16 weights, f32 biases."""
    w1, b1, w2, b2, w3, b3 = params
    return (w1.astype(jnp.bfloat16), b1,
            w2.astype(jnp.bfloat16), b2,
            w3.astype(jnp.bfloat16), b3)


def _round_up(n, m):
    return (n + m - 1) // m * m


def _choose_tile(batch, block_m):
    """Batch tile: <= block_m, multiple of 8 sublanes, minimal batch padding, and
    >=2 grid steps whenever the batch is big enough (so v7x's two TCs both get work)."""
    n_tiles = max(pl.cdiv(batch, block_m), 2 if batch > 8 else 1)
    return _round_up(pl.cdiv(batch, n_tiles), 8)


@functools.partial(jax.jit, static_argnames=("block_m",))
def reconstruction_network(x, kernel_params, block_m=1024):
    """x: (B, 160) float32 -> (B, 1, 28, 28) float32."""
    w1, b1, w2, b2, w3, b3 = kernel_params
    B = x.shape[0]
    tm = _choose_tile(B, block_m)
    b_pad = _round_up(B, tm)
    xp = x if b_pad == B else jnp.pad(x, ((0, b_pad - B), (0, 0)))

    # Per-step VMEM working set estimate (double-buffered x/out tiles, f32+bf16
    # intermediates, resident weights double-buffered by default) + ~30% slack.
    # TODO(synk): single-buffer the resident weights via pipeline_mode=pl.Buffered(1)
    # once that lowering path is confirmed on this jax version (saves ~3 MiB VMEM).
    weight_bytes = 2 * 2 * (IN_FEATURES * H1 + H1 * H2 + H2 * OUT_FEATURES)
    per_row_bytes = (4 * (2 * IN_FEATURES + 2 * OUT_FEATURES + H1 + H2 + OUT_FEATURES)
                     + 2 * (IN_FEATURES + H1 + H2))
    vmem_limit = min(int(1.3 * (weight_bytes + tm * per_row_bytes)) + (4 << 20), 98 << 20)

    resident = lambda arr: pl.BlockSpec(arr.shape, lambda i: (0, 0))  # stays VMEM-resident

    out2d = pl.pallas_call(
        _mlp_kernel,
        out_shape=jax.ShapeDtypeStruct((b_pad, OUT_FEATURES), jnp.float32),
        grid=(b_pad // tm,),
        in_specs=[
            pl.BlockSpec((tm, IN_FEATURES), lambda i: (i, 0)),
            resident(w1), resident(b1),
            resident(w2), resident(b2),
            resident(w3), resident(b3),
        ],
        out_specs=pl.BlockSpec((tm, OUT_FEATURES), lambda i: (i, 0)),
        compiler_params=pltpu.CompilerParams(
            dimension_semantics=("parallel",),   # shard batch tiles across v7x's 2 TCs
            vmem_limit_bytes=vmem_limit,
        ),
    )(xp, w1, b1, w2, b2, w3, b3)

    if b_pad != B:
        out2d = out2d[:B]
    return out2d.reshape(-1, 1, 28, 28)   # metadata-only reshape (lane width already 784)


def _reference_bf16(x, params):
    """Pure-JAX reference with the same bf16-weight / f32-accumulation semantics."""
    w1, b1, w2, b2, w3, b3 = params
    h = jnp.maximum(
        jnp.dot(x.astype(jnp.bfloat16), w1.astype(jnp.bfloat16),
                preferred_element_type=jnp.float32) + b1, 0.0)
    h = jnp.maximum(
        jnp.dot(h.astype(jnp.bfloat16), w2.astype(jnp.bfloat16),
                preferred_element_type=jnp.float32) + b2, 0.0)
    return jax.nn.sigmoid(
        jnp.dot(h.astype(jnp.bfloat16), w3.astype(jnp.bfloat16),
                preferred_element_type=jnp.float32) + b3).reshape(-1, 1, 28, 28)


def _reference_f32(x, params):
    """Original f32 module semantics."""
    w1, b1, w2, b2, w3, b3 = params
    h = jnp.maximum(x @ w1 + b1, 0.0)
    h = jnp.maximum(h @ w2 + b2, 0.0)
    return jax.nn.sigmoid(h @ w3 + b3).reshape(-1, 1, 28, 28)


if __name__ == "__main__":
    key = jax.random.PRNGKey(0)
    kparam, kx1, kx2 = jax.random.split(key, 3)
    params = init_params(kparam)
    kernel_params = prepare_params(params)

    # Small single-tile case (B=2).
    B = 2
    x = jax.random.normal(kx1, (B, IN_FEATURES), jnp.float32)
    out = jax.block_until_ready(reconstruction_network(x, kernel_params))
    assert out.shape == (B, 1, 28, 28), out.shape

    ref = _reference_bf16(x, params)
    assert jnp.allclose(out, ref, atol=5e-3, rtol=5e-3), float(jnp.max(jnp.abs(out - ref)))
    ref_f32 = _reference_f32(x, params)
    assert jnp.allclose(out, ref_f32, atol=5e-2), float(jnp.max(jnp.abs(out - ref_f32)))

    # Multi-tile case with batch padding (B=300 -> tm=152, grid=(2,), b_pad=304).
    B2 = 300
    x2 = jax.random.normal(kx2, (B2, IN_FEATURES), jnp.float32)
    out2 = jax.block_until_ready(reconstruction_network(x2, kernel_params))
    assert out2.shape == (B2, 1, 28, 28), out2.shape
    ref2 = _reference_bf16(x2, params)
    assert jnp.allclose(out2, ref2, atol=5e-3, rtol=5e-3), float(jnp.max(jnp.abs(out2 - ref2)))

    print("KERNEL_OK")
</pallas_src>

<mosaic_0001>
module attributes {stable_mosaic.version = 11 : i64} {
  func.func @_mlp_kernel(%arg0: i32, %arg1: memref<8x160xf32, #tpu.memory_space<vmem>>, %arg2: memref<160x512xbf16, #tpu.memory_space<vmem>>, %arg3: memref<1x512xf32, #tpu.memory_space<vmem>>, %arg4: memref<512x1024xbf16, #tpu.memory_space<vmem>>, %arg5: memref<1x1024xf32, #tpu.memory_space<vmem>>, %arg6: memref<1024x784xbf16, #tpu.memory_space<vmem>>, %arg7: memref<1x784xf32, #tpu.memory_space<vmem>>, %arg8: memref<8x784xf32, #tpu.memory_space<vmem>>) attributes {dimension_semantics = [#tpu.dimension_semantics<parallel>], iteration_bounds = array<i64: 1>, scalar_prefetch = 0 : i64, scratch_operands = 0 : i64, tpu.core_type = #tpu.core_type<tc>, window_params = [{transform_indices = @transform_0, window_bounds = array<i64: 8, 160>}, {pipeline_mode = #tpu.pipeline_mode<synchronous>, transform_indices = @transform_1, window_bounds = array<i64: 160, 512>}, {pipeline_mode = #tpu.pipeline_mode<synchronous>, transform_indices = @transform_2, window_bounds = array<i64: 1, 512>}, {pipeline_mode = #tpu.pipeline_mode<synchronous>, transform_indices = @transform_3, window_bounds = array<i64: 512, 1024>}, {pipeline_mode = #tpu.pipeline_mode<synchronous>, transform_indices = @transform_4, window_bounds = array<i64: 1, 1024>}, {pipeline_mode = #tpu.pipeline_mode<synchronous>, transform_indices = @transform_5, window_bounds = array<i64: 1024, 784>}, {pipeline_mode = #tpu.pipeline_mode<synchronous>, transform_indices = @transform_6, window_bounds = array<i64: 1, 784>}, {transform_indices = @transform_7, window_bounds = array<i64: 8, 784>}]} {
    %c0 = arith.constant 0 : index
    %c0_0 = arith.constant 0 : index
    %0 = vector.load %arg1[%c0, %c0_0] : memref<8x160xf32, #tpu.memory_space<vmem>>, vector<8x160xf32>
    %1 = arith.truncf %0 : vector<8x160xf32> to vector<8x160xbf16>
    %c0_1 = arith.constant 0 : index
    %c0_2 = arith.constant 0 : index
    %2 = vector.load %arg2[%c0_1, %c0_2] : memref<160x512xbf16, #tpu.memory_space<vmem>>, vector<160x512xbf16>
    %cst = arith.constant dense<0.000000e+00> : vector<8x512xf32>
    %3 = tpu.matmul %1, %2, %cst {dimension_numbers = #tpu.dot_dimension_numbers<[1], [0], [0], [1], [0, 0, 1, 1], [], []>} : vector<8x160xbf16>, vector<160x512xbf16>, vector<8x512xf32> -> vector<8x512xf32>
    %c0_3 = arith.constant 0 : index
    %c0_4 = arith.constant 0 : index
    %4 = vector.load %arg3[%c0_3, %c0_4] : memref<1x512xf32, #tpu.memory_space<vmem>>, vector<1x512xf32>
    %5 = vector.broadcast %4 : vector<1x512xf32> to vector<8x512xf32>
    %6 = arith.addf %3, %5 : vector<8x512xf32>
    %cst_5 = arith.constant 0.000000e+00 : f32
    %7 = vector.broadcast %cst_5 : f32 to vector<8x512xf32>
    %8 = arith.maximumf %6, %7 : vector<8x512xf32>
    %9 = arith.truncf %8 : vector<8x512xf32> to vector<8x512xbf16>
    %c0_6 = arith.constant 0 : index
    %c0_7 = arith.constant 0 : index
    %10 = vector.load %arg4[%c0_6, %c0_7] : memref<512x1024xbf16, #tpu.memory_space<vmem>>, vector<512x1024xbf16>
    %cst_8 = arith.constant dense<0.000000e+00> : vector<8x1024xf32>
    %11 = tpu.matmul %9, %10, %cst_8 {dimension_numbers = #tpu.dot_dimension_numbers<[1], [0], [0], [1], [0, 0, 1, 1], [], []>} : vector<8x512xbf16>, vector<512x1024xbf16>, vector<8x1024xf32> -> vector<8x1024xf32>
    %c0_9 = arith.constant 0 : index
    %c0_10 = arith.constant 0 : index
    %12 = vector.load %arg5[%c0_9, %c0_10] : memref<1x1024xf32, #tpu.memory_space<vmem>>, vector<1x1024xf32>
    %13 = vector.broadcast %12 : vector<1x1024xf32> to vector<8x1024xf32>
    %14 = arith.addf %11, %13 : vector<8x1024xf32>
    %cst_11 = arith.constant 0.000000e+00 : f32
    %15 = vector.broadcast %cst_11 : f32 to vector<8x1024xf32>
    %16 = arith.maximumf %14, %15 : vector<8x1024xf32>
    %17 = arith.truncf %16 : vector<8x1024xf32> to vector<8x1024xbf16>
    %c0_12 = arith.constant 0 : index
    %c0_13 = arith.constant 0 : index
    %18 = vector.load %arg6[%c0_12, %c0_13] : memref<1024x784xbf16, #tpu.memory_space<vmem>>, vector<1024x784xbf16>
    %cst_14 = arith.constant dense<0.000000e+00> : vector<8x784xf32>
    %19 = tpu.matmul %17, %18, %cst_14 {dimension_numbers = #tpu.dot_dimension_numbers<[1], [0], [0], [1], [0, 0, 1, 1], [], []>} : vector<8x1024xbf16>, vector<1024x784xbf16>, vector<8x784xf32> -> vector<8x784xf32>
    %c0_15 = arith.constant 0 : index
    %c0_16 = arith.constant 0 : index
    %20 = vector.load %arg7[%c0_15, %c0_16] : memref<1x784xf32, #tpu.memory_space<vmem>>, vector<1x784xf32>
    %21 = vector.broadcast %20 : vector<1x784xf32> to vector<8x784xf32>
    %22 = arith.addf %19, %21 : vector<8x784xf32>
    %cst_17 = arith.constant 0.000000e+00 : f32
    %23 = vector.broadcast %cst_17 : f32 to vector<8x784xf32>
    %24 = arith.subf %23, %22 : vector<8x784xf32>
    %25 = math.exp %24 : vector<8x784xf32>
    %cst_18 = arith.constant 1.000000e+00 : f32
    %26 = vector.broadcast %cst_18 : f32 to vector<8x784xf32>
    %27 = arith.addf %26, %25 : vector<8x784xf32>
    %28 = tpu.reciprocal %27 {approx = true} : vector<8x784xf32> -> vector<8x784xf32>
    %c0_19 = arith.constant 0 : index
    %c0_20 = arith.constant 0 : index
    %29 = vector.load %arg8[%c0_19, %c0_20] : memref<8x784xf32, #tpu.memory_space<vmem>>, vector<8x784xf32>
    tpu.vector_store %arg8[%c0_19, %c0_20], %28 {strides = array<i32>} : memref<8x784xf32, #tpu.memory_space<vmem>>, vector<8x784xf32>,
    return
  }
  func.func @transform_0(%arg0: i32) -> (i32, i32) {
    %c0_i32 = arith.constant 0 : i32
    %c0_i32_0 = arith.constant 0 : i32
    return %arg0, %c0_i32 : i32, i32
  }
  func.func @transform_1(%arg0: i32) -> (i32, i32) {
    %c0_i32 = arith.constant 0 : i32
    %c0_i32_0 = arith.constant 0 : i32
    %c0_i32_1 = arith.constant 0 : i32
    return %c0_i32, %c0_i32_0 : i32, i32
  }
  func.func @transform_2(%arg0: i32) -> (i32, i32) {
    %c0_i32 = arith.constant 0 : i32
    %c0_i32_0 = arith.constant 0 : i32
    %c0_i32_1 = arith.constant 0 : i32
    return %c0_i32, %c0_i32_0 : i32, i32
  }
  func.func @transform_3(%arg0: i32) -> (i32, i32) {
    %c0_i32 = arith.constant 0 : i32
    %c0_i32_0 = arith.constant 0 : i32
    %c0_i32_1 = arith.constant 0 : i32
    return %c0_i32, %c0_i32_0 : i32, i32
  }
  func.func @transform_4(%arg0: i32) -> (i32, i32) {
    %c0_i32 = arith.constant 0 : i32
    %c0_i32_0 = arith.constant 0 : i32
    %c0_i32_1 = arith.constant 0 : i32
    return %c0_i32, %c0_i32_0 : i32, i32
  }
  func.func @transform_5(%arg0: i32) -> (i32, i32) {
    %c0_i32 = arith.constant 0 : i32
    %c0_i32_0 = arith.constant 0 : i32
    %c0_i32_1 = arith.constant 0 : i32
    return %c0_i32, %c0_i32_0 : i32, i32
  }
  func.func @transform_6(%arg0: i32) -> (i32, i32) {
    %c0_i32 = arith.constant 0 : i32
    %c0_i32_0 = arith.constant 0 : i32
    %c0_i32_1 = arith.constant 0 : i32
    return %c0_i32, %c0_i32_0 : i32, i32
  }
  func.func @transform_7(%arg0: i32) -> (i32, i32) {
    %c0_i32 = arith.constant 0 : i32
    %c0_i32_0 = arith.constant 0 : i32
    return %arg0, %c0_i32 : i32, i32
  }
}

</mosaic_0001>

<llo_original>
// kernel: reconstruction_network.1
$region0: #{reconstruction_network.1}
  #allocation0 [shape = 'u32[]', space=smem, size = 0x4, offset = 0x4, fixed_abs, tag = 'smem constant byte address 0x4 - core index']
  #allocation1 [shape = 'u32[144,128]{1,0:T(1,128)}', space=vmem, size = 0x12000, scoped, tag = 'internal scratch']
  %s0 = inlined_call_operand.vmem [shape: f32[8,160], index: 0, kind: input, shape index: {}]
  %s1 = inlined_call_operand.vmem [shape: bf16[160,512], index: 1, kind: input, shape index: {}]
  %s2 = inlined_call_operand.vmem [shape: f32[1,512], index: 2, kind: input, shape index: {}]
  %s3 = inlined_call_operand.vmem [shape: bf16[512,1024], index: 3, kind: input, shape index: {}]
  %s4 = inlined_call_operand.vmem [shape: f32[1,1024], index: 4, kind: input, shape index: {}]
  %s5 = inlined_call_operand.vmem [shape: bf16[1024,784], index: 5, kind: input, shape index: {}]
  %s6 = inlined_call_operand.vmem [shape: f32[1,784], index: 6, kind: input, shape index: {}]
  %s7 = inlined_call_operand.vmem [shape: f32[8,784], index: 7, kind: output, shape index: {}]
  %s8 = sld [smem:[#allocation0]]
  $region38: #{reconstruction_network.1} parent=0
    _
  %s10 = ssub.s32 1, %s8
  %s11 = scalar_select 0, %s10, %s8
  // Predicated region
  $region2: #{reconstruction_network.1} parent=0 // pred_check
    _
  $region3: #{reconstruction_network.1} parent=0 // pred_check_branch
    %13 = sbr.rel (0) target = $region5
  $region4: #{reconstruction_network.1} parent=0 // pred_region
    _
  $region5: #{reconstruction_network.1} parent=0 // pred_fallthru
    _
  // Predicated region
  $region6: #{reconstruction_network.1} parent=0 // pred_check
    _
  $region7: #{reconstruction_network.1} parent=0 // pred_check_branch
    %15 = sbr.rel (0) target = $region9
  $region8: #{reconstruction_network.1} parent=0 // pred_region
    _
  $region9: #{reconstruction_network.1} parent=0 // pred_fallthru
    _
  // Predicated region
  $region10: #{reconstruction_network.1} parent=0 // pred_check
    _
  $region11: #{reconstruction_network.1} parent=0 // pred_check_branch
    %17 = sbr.rel (0) target = $region13
  $region12: #{reconstruction_network.1} parent=0 // pred_region
    _
  $region13: #{reconstruction_network.1} parent=0 // pred_fallthru
    _
  // Predicated region
  $region14: #{reconstruction_network.1} parent=0 // pred_check
    _
  $region15: #{reconstruction_network.1} parent=0 // pred_check_branch
    %19 = sbr.rel (0) target = $region17
  $region16: #{reconstruction_network.1} parent=0 // pred_region
    _
  $region17: #{reconstruction_network.1} parent=0 // pred_fallthru
    _
  // Predicated region
  $region18: #{reconstruction_network.1} parent=0 // pred_check
    _
  $region19: #{reconstruction_network.1} parent=0 // pred_check_branch
    %21 = sbr.rel (0) target = $region21
  $region20: #{reconstruction_network.1} parent=0 // pred_region
    _
  $region21: #{reconstruction_network.1} parent=0 // pred_fallthru
    _
  // Predicated region
  $region22: #{reconstruction_network.1} parent=0 // pred_check
    _
  $region23: #{reconstruction_network.1} parent=0 // pred_check_branch
    %23 = sbr.rel (0) target = $region25
  $region24: #{reconstruction_network.1} parent=0 // pred_region
    _
  $region25: #{reconstruction_network.1} parent=0 // pred_fallthru
    _
  // Predicated region
  $region26: #{reconstruction_network.1} parent=0 // pred_check
    _
  $region27: #{reconstruction_network.1} parent=0 // pred_check_branch
    %25 = sbr.rel (0) target = $region29
  $region28: #{reconstruction_network.1} parent=0 // pred_region
    _
  $region29: #{reconstruction_network.1} parent=0 // pred_fallthru
    _
  %v27 = vld [vmem:[%s0] sm:$0xff]
  %v28 = vld [vmem:[%s0 + $0x8] sm:$0xff]
  %v29 = vpack.c.bf16 %v27, %v27
  %v30 = vpack.c.bf16 %v28, %v28
  %v31 = vld [vmem:[%s1] sm:$0xff]
  %v32 = vld [vmem:[%s1 + $0x8] sm:$0xff]
  %v33 = vld [vmem:[%s1 + $0x10] sm:$0xff]
  %v34 = vld [vmem:[%s1 + $0x18] sm:$0xff]
  %v35 = vld [vmem:[%s1 + $0x20] sm:$0xff]
  %v36 = vld [vmem:[%s1 + $0x28] sm:$0xff]
  %v37 = vld [vmem:[%s1 + $0x30] sm:$0xff]
  %v38 = vld [vmem:[%s1 + $0x38] sm:$0xff]
  %v39 = vld [vmem:[%s1 + $0x40] sm:$0xff]
  %v40 = vld [vmem:[%s1 + $0x48] sm:$0xff]
  %v41 = vld [vmem:[%s1 + $0x50] sm:$0xff]
  %v42 = vld [vmem:[%s1 + $0x58] sm:$0xff]
  %v43 = vld [vmem:[%s1 + $0x60] sm:$0xff]
  %v44 = vld [vmem:[%s1 + $0x68] sm:$0xff]
  %v45 = vld [vmem:[%s1 + $0x70] sm:$0xff]
  %v46 = vld [vmem:[%s1 + $0x78] sm:$0xff]
  %v47 = vld [vmem:[%s1 + $0x80] sm:$0xff]
  %v48 = vld [vmem:[%s1 + $0x88] sm:$0xff]
  %v49 = vld [vmem:[%s1 + $0x90] sm:$0xff]
  %v50 = vld [vmem:[%s1 + $0x98] sm:$0xff]
  %v51 = vld [vmem:[%s1 + $0xa0] sm:$0xff]
  %v52 = vld [vmem:[%s1 + $0xa8] sm:$0xff]
  %v53 = vld [vmem:[%s1 + $0xb0] sm:$0xff]
  %v54 = vld [vmem:[%s1 + $0xb8] sm:$0xff]
  %v55 = vld [vmem:[%s1 + $0xc0] sm:$0xff]
  %v56 = vld [vmem:[%s1 + $0xc8] sm:$0xff]
  %v57 = vld [vmem:[%s1 + $0xd0] sm:$0xff]
  %v58 = vld [vmem:[%s1 + $0xd8] sm:$0xff]
  %v59 = vld [vmem:[%s1 + $0xe0] sm:$0xff]
  %v60 = vld [vmem:[%s1 + $0xe8] sm:$0xff]
  %v61 = vld [vmem:[%s1 + $0xf0] sm:$0xff]
  %v62 = vld [vmem:[%s1 + $0xf8] sm:$0xff]
  %v63 = vld [vmem:[%s1 + $0x100] sm:$0xff]
  %v64 = vld [vmem:[%s1 + $0x108] sm:$0xff]
  %v65 = vld [vmem:[%s1 + $0x110] sm:$0xff]
  %v66 = vld [vmem:[%s1 + $0x118] sm:$0xff]
  %v67 = vld [vmem:[%s1 + $0x120] sm:$0xff]
  %v68 = vld [vmem:[%s1 + $0x128] sm:$0xff]
  %v69 = vld [vmem:[%s1 + $0x130] sm:$0xff]
  %v70 = vld [vmem:[%s1 + $0x138] sm:$0xff]
  %v71 = vld [vmem:[%s2] sm:$0xf]
  %v73 = vlaneseq
  %v74 = vshrl.u32 %v73, 7
  %v75 = vsub.s32 0, %v74
  %v76 = vrot.slane %v71, %v75
  %v77 = vlaneseq
  %v78 = vshrl.u32 %v77, 7
  %v79 = vsub.s32 1, %v78
  %v80 = vrot.slane %v71, %v79
  %v81 = vlaneseq
  %v82 = vshrl.u32 %v81, 7
  %v83 = vsub.s32 2, %v82
  %v84 = vrot.slane %v71, %v83
  %v85 = vlaneseq
  %v86 = vshrl.u32 %v85, 7
  %v87 = vsub.s32 3, %v86
  %v88 = vrot.slane %v71, %v87
  %v133 = vunpack.c.l.b16 %v31
  %v134 = vunpack.c.h.b16 %v31
  %v135 = vunpack.c.l.b16 %v32
  %v136 = vunpack.c.h.b16 %v32
  %v137 = vunpack.c.l.b16 %v33
  %v138 = vunpack.c.h.b16 %v33
  %v139 = vunpack.c.l.b16 %v34
  %v140 = vunpack.c.h.b16 %v34
  %v141 = vunpack.c.l.b16 %v35
  %v142 = vunpack.c.h.b16 %v35
  %v143 = vunpack.c.l.b16 %v36
  %v144 = vunpack.c.h.b16 %v36
  %v145 = vunpack.c.l.b16 %v37
  %v146 = vunpack.c.h.b16 %v37
  %v147 = vunpack.c.l.b16 %v38
  %v148 = vunpack.c.h.b16 %v38
  %v149 = vunpack.c.l.b16 %v39
  %v150 = vunpack.c.h.b16 %v39
  %v151 = vunpack.c.l.b16 %v40
  %v152 = vunpack.c.h.b16 %v40
  %v153 = vunpack.c.l.b16 %v41
  %v154 = vunpack.c.h.b16 %v41
  %v155 = vunpack.c.l.b16 %v42
  %v156 = vunpack.c.h.b16 %v42
  %v157 = vunpack.c.l.b16 %v43
  %v158 = vunpack.c.h.b16 %v43
  %v159 = vunpack.c.l.b16 %v44
  %v160 = vunpack.c.h.b16 %v44
  %v161 = vunpack.c.l.b16 %v45
  %v162 = vunpack.c.h.b16 %v45
  %v163 = vunpack.c.l.b16 %v46
  %v164 = vunpack.c.h.b16 %v46
  %v165 = vunpack.c.l.b16 %v47
  %v166 = vunpack.c.h.b16 %v47
  %v167 = vunpack.c.l.b16 %v48
  %v168 = vunpack.c.h.b16 %v48
  %v169 = vunpack.c.l.b16 %v49
  %v170 = vunpack.c.h.b16 %v49
  %v171 = vunpack.c.l.b16 %v50
  %v172 = vunpack.c.h.b16 %v50
  %v173 = vunpack.c.l.b16 %v51
  %v174 = vunpack.c.h.b16 %v51
  %v175 = vunpack.c.l.b16 %v52
  %v176 = vunpack.c.h.b16 %v52
  %v177 = vunpack.c.l.b16 %v53
  %v178 = vunpack.c.h.b16 %v53
  %v179 = vunpack.c.l.b16 %v54
  %v180 = vunpack.c.h.b16 %v54
  %v181 = vunpack.c.l.b16 %v55
  %v182 = vunpack.c.h.b16 %v55
  %v183 = vunpack.c.l.b16 %v56
  %v184 = vunpack.c.h.b16 %v56
  %v185 = vunpack.c.l.b16 %v57
  %v186 = vunpack.c.h.b16 %v57
  %v187 = vunpack.c.l.b16 %v58
  %v188 = vunpack.c.h.b16 %v58
  %v189 = vunpack.c.l.b16 %v59
  %v190 = vunpack.c.h.b16 %v59
  %v191 = vunpack.c.l.b16 %v60
  %v192 = vunpack.c.h.b16 %v60
  %v193 = vunpack.c.l.b16 %v61
  %v194 = vunpack.c.h.b16 %v61
  %v195 = vunpack.c.l.b16 %v62
  %v196 = vunpack.c.h.b16 %v62
  %v197 = vunpack.c.l.b16 %v63
  %v198 = vunpack.c.h.b16 %v63
  %v199 = vunpack.c.l.b16 %v64
  %v200 = vunpack.c.h.b16 %v64
  %v201 = vunpack.c.l.b16 %v65
  %v202 = vunpack.c.h.b16 %v65
  %v203 = vunpack.c.l.b16 %v66
  %v204 = vunpack.c.h.b16 %v66
  %v205 = vunpack.c.l.b16 %v67
  %v206 = vunpack.c.h.b16 %v67
  %v207 = vunpack.c.l.b16 %v68
  %v208 = vunpack.c.h.b16 %v68
  %v209 = vunpack.c.l.b16 %v69
  %v210 = vunpack.c.h.b16 %v69
  %v211 = vunpack.c.l.b16 %v70
  %v212 = vunpack.c.h.b16 %v70
  %v213 = vpack.c.b16 %v137, %v133
  %v214 = vpack.c.b16 %v138, %v134
  %v215 = vpack.c.b16 %v139, %v135
  %v216 = vpack.c.b16 %v140, %v136
  %v217 = vpack.c.b16 %v145, %v141
  %v218 = vpack.c.b16 %v146, %v142
  %v219 = vpack.c.b16 %v147, %v143
  %v220 = vpack.c.b16 %v148, %v144
  %v221 = vpack.c.b16 %v153, %v149
  %v222 = vpack.c.b16 %v154, %v150
  %v223 = vpack.c.b16 %v155, %v151
  %v224 = vpack.c.b16 %v156, %v152
  %v225 = vpack.c.b16 %v161, %v157
  %v226 = vpack.c.b16 %v162, %v158
  %v227 = vpack.c.b16 %v163, %v159
  %v228 = vpack.c.b16 %v164, %v160
  %v229 = vpack.c.b16 %v169, %v165
  %v230 = vpack.c.b16 %v170, %v166
  %v231 = vpack.c.b16 %v171, %v167
  %v232 = vpack.c.b16 %v172, %v168
  %v233 = vpack.c.b16 %v177, %v173
  %v234 = vpack.c.b16 %v178, %v174
  %v235 = vpack.c.b16 %v179, %v175
  %v236 = vpack.c.b16 %v180, %v176
  %v237 = vpack.c.b16 %v185, %v181
  %v238 = vpack.c.b16 %v186, %v182
  %v239 = vpack.c.b16 %v187, %v183
  %v240 = vpack.c.b16 %v188, %v184
  %v241 = vpack.c.b16 %v193, %v189
  %v242 = vpack.c.b16 %v194, %v190
  %v243 = vpack.c.b16 %v195, %v191
  %v244 = vpack.c.b16 %v196, %v192
  %v245 = vpack.c.b16 %v201, %v197
  %v246 = vpack.c.b16 %v202, %v198
  %v247 = vpack.c.b16 %v203, %v199
  %v248 = vpack.c.b16 %v204, %v200
  %v249 = vpack.c.b16 %v209, %v205
  %v250 = vpack.c.b16 %v210, %v206
  %v251 = vpack.c.b16 %v211, %v207
  %v252 = vpack.c.b16 %v212, %v208
  %vm293 = vcmask 261120
  %v295 = vsel %vm293, %v30, 0
  %297 = vmatprep.subr.bf16.mxu0 %v242
  %298 = vmatpush1.bf16.msra.mxu0 %v241
  %299 = vmatprep.subr.bf16.mxu0 %v238
  %300 = vmatpush1.bf16.msra.mxu0 %v237
  %301 = vmatprep.subr.bf16.mxu0 %v234
  %302 = vmatpush1.bf16.msra.mxu0 %v233
  %303 = vmatprep.subr.bf16.mxu0 %v230
  %304 = vmatpush1.bf16.msra.mxu0 %v229
  %305 = vmatprep.subr.bf16.mxu0 %v226
  %306 = vmatpush1.bf16.msra.mxu0 %v225
  %307 = vmatprep.subr.bf16.mxu0 %v222
  %308 = vmatpush1.bf16.msra.mxu0 %v221
  %309 = vmatprep.subr.bf16.mxu0 %v218
  %310 = vmatpush1.bf16.msra.mxu0 %v217
  %311 = vmatprep.subr.bf16.mxu0 %v214
  %312 = vmatpush1.bf16.msra.mxu0 %v213
  %313 = vmatprep.subr.bf16.mxu0 0
  %314 = vmatpush2.bf16.msra.mxu0 0
  %315 = vmatprep.subr.bf16.mxu0 0
  %316 = vmatpush2.bf16.msra.mxu0 0
  %317 = vmatprep.subr.bf16.mxu0 0
  %318 = vmatpush2.bf16.msra.mxu0 0
  %319 = vmatprep.subr.bf16.mxu0 0
  %320 = vmatpush2.bf16.msra.mxu0 0
  %321 = vmatprep.subr.bf16.mxu0 0
  %322 = vmatpush2.bf16.msra.mxu0 0
  %323 = vmatprep.subr.bf16.mxu0 0
  %324 = vmatpush2.bf16.msra.mxu0 0
  %325 = vmatprep.subr.bf16.mxu0 %v250
  %326 = vmatpush2.bf16.msra.mxu0 %v249
  %327 = vmatprep.subr.bf16.mxu0 %v246
  %328 = vmatpush2.bf16.msra.mxu0 %v245
  %329 = vmatprep.mubr.bf16.mxu0 %v295
  %330 = vmatmul.mubr.bf16.gmra.mxu0 %v29
  %v331 = vpop.f32.mrf.mxu0
  %v332 = vadd.f32 %v76, %v331
  %v333 = vpop.f32.mrf.mxu0
  %v334 = vadd.f32 %v80, %v333
  %v335 = vpop.f32.mrf.mxu0
  %v336 = vpop.f32.mrf.mxu0
  %337 = vdwg.mxu0
  %338 = vmatprep.subr.bf16.mxu0 %v244
  %339 = vmatpush1.bf16.msra.mxu0 %v243
  %340 = vmatprep.subr.bf16.mxu0 %v240
  %341 = vmatpush1.bf16.msra.mxu0 %v239
  %342 = vmatprep.subr.bf16.mxu0 %v236
  %343 = vmatpush1.bf16.msra.mxu0 %v235
  %344 = vmatprep.subr.bf16.mxu0 %v232
  %345 = vmatpush1.bf16.msra.mxu0 %v231
  %346 = vmatprep.subr.bf16.mxu0 %v228
  %347 = vmatpush1.bf16.msra.mxu0 %v227
  %348 = vmatprep.subr.bf16.mxu0 %v224
  %349 = vmatpush1.bf16.msra.mxu0 %v223
  %350 = vmatprep.subr.bf16.mxu0 %v220
  %351 = vmatpush1.bf16.msra.mxu0 %v219
  %352 = vmatprep.subr.bf16.mxu0 %v216
  %353 = vmatpush1.bf16.msra.mxu0 %v215
  %354 = vmatprep.subr.bf16.mxu0 0
  %355 = vmatpush2.bf16.msra.mxu0 0
  %356 = vmatprep.subr.bf16.mxu0 0
  %357 = vmatpush2.bf16.msra.mxu0 0
  %358 = vmatprep.subr.bf16.mxu0 0
  %359 = vmatpush2.bf16.msra.mxu0 0
  %360 = vmatprep.subr.bf16.mxu0 0
  %361 = vmatpush2.bf16.msra.mxu0 0
  %362 = vmatprep.subr.bf16.mxu0 0
  %363 = vmatpush2.bf16.msra.mxu0 0
  %364 = vmatprep.subr.bf16.mxu0 0
  %365 = vmatpush2.bf16.msra.mxu0 0
  %366 = vmatprep.subr.bf16.mxu0 %v252
  %367 = vmatpush2.bf16.msra.mxu0 %v251
  %368 = vmatprep.subr.bf16.mxu0 %v248
  %369 = vmatpush2.bf16.msra.mxu0 %v247
  %370 = vmatprep.mubr.bf16.mxu0 %v295
  %371 = vmatmul.mubr.bf16.gmra.mxu0 %v29
  %v372 = vpop.f32.mrf.mxu0
  %v373 = vadd.f32 %v84, %v372
  %v374 = vpop.f32.mrf.mxu0
  %v375 = vadd.f32 %v88, %v374
  %v376 = vpop.f32.mrf.mxu0
  %v377 = vpop.f32.mrf.mxu0
  %378 = vdwg.mxu0
  %v379 = vmax.f32 %v332, 0.0
  %v380 = vmax.f32 %v334, 0.0
  %v381 = vmax.f32 %v373, 0.0
  %v382 = vmax.f32 %v375, 0.0
  %v383 = vpack.c.bf16 %v379, %v379
  %v384 = vpack.c.bf16 %v380, %v380
  %v385 = vpack.c.bf16 %v381, %v381
  %v386 = vpack.c.bf16 %v382, %v382
  %v387 = vld [vmem:[%s3] sm:$0xff]
  %v388 = vld [vmem:[%s3 + $0x8] sm:$0xff]
  %v389 = vld [vmem:[%s3 + $0x10] sm:$0xff]
  %v390 = vld [vmem:[%s3 + $0x18] sm:$0xff]
  %v391 = vld [vmem:[%s3 + $0x20] sm:$0xff]
  %v392 = vld [vmem:[%s3 + $0x28] sm:$0xff]
  %v393 = vld [vmem:[%s3 + $0x30] sm:$0xff]
  %v394 = vld [vmem:[%s3 + $0x38] sm:$0xff]
  %v395 = vld [vmem:[%s3 + $0x40] sm:$0xff]
  %v396 = vld [vmem:[%s3 + $0x48] sm:$0xff]
  %v397 = vld [vmem:[%s3 + $0x50] sm:$0xff]
  %v398 = vld [vmem:[%s3 + $0x58] sm:$0xff]
  %v399 = vld [vmem:[%s3 + $0x60] sm:$0xff]
  %v400 = vld [vmem:[%s3 + $0x68] sm:$0xff]
  %v401 = vld [vmem:[%s3 + $0x70] sm:$0xff]
  %v402 = vld [vmem:[%s3 + $0x78] sm:$0xff]
  %v403 = vld [vmem:[%s3 + $0x80] sm:$0xff]
  %v404 = vld [vmem:[%s3 + $0x88] sm:$0xff]
  %v405 = vld [vmem:[%s3 + $0x90] sm:$0xff]
  %v406 = vld [vmem:[%s3 + $0x98] sm:$0xff]
  %v407 = vld [vmem:[%s3 + $0xa0] sm:$0xff]
  %v408 = vld [vmem:[%s3 + $0xa8] sm:$0xff]
  %v409 = vld [vmem:[%s3 + $0xb0] sm:$0xff]
  %v410 = vld [vmem:[%s3 + $0xb8] sm:$0xff]
  %v411 = vld [vmem:[%s3 + $0xc0] sm:$0xff]
  %v412 = vld [vmem:[%s3 + $0xc8] sm:$0xff]
  %v413 = vld [vmem:[%s3 + $0xd0] sm:$0xff]
  %v414 = vld [vmem:[%s3 + $0xd8] sm:$0xff]
  %v415 = vld [vmem:[%s3 + $0xe0] sm:$0xff]
  %v416 = vld [vmem:[%s3 + $0xe8] sm:$0xff]
  %v417 = vld [vmem:[%s3 + $0xf0] sm:$0xff]
  %v418 = vld [vmem:[%s3 + $0xf8] sm:$0xff]
  %v419 = vld [vmem:[%s3 + $0x100] sm:$0xff]
  %v420 = vld [vmem:[%s3 + $0x108] sm:$0xff]
  %v421 = vld [vmem:[%s3 + $0x110] sm:$0xff]
  %v422 = vld [vmem:[%s3 + $0x118] sm:$0xff]
  %v423 = vld [vmem:[%s3 + $0x120] sm:$0xff]
  %v424 = vld [vmem:[%s3 + $0x128] sm:$0xff]
  %v425 = vld [vmem:[%s3 + $0x130] sm:$0xff]
  %v426 = vld [vmem:[%s3 + $0x138] sm:$0xff]
  %v427 = vld [vmem:[%s3 + $0x140] sm:$0xff]
  %v428 = vld [vmem:[%s3 + $0x148] sm:$0xff]
  %v429 = vld [vmem:[%s3 + $0x150] sm:$0xff]
  %v430 = vld [vmem:[%s3 + $0x158] sm:$0xff]
  %v431 = vld [vmem:[%s3 + $0x160] sm:$0xff]
  %v432 = vld [vmem:[%s3 + $0x168] sm:$0xff]
  %v433 = vld [vmem:[%s3 + $0x170] sm:$0xff]
  %v434 = vld [vmem:[%s3 + $0x178] sm:$0xff]
  %v435 = vld [vmem:[%s3 + $0x180] sm:$0xff]
  %v436 = vld [vmem:[%s3 + $0x188] sm:$0xff]
  %v437 = vld [vmem:[%s3 + $0x190] sm:$0xff]
  %v438 = vld [vmem:[%s3 + $0x198] sm:$0xff]
  %v439 = vld [vmem:[%s3 + $0x1a0] sm:$0xff]
  %v440 = vld [vmem:[%s3 + $0x1a8] sm:$0xff]
  %v441 = vld [vmem:[%s3 + $0x1b0] sm:$0xff]
  %v442 = vld [vmem:[%s3 + $0x1b8] sm:$0xff]
  %v443 = vld [vmem:[%s3 + $0x1c0] sm:$0xff]
  %v444 = vld [vmem:[%s3 + $0x1c8] sm:$0xff]
  %v445 = vld [vmem:[%s3 + $0x1d0] sm:$0xff]
  %v446 = vld [vmem:[%s3 + $0x1d8] sm:$0xff]
  %v447 = vld [vmem:[%s3 + $0x1e0] sm:$0xff]
  %v448 = vld [vmem:[%s3 + $0x1e8] sm:$0xff]
  %v449 = vld [vmem:[%s3 + $0x1f0] sm:$0xff]
  %v450 = vld [vmem:[%s3 + $0x1f8] sm:$0xff]
  %v451 = vld [vmem:[%s3 + $0x200] sm:$0xff]
  %v452 = vld [vmem:[%s3 + $0x208] sm:$0xff]
  %v453 = vld [vmem:[%s3 + $0x210] sm:$0xff]
  %v454 = vld [vmem:[%s3 + $0x218] sm:$0xff]
  %v455 = vld [vmem:[%s3 + $0x220] sm:$0xff]
  %v456 = vld [vmem:[%s3 + $0x228] sm:$0xff]
  %v457 = vld [vmem:[%s3 + $0x230] sm:$0xff]
  %v458 = vld [vmem:[%s3 + $0x238] sm:$0xff]
  %v459 = vld [vmem:[%s3 + $0x240] sm:$0xff]
  %v460 = vld [vmem:[%s3 + $0x248] sm:$0xff]
  %v461 = vld [vmem:[%s3 + $0x250] sm:$0xff]
  %v462 = vld [vmem:[%s3 + $0x258] sm:$0xff]
  %v463 = vld [vmem:[%s3 + $0x260] sm:$0xff]
  %v464 = vld [vmem:[%s3 + $0x268] sm:$0xff]
  %v465 = vld [vmem:[%s3 + $0x270] sm:$0xff]
  %v466 = vld [vmem:[%s3 + $0x278] sm:$0xff]
  %v467 = vld [vmem:[%s3 + $0x280] sm:$0xff]
  %v468 = vld [vmem:[%s3 + $0x288] sm:$0xff]
  %v469 = vld [vmem:[%s3 + $0x290] sm:$0xff]
  %v470 = vld [vmem:[%s3 + $0x298] sm:$0xff]
  %v471 = vld [vmem:[%s3 + $0x2a0] sm:$0xff]
  %v472 = vld [vmem:[%s3 + $0x2a8] sm:$0xff]
  %v473 = vld [vmem:[%s3 + $0x2b0] sm:$0xff]
  %v474 = vld [vmem:[%s3 + $0x2b8] sm:$0xff]
  %v475 = vld [vmem:[%s3 + $0x2c0] sm:$0xff]
  %v476 = vld [vmem:[%s3 + $0x2c8] sm:$0xff]
  %v477 = vld [vmem:[%s3 + $0x2d0] sm:$0xff]
  %v478 = vld [vmem:[%s3 + $0x2d8] sm:$0xff]
  %v479 = vld [vmem:[%s3 + $0x2e0] sm:$0xff]
  %v480 = vld [vmem:[%s3 + $0x2e8] sm:$0xff]
  %v481 = vld [vmem:[%s3 + $0x2f0] sm:$0xff]
  %v482 = vld [vmem:[%s3 + $0x2f8] sm:$0xff]
  %v483 = vld [vmem:[%s3 + $0x300] sm:$0xff]
  %v484 = vld [vmem:[%s3 + $0x308] sm:$0xff]
  %v485 = vld [vmem:[%s3 + $0x310] sm:$0xff]
  %v486 = vld [vmem:[%s3 + $0x318] sm:$0xff]
  %v487 = vld [vmem:[%s3 + $0x320] sm:$0xff]
  %v488 = vld [vmem:[%s3 + $0x328] sm:$0xff]
  %v489 = vld [vmem:[%s3 + $0x330] sm:$0xff]
  %v490 = vld [vmem:[%s3 + $0x338] sm:$0xff]
  %v491 = vld [vmem:[%s3 + $0x340] sm:$0xff]
  %v492 = vld [vmem:[%s3 + $0x348] sm:$0xff]
  %v493 = vld [vmem:[%s3 + $0x350] sm:$0xff]
  %v494 = vld [vmem:[%s3 + $0x358] sm:$0xff]
  %v495 = vld [vmem:[%s3 + $0x360] sm:$0xff]
  %v496 = vld [vmem:[%s3 + $0x368] sm:$0xff]
  %v497 = vld [vmem:[%s3 + $0x370] sm:$0xff]
  %v498 = vld [vmem:[%s3 + $0x378] sm:$0xff]
  %v499 = vld [vmem:[%s3 + $0x380] sm:$0xff]
  %v500 = vld [vmem:[%s3 + $0x388] sm:$0xff]
  %v501 = vld [vmem:[%s3 + $0x390] sm:$0xff]
  %v502 = vld [vmem:[%s3 + $0x398] sm:$0xff]
  %v503 = vld [vmem:[%s3 + $0x3a0] sm:$0xff]
  %v504 = vld [vmem:[%s3 + $0x3a8] sm:$0xff]
  %v505 = vld [vmem:[%s3 + $0x3b0] sm:$0xff]
  %v506 = vld [vmem:[%s3 + $0x3b8] sm:$0xff]
  %v507 = vld [vmem:[%s3 + $0x3c0] sm:$0xff]
  %v508 = vld [vmem:[%s3 + $0x3c8] sm:$0xff]
  %v509 = vld [vmem:[%s3 + $0x3d0] sm:$0xff]
  %v510 = vld [vmem:[%s3 + $0x3d8] sm:$0xff]
  %v511 = vld [vmem:[%s3 + $0x3e0] sm:$0xff]
  %v512 = vld [vmem:[%s3 + $0x3e8] sm:$0xff]
  %v513 = vld [vmem:[%s3 + $0x3f0] sm:$0xff]
  %v514 = vld [vmem:[%s3 + $0x3f8] sm:$0xff]
  %v515 = vld [vmem:[%s3 + $0x400] sm:$0xff]
  %v516 = vld [vmem:[%s3 + $0x408] sm:$0xff]
  %v517 = vld [vmem:[%s3 + $0x410] sm:$0xff]
  %v518 = vld [vmem:[%s3 + $0x418] sm:$0xff]
  %v519 = vld [vmem:[%s3 + $0x420] sm:$0xff]
  %v520 = vld [vmem:[%s3 + $0x428] sm:$0xff]
  %v521 = vld [vmem:[%s3 + $0x430] sm:$0xff]
  %v522 = vld [vmem:[%s3 + $0x438] sm:$0xff]
  %v523 = vld [vmem:[%s3 + $0x440] sm:$0xff]
  %v524 = vld [vmem:[%s3 + $0x448] sm:$0xff]
  %v525 = vld [vmem:[%s3 + $0x450] sm:$0xff]
  %v526 = vld [vmem:[%s3 + $0x458] sm:$0xff]
  %v527 = vld [vmem:[%s3 + $0x460] sm:$0xff]
  %v528 = vld [vmem:[%s3 + $0x468] sm:$0xff]
  %v529 = vld [vmem:[%s3 + $0x470] sm:$0xff]
  %v530 = vld [vmem:[%s3 + $0x478] sm:$0xff]
  %v531 = vld [vmem:[%s3 + $0x480] sm:$0xff]
  %v532 = vld [vmem:[%s3 + $0x488] sm:$0xff]
  %v533 = vld [vmem:[%s3 + $0x490] sm:$0xff]
  %v534 = vld [vmem:[%s3 + $0x498] sm:$0xff]
  %v535 = vld [vmem:[%s3 + $0x4a0] sm:$0xff]
  %v536 = vld [vmem:[%s3 + $0x4a8] sm:$0xff]
  %v537 = vld [vmem:[%s3 + $0x4b0] sm:$0xff]
  %v538 = vld [vmem:[%s3 + $0x4b8] sm:$0xff]
  %v539 = vld [vmem:[%s3 + $0x4c0] sm:$0xff]
  %v540 = vld [vmem:[%s3 + $0x4c8] sm:$0xff]
  %v541 = vld [vmem:[%s3 + $0x4d0] sm:$0xff]
  %v542 = vld [vmem:[%s3 + $0x4d8] sm:$0xff]
  %v543 = vld [vmem:[%s3 + $0x4e0] sm:$0xff]
  %v544 = vld [vmem:[%s3 + $0x4e8] sm:$0xff]
  %v545 = vld [vmem:[%s3 + $0x4f0] sm:$0xff]
  %v546 = vld [vmem:[%s3 + $0x4f8] sm:$0xff]
  %v547 = vld [vmem:[%s3 + $0x500] sm:$0xff]
  %v548 = vld [vmem:[%s3 + $0x508] sm:$0xff]
  %v549 = vld [vmem:[%s3 + $0x510] sm:$0xff]
  %v550 = vld [vmem:[%s3 + $0x518] sm:$0xff]
  %v551 = vld [vmem:[%s3 + $0x520] sm:$0xff]
  %v552 = vld [vmem:[%s3 + $0x528] sm:$0xff]
  %v553 = vld [vmem:[%s3 + $0x530] sm:$0xff]
  %v554 = vld [vmem:[%s3 + $0x538] sm:$0xff]
  %v555 = vld [vmem:[%s3 + $0x540] sm:$0xff]
  %v556 = vld [vmem:[%s3 + $0x548] sm:$0xff]
  %v557 = vld [vmem:[%s3 + $0x550] sm:$0xff]
  %v558 = vld [vmem:[%s3 + $0x558] sm:$0xff]
  %v559 = vld [vmem:[%s3 + $0x560] sm:$0xff]
  %v560 = vld [vmem:[%s3 + $0x568] sm:$0xff]
  %v561 = vld [vmem:[%s3 + $0x570] sm:$0xff]
  %v562 = vld [vmem:[%s3 + $0x578] sm:$0xff]
  %v563 = vld [vmem:[%s3 + $0x580] sm:$0xff]
  %v564 = vld [vmem:[%s3 + $0x588] sm:$0xff]
  %v565 = vld [vmem:[%s3 + $0x590] sm:$0xff]
  %v566 = vld [vmem:[%s3 + $0x598] sm:$0xff]
  %v567 = vld [vmem:[%s3 + $0x5a0] sm:$0xff]
  %v568 = vld [vmem:[%s3 + $0x5a8] sm:$0xff]
  %v569 = vld [vmem:[%s3 + $0x5b0] sm:$0xff]
  %v570 = vld [vmem:[%s3 + $0x5b8] sm:$0xff]
  %v571 = vld [vmem:[%s3 + $0x5c0] sm:$0xff]
  %v572 = vld [vmem:[%s3 + $0x5c8] sm:$0xff]
  %v573 = vld [vmem:[%s3 + $0x5d0] sm:$0xff]
  %v574 = vld [vmem:[%s3 + $0x5d8] sm:$0xff]
  %v575 = vld [vmem:[%s3 + $0x5e0] sm:$0xff]
  %v576 = vld [vmem:[%s3 + $0x5e8] sm:$0xff]
  %v577 = vld [vmem:[%s3 + $0x5f0] sm:$0xff]
  %v578 = vld [vmem:[%s3 + $0x5f8] sm:$0xff]
  %v579 = vld [vmem:[%s3 + $0x600] sm:$0xff]
  %v580 = vld [vmem:[%s3 + $0x608] sm:$0xff]
  %v581 = vld [vmem:[%s3 + $0x610] sm:$0xff]
  %v582 = vld [vmem:[%s3 + $0x618] sm:$0xff]
  %v583 = vld [vmem:[%s3 + $0x620] sm:$0xff]
  %v584 = vld [vmem:[%s3 + $0x628] sm:$0xff]
  %v585 = vld [vmem:[%s3 + $0x630] sm:$0xff]
  %v586 = vld [vmem:[%s3 + $0x638] sm:$0xff]
  %v587 = vld [vmem:[%s3 + $0x640] sm:$0xff]
  %v588 = vld [vmem:[%s3 + $0x648] sm:$0xff]
  %v589 = vld [vmem:[%s3 + $0x650] sm:$0xff]
  %v590 = vld [vmem:[%s3 + $0x658] sm:$0xff]
  %v591 = vld [vmem:[%s3 + $0x660] sm:$0xff]
  %v592 = vld [vmem:[%s3 + $0x668] sm:$0xff]
  %v593 = vld [vmem:[%s3 + $0x670] sm:$0xff]
  %v594 = vld [vmem:[%s3 + $0x678] sm:$0xff]
  %v595 = vld [vmem:[%s3 + $0x680] sm:$0xff]
  %v596 = vld [vmem:[%s3 + $0x688] sm:$0xff]
  %v597 = vld [vmem:[%s3 + $0x690] sm:$0xff]
  %v598 = vld [vmem:[%s3 + $0x698] sm:$0xff]
  %v599 = vld [vmem:[%s3 + $0x6a0] sm:$0xff]
  %v600 = vld [vmem:[%s3 + $0x6a8] sm:$0xff]
  %v601 = vld [vmem:[%s3 + $0x6b0] sm:$0xff]
  %v602 = vld [vmem:[%s3 + $0x6b8] sm:$0xff]
  %v603 = vld [vmem:[%s3 + $0x6c0] sm:$0xff]
  %v604 = vld [vmem:[%s3 + $0x6c8] sm:$0xff]
  %v605 = vld [vmem:[%s3 + $0x6d0] sm:$0xff]
  %v606 = vld [vmem:[%s3 + $0x6d8] sm:$0xff]
  %v607 = vld [vmem:[%s3 + $0x6e0] sm:$0xff]
  %v608 = vld [vmem:[%s3 + $0x6e8] sm:$0xff]
  %v609 = vld [vmem:[%s3 + $0x6f0] sm:$0xff]
  %v610 = vld [vmem:[%s3 + $0x6f8] sm:$0xff]
  %v611 = vld [vmem:[%s3 + $0x700] sm:$0xff]
  %v612 = vld [vmem:[%s3 + $0x708] sm:$0xff]
  %v613 = vld [vmem:[%s3 + $0x710] sm:$0xff]
  %v614 = vld [vmem:[%s3 + $0x718] sm:$0xff]
  %v615 = vld [vmem:[%s3 + $0x720] sm:$0xff]
  %v616 = vld [vmem:[%s3 + $0x728] sm:$0xff]
  %v617 = vld [vmem:[%s3 + $0x730] sm:$0xff]
  %v618 = vld [vmem:[%s3 + $0x738] sm:$0xff]
  %v619 = vld [vmem:[%s3 + $0x740] sm:$0xff]
  %v620 = vld [vmem:[%s3 + $0x748] sm:$0xff]
  %v621 = vld [vmem:[%s3 + $0x750] sm:$0xff]
  %v622 = vld [vmem:[%s3 + $0x758] sm:$0xff]
  %v623 = vld [vmem:[%s3 + $0x760] sm:$0xff]
  %v624 = vld [vmem:[%s3 + $0x768] sm:$0xff]
  %v625 = vld [vmem:[%s3 + $0x770] sm:$0xff]
  %v626 = vld [vmem:[%s3 + $0x778] sm:$0xff]
  %v627 = vld [vmem:[%s3 + $0x780] sm:$0xff]
  %v628 = vld [vmem:[%s3 + $0x788] sm:$0xff]
  %v629 = vld [vmem:[%s3 + $0x790] sm:$0xff]
  %v630 = vld [vmem:[%s3 + $0x798] sm:$0xff]
  %v631 = vld [vmem:[%s3 + $0x7a0] sm:$0xff]
  %v632 = vld [vmem:[%s3 + $0x7a8] sm:$0xff]
  %v633 = vld [vmem:[%s3 + $0x7b0] sm:$0xff]
  %v634 = vld [vmem:[%s3 + $0x7b8] sm:$0xff]
  %v635 = vld [vmem:[%s3 + $0x7c0] sm:$0xff]
  %v636 = vld [vmem:[%s3 + $0x7c8] sm:$0xff]
  %v637 = vld [vmem:[%s3 + $0x7d0] sm:$0xff]
  %v638 = vld [vmem:[%s3 + $0x7d8] sm:$0xff]
  %v639 = vld [vmem:[%s3 + $0x7e0] sm:$0xff]
  %v640 = vld [vmem:[%s3 + $0x7e8] sm:$0xff]
  %v641 = vld [vmem:[%s3 + $0x7f0] sm:$0xff]
  %v642 = vld [vmem:[%s3 + $0x7f8] sm:$0xff]
  %v643 = vld [vmem:[%s4] sm:$0xff]
  %v645 = vlaneseq
  %v646 = vshrl.u32 %v645, 7
  %v647 = vsub.s32 0, %v646
  %v648 = vrot.slane %v643, %v647
  %v649 = vlaneseq
  %v650 = vshrl.u32 %v649, 7
  %v651 = vsub.s32 1, %v650
  %v652 = vrot.slane %v643, %v651
  %v653 = vlaneseq
  %v654 = vshrl.u32 %v653, 7
  %v655 = vsub.s32 2, %v654
  %v656 = vrot.slane %v643, %v655
  %v657 = vlaneseq
  %v658 = vshrl.u32 %v657, 7
  %v659 = vsub.s32 3, %v658
  %v660 = vrot.slane %v643, %v659
  %v661 = vlaneseq
  %v662 = vshrl.u32 %v661, 7
  %v663 = vsub.s32 4, %v662
  %v664 = vrot.slane %v643, %v663
  %v665 = vlaneseq
  %v666 = vshrl.u32 %v665, 7
  %v667 = vsub.s32 5, %v666
  %v668 = vrot.slane %v643, %v667
  %v669 = vlaneseq
  %v670 = vshrl.u32 %v669, 7
  %v671 = vsub.s32 6, %v670
  %v672 = vrot.slane %v643, %v671
  %v673 = vlaneseq
  %v674 = vshrl.u32 %v673, 7
  %v675 = vsub.s32 7, %v674
  %v676 = vrot.slane %v643, %v675
  %v941 = vunpack.c.l.b16 %v387
  %v942 = vunpack.c.h.b16 %v387
  %v943 = vunpack.c.l.b16 %v388
  %v944 = vunpack.c.h.b16 %v388
  %v945 = vunpack.c.l.b16 %v389
  %v946 = vunpack.c.h.b16 %v389
  %v947 = vunpack.c.l.b16 %v390
  %v948 = vunpack.c.h.b16 %v390
  %v949 = vunpack.c.l.b16 %v391
  %v950 = vunpack.c.h.b16 %v391
  %v951 = vunpack.c.l.b16 %v392
  %v952 = vunpack.c.h.b16 %v392
  %v953 = vunpack.c.l.b16 %v393
  %v954 = vunpack.c.h.b16 %v393
  %v955 = vunpack.c.l.b16 %v394
  %v956 = vunpack.c.h.b16 %v394
  %v957 = vunpack.c.l.b16 %v395
  %v958 = vunpack.c.h.b16 %v395
  %v959 = vunpack.c.l.b16 %v396
  %v960 = vunpack.c.h.b16 %v396
  %v961 = vunpack.c.l.b16 %v397
  %v962 = vunpack.c.h.b16 %v397
  %v963 = vunpack.c.l.b16 %v398
  %v964 = vunpack.c.h.b16 %v398
  %v965 = vunpack.c.l.b16 %v399
  %v966 = vunpack.c.h.b16 %v399
  %v967 = vunpack.c.l.b16 %v400
  %v968 = vunpack.c.h.b16 %v400
  %v969 = vunpack.c.l.b16 %v401
  %v970 = vunpack.c.h.b16 %v401
  %v971 = vunpack.c.l.b16 %v402
  %v972 = vunpack.c.h.b16 %v402
  %v973 = vunpack.c.l.b16 %v403
  %v974 = vunpack.c.h.b16 %v403
  %v975 = vunpack.c.l.b16 %v404
  %v976 = vunpack.c.h.b16 %v404
  %v977 = vunpack.c.l.b16 %v405
  %v978 = vunpack.c.h.b16 %v405
  %v979 = vunpack.c.l.b16 %v406
  %v980 = vunpack.c.h.b16 %v406
  %v981 = vunpack.c.l.b16 %v407
  %v982 = vunpack.c.h.b16 %v407
  %v983 = vunpack.c.l.b16 %v408
  %v984 = vunpack.c.h.b16 %v408
  %v985 = vunpack.c.l.b16 %v409
  %v986 = vunpack.c.h.b16 %v409
  %v987 = vunpack.c.l.b16 %v410
  %v988 = vunpack.c.h.b16 %v410
  %v989 = vunpack.c.l.b16 %v411
  %v990 = vunpack.c.h.b16 %v411
  %v991 = vunpack.c.l.b16 %v412
  %v992 = vunpack.c.h.b16 %v412
  %v993 = vunpack.c.l.b16 %v413
  %v994 = vunpack.c.h.b16 %v413
  %v995 = vunpack.c.l.b16 %v414
  %v996 = vunpack.c.h.b16 %v414
  %v997 = vunpack.c.l.b16 %v415
  %v998 = vunpack.c.h.b16 %v415
  %v999 = vunpack.c.l.b16 %v416
  %v1000 = vunpack.c.h.b16 %v416
  %v1001 = vunpack.c.l.b16 %v417
  %v1002 = vunpack.c.h.b16 %v417
  %v1003 = vunpack.c.l.b16 %v418
  %v1004 = vunpack.c.h.b16 %v418
  %v1005 = vunpack.c.l.b16 %v419
  %v1006 = vunpack.c.h.b16 %v419
  %v1007 = vunpack.c.l.b16 %v420
  %v1008 = vunpack.c.h.b16 %v420
  %v1009 = vunpack.c.l.b16 %v421
  %v1010 = vunpack.c.h.b16 %v421
  %v1011 = vunpack.c.l.b16 %v422
  %v1012 = vunpack.c.h.b16 %v422
  %v1013 = vunpack.c.l.b16 %v423
  %v1014 = vunpack.c.h.b16 %v423
  %v1015 = vunpack.c.l.b16 %v424
  %v1016 = vunpack.c.h.b16 %v424
  %v1017 = vunpack.c.l.b16 %v425
  %v1018 = vunpack.c.h.b16 %v425
  %v1019 = vunpack.c.l.b16 %v426
  %v1020 = vunpack.c.h.b16 %v426
  %v1021 = vunpack.c.l.b16 %v427
  %v1022 = vunpack.c.h.b16 %v427
  %v1023 = vunpack.c.l.b16 %v428
  %v1024 = vunpack.c.h.b16 %v428
  %v1025 = vunpack.c.l.b16 %v429
  %v1026 = vunpack.c.h.b16 %v429
  %v1027 = vunpack.c.l.b16 %v430
  %v1028 = vunpack.c.h.b16 %v430
  %v1029 = vunpack.c.l.b16 %v431
  %v1030 = vunpack.c.h.b16 %v431
  %v1031 = vunpack.c.l.b16 %v432
  %v1032 = vunpack.c.h.b16 %v432
  %v1033 = vunpack.c.l.b16 %v433
  %v1034 = vunpack.c.h.b16 %v433
  %v1035 = vunpack.c.l.b16 %v434
  %v1036 = vunpack.c.h.b16 %v434
  %v1037 = vunpack.c.l.b16 %v435
  %v1038 = vunpack.c.h.b16 %v435
  %v1039 = vunpack.c.l.b16 %v436
  %v1040 = vunpack.c.h.b16 %v436
  %v1041 = vunpack.c.l.b16 %v437
  %v1042 = vunpack.c.h.b16 %v437
  %v1043 = vunpack.c.l.b16 %v438
  %v1044 = vunpack.c.h.b16 %v438
  %v1045 = vunpack.c.l.b16 %v439
  %v1046 = vunpack.c.h.b16 %v439
  %v1047 = vunpack.c.l.b16 %v440
  %v1048 = vunpack.c.h.b16 %v440
  %v1049 = vunpack.c.l.b16 %v441
  %v1050 = vunpack.c.h.b16 %v441
  %v1051 = vunpack.c.l.b16 %v442
  %v1052 = vunpack.c.h.b16 %v442
  %v1053 = vunpack.c.l.b16 %v443
  %v1054 = vunpack.c.h.b16 %v443
  %v1055 = vunpack.c.l.b16 %v444
  %v1056 = vunpack.c.h.b16 %v444
  %v1057 = vunpack.c.l.b16 %v445
  %v1058 = vunpack.c.h.b16 %v445
  %v1059 = vunpack.c.l.b16 %v446
  %v1060 = vunpack.c.h.b16 %v446
  %v1061 = vunpack.c.l.b16 %v447
  %v1062 = vunpack.c.h.b16 %v447
  %v1063 = vunpack.c.l.b16 %v448
  %v1064 = vunpack.c.h.b16 %v448
  %v1065 = vunpack.c.l.b16 %v449
  %v1066 = vunpack.c.h.b16 %v449
  %v1067 = vunpack.c.l.b16 %v450
  %v1068 = vunpack.c.h.b16 %v450
  %v1069 = vunpack.c.l.b16 %v451
  %v1070 = vunpack.c.h.b16 %v451
  %v1071 = vunpack.c.l.b16 %v452
  %v1072 = vunpack.c.h.b16 %v452
  %v1073 = vunpack.c.l.b16 %v453
  %v1074 = vunpack.c.h.b16 %v453
  %v1075 = vunpack.c.l.b16 %v454
  %v1076 = vunpack.c.h.b16 %v454
  %v1077 = vunpack.c.l.b16 %v455
  %v1078 = vunpack.c.h.b16 %v455
  %v1079 = vunpack.c.l.b16 %v456
  %v1080 = vunpack.c.h.b16 %v456
  %v1081 = vunpack.c.l.b16 %v457
  %v1082 = vunpack.c.h.b16 %v457
  %v1083 = vunpack.c.l.b16 %v458
  %v1084 = vunpack.c.h.b16 %v458
  %v1085 = vunpack.c.l.b16 %v459
  %v1086 = vunpack.c.h.b16 %v459
  %v1087 = vunpack.c.l.b16 %v460
  %v1088 = vunpack.c.h.b16 %v460
  %v1089 = vunpack.c.l.b16 %v461
  %v1090 = vunpack.c.h.b16 %v461
  %v1091 = vunpack.c.l.b16 %v462
  %v1092 = vunpack.c.h.b16 %v462
  %v1093 = vunpack.c.l.b16 %v463
  %v1094 = vunpack.c.h.b16 %v463
  %v1095 = vunpack.c.l.b16 %v464
  %v1096 = vunpack.c.h.b16 %v464
  %v1097 = vunpack.c.l.b16 %v465
  %v1098 = vunpack.c.h.b16 %v465
  %v1099 = vunpack.c.l.b16 %v466
  %v1100 = vunpack.c.h.b16 %v466
  %v1101 = vunpack.c.l.b16 %v467
  %v1102 = vunpack.c.h.b16 %v467
  %v1103 = vunpack.c.l.b16 %v468
  %v1104 = vunpack.c.h.b16 %v468
  %v1105 = vunpack.c.l.b16 %v469
  %v1106 = vunpack.c.h.b16 %v469
  %v1107 = vunpack.c.l.b16 %v470
  %v1108 = vunpack.c.h.b16 %v470
  %v1109 = vunpack.c.l.b16 %v471
  %v1110 = vunpack.c.h.b16 %v471
  %v1111 = vunpack.c.l.b16 %v472
  %v1112 = vunpack.c.h.b16 %v472
  %v1113 = vunpack.c.l.b16 %v473
  %v1114 = vunpack.c.h.b16 %v473
  %v1115 = vunpack.c.l.b16 %v474
  %v1116 = vunpack.c.h.b16 %v474
  %v1117 = vunpack.c.l.b16 %v475
  %v1118 = vunpack.c.h.b16 %v475
  %v1119 = vunpack.c.l.b16 %v476
  %v1120 = vunpack.c.h.b16 %v476
  %v1121 = vunpack.c.l.b16 %v477
  %v1122 = vunpack.c.h.b16 %v477
  %v1123 = vunpack.c.l.b16 %v478
  %v1124 = vunpack.c.h.b16 %v478
  %v1125 = vunpack.c.l.b16 %v479
  %v1126 = vunpack.c.h.b16 %v479
  %v1127 = vunpack.c.l.b16 %v480
  %v1128 = vunpack.c.h.b16 %v480
  %v1129 = vunpack.c.l.b16 %v481
  %v1130 = vunpack.c.h.b16 %v481
  %v1131 = vunpack.c.l.b16 %v482
  %v1132 = vunpack.c.h.b16 %v482
  %v1133 = vunpack.c.l.b16 %v483
  %v1134 = vunpack.c.h.b16 %v483
  %v1135 = vunpack.c.l.b16 %v484
  %v1136 = vunpack.c.h.b16 %v484
  %v1137 = vunpack.c.l.b16 %v485
  %v1138 = vunpack.c.h.b16 %v485
  %v1139 = vunpack.c.l.b16 %v486
  %v1140 = vunpack.c.h.b16 %v486
  %v1141 = vunpack.c.l.b16 %v487
  %v1142 = vunpack.c.h.b16 %v487
  %v1143 = vunpack.c.l.b16 %v488
  %v1144 = vunpack.c.h.b16 %v488
  %v1145 = vunpack.c.l.b16 %v489
  %v1146 = vunpack.c.h.b16 %v489
  %v1147 = vunpack.c.l.b16 %v490
  %v1148 = vunpack.c.h.b16 %v490
  %v1149 = vunpack.c.l.b16 %v491
  %v1150 = vunpack.c.h.b16 %v491
  %v1151 = vunpack.c.l.b16 %v492
  %v1152 = vunpack.c.h.b16 %v492
  %v1153 = vunpack.c.l.b16 %v493
  %v1154 = vunpack.c.h.b16 %v493
  %v1155 = vunpack.c.l.b16 %v494
  %v1156 = vunpack.c.h.b16 %v494
  %v1157 = vunpack.c.l.b16 %v495
  %v1158 = vunpack.c.h.b16 %v495
  %v1159 = vunpack.c.l.b16 %v496
  %v1160 = vunpack.c.h.b16 %v496
  %v1161 = vunpack.c.l.b16 %v497
  %v1162 = vunpack.c.h.b16 %v497
  %v1163 = vunpack.c.l.b16 %v498
  %v1164 = vunpack.c.h.b16 %v498
  %v1165 = vunpack.c.l.b16 %v499
  %v1166 = vunpack.c.h.b16 %v499
  %v1167 = vunpack.c.l.b16 %v500
  %v1168 = vunpack.c.h.b16 %v500
  %v1169 = vunpack.c.l.b16 %v501
  %v1170 = vunpack.c.h.b16 %v501
  %v1171 = vunpack.c.l.b16 %v502
  %v1172 = vunpack.c.h.b16 %v502
  %v1173 = vunpack.c.l.b16 %v503
  %v1174 = vunpack.c.h.b16 %v503
  %v1175 = vunpack.c.l.b16 %v504
  %v1176 = vunpack.c.h.b16 %v504
  %v1177 = vunpack.c.l.b16 %v505
  %v1178 = vunpack.c.h.b16 %v505
  %v1179 = vunpack.c.l.b16 %v506
  %v1180 = vunpack.c.h.b16 %v506
  %v1181 = vunpack.c.l.b16 %v507
  %v1182 = vunpack.c.h.b16 %v507
  %v1183 = vunpack.c.l.b16 %v508
  %v1184 = vunpack.c.h.b16 %v508
  %v1185 = vunpack.c.l.b16 %v509
  %v1186 = vunpack.c.h.b16 %v509
  %v1187 = vunpack.c.l.b16 %v510
  %v1188 = vunpack.c.h.b16 %v510
  %v1189 = vunpack.c.l.b16 %v511
  %v1190 = vunpack.c.h.b16 %v511
  %v1191 = vunpack.c.l.b16 %v512
  %v1192 = vunpack.c.h.b16 %v512
  %v1193 = vunpack.c.l.b16 %v513
  %v1194 = vunpack.c.h.b16 %v513
  %v1195 = vunpack.c.l.b16 %v514
  %v1196 = vunpack.c.h.b16 %v514
  %v1197 = vunpack.c.l.b16 %v515
  %v1198 = vunpack.c.h.b16 %v515
  %v1199 = vunpack.c.l.b16 %v516
  %v1200 = vunpack.c.h.b16 %v516
  %v1201 = vunpack.c.l.b16 %v517
  %v1202 = vunpack.c.h.b16 %v517
  %v1203 = vunpack.c.l.b16 %v518
  %v1204 = vunpack.c.h.b16 %v518
  %v1205 = vunpack.c.l.b16 %v519
  %v1206 = vunpack.c.h.b16 %v519
  %v1207 = vunpack.c.l.b16 %v520
  %v1208 = vunpack.c.h.b16 %v520
  %v1209 = vunpack.c.l.b16 %v521
  %v1210 = vunpack.c.h.b16 %v521
  %v1211 = vunpack.c.l.b16 %v522
  %v1212 = vunpack.c.h.b16 %v522
  %v1213 = vunpack.c.l.b16 %v523
  %v1214 = vunpack.c.h.b16 %v523
  %v1215 = vunpack.c.l.b16 %v524
  %v1216 = vunpack.c.h.b16 %v524
  %v1217 = vunpack.c.l.b16 %v525
  %v1218 = vunpack.c.h.b16 %v525
  %v1219 = vunpack.c.l.b16 %v526
  %v1220 = vunpack.c.h.b16 %v526
  %v1221 = vunpack.c.l.b16 %v527
  %v1222 = vunpack.c.h.b16 %v527
  %v1223 = vunpack.c.l.b16 %v528
  %v1224 = vunpack.c.h.b16 %v528
  %v1225 = vunpack.c.l.b16 %v529
  %v1226 = vunpack.c.h.b16 %v529
  %v1227 = vunpack.c.l.b16 %v530
  %v1228 = vunpack.c.h.b16 %v530
  %v1229 = vunpack.c.l.b16 %v531
  %v1230 = vunpack.c.h.b16 %v531
  %v1231 = vunpack.c.l.b16 %v532
  %v1232 = vunpack.c.h.b16 %v532
  %v1233 = vunpack.c.l.b16 %v533
  %v1234 = vunpack.c.h.b16 %v533
  %v1235 = vunpack.c.l.b16 %v534
  %v1236 = vunpack.c.h.b16 %v534
  %v1237 = vunpack.c.l.b16 %v535
  %v1238 = vunpack.c.h.b16 %v535
  %v1239 = vunpack.c.l.b16 %v536
  %v1240 = vunpack.c.h.b16 %v536
  %v1241 = vunpack.c.l.b16 %v537
  %v1242 = vunpack.c.h.b16 %v537
  %v1243 = vunpack.c.l.b16 %v538
  %v1244 = vunpack.c.h.b16 %v538
  %v1245 = vunpack.c.l.b16 %v539
  %v1246 = vunpack.c.h.b16 %v539
  %v1247 = vunpack.c.l.b16 %v540
  %v1248 = vunpack.c.h.b16 %v540
  %v1249 = vunpack.c.l.b16 %v541
  %v1250 = vunpack.c.h.b16 %v541
  %v1251 = vunpack.c.l.b16 %v542
  %v1252 = vunpack.c.h.b16 %v542
  %v1253 = vunpack.c.l.b16 %v543
  %v1254 = vunpack.c.h.b16 %v543
  %v1255 = vunpack.c.l.b16 %v544
  %v1256 = vunpack.c.h.b16 %v544
  %v1257 = vunpack.c.l.b16 %v545
  %v1258 = vunpack.c.h.b16 %v545
  %v1259 = vunpack.c.l.b16 %v546
  %v1260 = vunpack.c.h.b16 %v546
  %v1261 = vunpack.c.l.b16 %v547
  %v1262 = vunpack.c.h.b16 %v547
  %v1263 = vunpack.c.l.b16 %v548
  %v1264 = vunpack.c.h.b16 %v548
  %v1265 = vunpack.c.l.b16 %v549
  %v1266 = vunpack.c.h.b16 %v549
  %v1267 = vunpack.c.l.b16 %v550
  %v1268 = vunpack.c.h.b16 %v550
  %v1269 = vunpack.c.l.b16 %v551
  %v1270 = vunpack.c.h.b16 %v551
  %v1271 = vunpack.c.l.b16 %v552
  %v1272 = vunpack.c.h.b16 %v552
  %v1273 = vunpack.c.l.b16 %v553
  %v1274 = vunpack.c.h.b16 %v553
  %v1275 = vunpack.c.l.b16 %v554
  %v1276 = vunpack.c.h.b16 %v554
  %v1277 = vunpack.c.l.b16 %v555
  %v1278 = vunpack.c.h.b16 %v555
  %v1279 = vunpack.c.l.b16 %v556
  %v1280 = vunpack.c.h.b16 %v556
  %v1281 = vunpack.c.l.b16 %v557
  %v1282 = vunpack.c.h.b16 %v557
  %v1283 = vunpack.c.l.b16 %v558
  %v1284 = vunpack.c.h.b16 %v558
  %v1285 = vunpack.c.l.b16 %v559
  %v1286 = vunpack.c.h.b16 %v559
  %v1287 = vunpack.c.l.b16 %v560
  %v1288 = vunpack.c.h.b16 %v560
  %v1289 = vunpack.c.l.b16 %v561
  %v1290 = vunpack.c.h.b16 %v561
  %v1291 = vunpack.c.l.b16 %v562
  %v1292 = vunpack.c.h.b16 %v562
  %v1293 = vunpack.c.l.b16 %v563
  %v1294 = vunpack.c.h.b16 %v563
  %v1295 = vunpack.c.l.b16 %v564
  %v1296 = vunpack.c.h.b16 %v564
  %v1297 = vunpack.c.l.b16 %v565
  %v1298 = vunpack.c.h.b16 %v565
  %v1299 = vunpack.c.l.b16 %v566
  %v1300 = vunpack.c.h.b16 %v566
  %v1301 = vunpack.c.l.b16 %v567
  %v1302 = vunpack.c.h.b16 %v567
  %v1303 = vunpack.c.l.b16 %v568
  %v1304 = vunpack.c.h.b16 %v568
  %v1305 = vunpack.c.l.b16 %v569
  %v1306 = vunpack.c.h.b16 %v569
  %v1307 = vunpack.c.l.b16 %v570
  %v1308 = vunpack.c.h.b16 %v570
  %v1309 = vunpack.c.l.b16 %v571
  %v1310 = vunpack.c.h.b16 %v571
  %v1311 = vunpack.c.l.b16 %v572
  %v1312 = vunpack.c.h.b16 %v572
  %v1313 = vunpack.c.l.b16 %v573
  %v1314 = vunpack.c.h.b16 %v573
  %v1315 = vunpack.c.l.b16 %v574
  %v1316 = vunpack.c.h.b16 %v574
  %v1317 = vunpack.c.l.b16 %v575
  %v1318 = vunpack.c.h.b16 %v575
  %v1319 = vunpack.c.l.b16 %v576
  %v1320 = vunpack.c.h.b16 %v576
  %v1321 = vunpack.c.l.b16 %v577
  %v1322 = vunpack.c.h.b16 %v577
  %v1323 = vunpack.c.l.b16 %v578
  %v1324 = vunpack.c.h.b16 %v578
  %v1325 = vunpack.c.l.b16 %v579
  %v1326 = vunpack.c.h.b16 %v579
  %v1327 = vunpack.c.l.b16 %v580
  %v1328 = vunpack.c.h.b16 %v580
  %v1329 = vunpack.c.l.b16 %v581
  %v1330 = vunpack.c.h.b16 %v581
  %v1331 = vunpack.c.l.b16 %v582
  %v1332 = vunpack.c.h.b16 %v582
  %v1333 = vunpack.c.l.b16 %v583
  %v1334 = vunpack.c.h.b16 %v583
  %v1335 = vunpack.c.l.b16 %v584
  %v1336 = vunpack.c.h.b16 %v584
  %v1337 = vunpack.c.l.b16 %v585
  %v1338 = vunpack.c.h.b16 %v585
  %v1339 = vunpack.c.l.b16 %v586
  %v1340 = vunpack.c.h.b16 %v586
  %v1341 = vunpack.c.l.b16 %v587
  %v1342 = vunpack.c.h.b16 %v587
  %v1343 = vunpack.c.l.b16 %v588
  %v1344 = vunpack.c.h.b16 %v588
  %v1345 = vunpack.c.l.b16 %v589
  %v1346 = vunpack.c.h.b16 %v589
  %v1347 = vunpack.c.l.b16 %v590
  %v1348 = vunpack.c.h.b16 %v590
  %v1349 = vunpack.c.l.b16 %v591
  %v1350 = vunpack.c.h.b16 %v591
  %v1351 = vunpack.c.l.b16 %v592
  %v1352 = vunpack.c.h.b16 %v592
  %v1353 = vunpack.c.l.b16 %v593
  %v1354 = vunpack.c.h.b16 %v593
  %v1355 = vunpack.c.l.b16 %v594
  %v1356 = vunpack.c.h.b16 %v594
  %v1357 = vunpack.c.l.b16 %v595
  %v1358 = vunpack.c.h.b16 %v595
  %v1359 = vunpack.c.l.b16 %v596
  %v1360 = vunpack.c.h.b16 %v596
  %v1361 = vunpack.c.l.b16 %v597
  %v1362 = vunpack.c.h.b16 %v597
  %v1363 = vunpack.c.l.b16 %v598
  %v1364 = vunpack.c.h.b16 %v598
  %v1365 = vunpack.c.l.b16 %v599
  %v1366 = vunpack.c.h.b16 %v599
  %v1367 = vunpack.c.l.b16 %v600
  %v1368 = vunpack.c.h.b16 %v600
  %v1369 = vunpack.c.l.b16 %v601
  %v1370 = vunpack.c.h.b16 %v601
  %v1371 = vunpack.c.l.b16 %v602
  %v1372 = vunpack.c.h.b16 %v602
  %v1373 = vunpack.c.l.b16 %v603
  %v1374 = vunpack.c.h.b16 %v603
  %v1375 = vunpack.c.l.b16 %v604
  %v1376 = vunpack.c.h.b16 %v604
  %v1377 = vunpack.c.l.b16 %v605
  %v1378 = vunpack.c.h.b16 %v605
  %v1379 = vunpack.c.l.b16 %v606
  %v1380 = vunpack.c.h.b16 %v606
  %v1381 = vunpack.c.l.b16 %v607
  %v1382 = vunpack.c.h.b16 %v607
  %v1383 = vunpack.c.l.b16 %v608
  %v1384 = vunpack.c.h.b16 %v608
  %v1385 = vunpack.c.l.b16 %v609
  %v1386 = vunpack.c.h.b16 %v609
  %v1387 = vunpack.c.l.b16 %v610
  %v1388 = vunpack.c.h.b16 %v610
  %v1389 = vunpack.c.l.b16 %v611
  %v1390 = vunpack.c.h.b16 %v611
  %v1391 = vunpack.c.l.b16 %v612
  %v1392 = vunpack.c.h.b16 %v612
  %v1393 = vunpack.c.l.b16 %v613
  %v1394 = vunpack.c.h.b16 %v613
  %v1395 = vunpack.c.l.b16 %v614
  %v1396 = vunpack.c.h.b16 %v614
  %v1397 = vunpack.c.l.b16 %v615
  %v1398 = vunpack.c.h.b16 %v615
  %v1399 = vunpack.c.l.b16 %v616
  %v1400 = vunpack.c.h.b16 %v616
  %v1401 = vunpack.c.l.b16 %v617
  %v1402 = vunpack.c.h.b16 %v617
  %v1403 = vunpack.c.l.b16 %v618
  %v1404 = vunpack.c.h.b16 %v618
  %v1405 = vunpack.c.l.b16 %v619
  %v1406 = vunpack.c.h.b16 %v619
  %v1407 = vunpack.c.l.b16 %v620
  %v1408 = vunpack.c.h.b16 %v620
  %v1409 = vunpack.c.l.b16 %v621
  %v1410 = vunpack.c.h.b16 %v621
  %v1411 = vunpack.c.l.b16 %v622
  %v1412 = vunpack.c.h.b16 %v622
  %v1413 = vunpack.c.l.b16 %v623
  %v1414 = vunpack.c.h.b16 %v623
  %v1415 = vunpack.c.l.b16 %v624
  %v1416 = vunpack.c.h.b16 %v624
  %v1417 = vunpack.c.l.b16 %v625
  %v1418 = vunpack.c.h.b16 %v625
  %v1419 = vunpack.c.l.b16 %v626
  %v1420 = vunpack.c.h.b16 %v626
  %v1421 = vunpack.c.l.b16 %v627
  %v1422 = vunpack.c.h.b16 %v627
  %v1423 = vunpack.c.l.b16 %v628
  %v1424 = vunpack.c.h.b16 %v628
  %v1425 = vunpack.c.l.b16 %v629
  %v1426 = vunpack.c.h.b16 %v629
  %v1427 = vunpack.c.l.b16 %v630
  %v1428 = vunpack.c.h.b16 %v630
  %v1429 = vunpack.c.l.b16 %v631
  %v1430 = vunpack.c.h.b16 %v631
  %v1431 = vunpack.c.l.b16 %v632
  %v1432 = vunpack.c.h.b16 %v632
  %v1433 = vunpack.c.l.b16 %v633
  %v1434 = vunpack.c.h.b16 %v633
  %v1435 = vunpack.c.l.b16 %v634
  %v1436 = vunpack.c.h.b16 %v634
  %v1437 = vunpack.c.l.b16 %v635
  %v1438 = vunpack.c.h.b16 %v635
  %v1439 = vunpack.c.l.b16 %v636
  %v1440 = vunpack.c.h.b16 %v636
  %v1441 = vunpack.c.l.b16 %v637
  %v1442 = vunpack.c.h.b16 %v637
  %v1443 = vunpack.c.l.b16 %v638
  %v1444 = vunpack.c.h.b16 %v638
  %v1445 = vunpack.c.l.b16 %v639
  %v1446 = vunpack.c.h.b16 %v639
  %v1447 = vunpack.c.l.b16 %v640
  %v1448 = vunpack.c.h.b16 %v640
  %v1449 = vunpack.c.l.b16 %v641
  %v1450 = vunpack.c.h.b16 %v641
  %v1451 = vunpack.c.l.b16 %v642
  %v1452 = vunpack.c.h.b16 %v642
  %v1453 = vpack.c.b16 %v949, %v941
  %v1454 = vpack.c.b16 %v950, %v942
  %v1455 = vpack.c.b16 %v951, %v943
  %v1456 = vpack.c.b16 %v952, %v944
  %v1457 = vpack.c.b16 %v953, %v945
  %v1458 = vpack.c.b16 %v954, %v946
  %v1459 = vpack.c.b16 %v955, %v947
  %v1460 = vpack.c.b16 %v956, %v948
  %v1461 = vpack.c.b16 %v965, %v957
  %v1462 = vpack.c.b16 %v966, %v958
  %v1463 = vpack.c.b16 %v967, %v959
  %v1464 = vpack.c.b16 %v968, %v960
  %v1465 = vpack.c.b16 %v969, %v961
  %v1466 = vpack.c.b16 %v970, %v962
  %v1467 = vpack.c.b16 %v971, %v963
  %v1468 = vpack.c.b16 %v972, %v964
  %v1469 = vpack.c.b16 %v981, %v973
  %v1470 = vpack.c.b16 %v982, %v974
  %v1471 = vpack.c.b16 %v983, %v975
  %v1472 = vpack.c.b16 %v984, %v976
  %v1473 = vpack.c.b16 %v985, %v977
  %v1474 = vpack.c.b16 %v986, %v978
  %v1475 = vpack.c.b16 %v987, %v979
  %v1476 = vpack.c.b16 %v988, %v980
  %v1477 = vpack.c.b16 %v997, %v989
  %v1478 = vpack.c.b16 %v998, %v990
  %v1479 = vpack.c.b16 %v999, %v991
  %v1480 = vpack.c.b16 %v1000, %v992
  %v1481 = vpack.c.b16 %v1001, %v993
  %v1482 = vpack.c.b16 %v1002, %v994
  %v1483 = vpack.c.b16 %v1003, %v995
  %v1484 = vpack.c.b16 %v1004, %v996
  %v1485 = vpack.c.b16 %v1013, %v1005
  %v1486 = vpack.c.b16 %v1014, %v1006
  %v1487 = vpack.c.b16 %v1015, %v1007
  %v1488 = vpack.c.b16 %v1016, %v1008
  %v1489 = vpack.c.b16 %v1017, %v1009
  %v1490 = vpack.c.b16 %v1018, %v1010
  %v1491 = vpack.c.b16 %v1019, %v1011
  %v1492 = vpack.c.b16 %v1020, %v1012
  %v1493 = vpack.c.b16 %v1029, %v1021
  %v1494 = vpack.c.b16 %v1030, %v1022
  %v1495 = vpack.c.b16 %v1031, %v1023
  %v1496 = vpack.c.b16 %v1032, %v1024
  %v1497 = vpack.c.b16 %v1033, %v1025
  %v1498 = vpack.c.b16 %v1034, %v1026
  %v1499 = vpack.c.b16 %v1035, %v1027
  %v1500 = vpack.c.b16 %v1036, %v1028
  %v1501 = vpack.c.b16 %v1045, %v1037
  %v1502 = vpack.c.b16 %v1046, %v1038
  %v1503 = vpack.c.b16 %v1047, %v1039
  %v1504 = vpack.c.b16 %v1048, %v1040
  %v1505 = vpack.c.b16 %v1049, %v1041
  %v1506 = vpack.c.b16 %v1050, %v1042
  %v1507 = vpack.c.b16 %v1051, %v1043
  %v1508 = vpack.c.b16 %v1052, %v1044
  %v1509 = vpack.c.b16 %v1061, %v1053
  %v1510 = vpack.c.b16 %v1062, %v1054
  %v1511 = vpack.c.b16 %v1063, %v1055
  %v1512 = vpack.c.b16 %v1064, %v1056
  %v1513 = vpack.c.b16 %v1065, %v1057
  %v1514 = vpack.c.b16 %v1066, %v1058
  %v1515 = vpack.c.b16 %v1067, %v1059
  %v1516 = vpack.c.b16 %v1068, %v1060
  %v1517 = vpack.c.b16 %v1077, %v1069
  %v1518 = vpack.c.b16 %v1078, %v1070
  %v1519 = vpack.c.b16 %v1079, %v1071
  %v1520 = vpack.c.b16 %v1080, %v1072
  %v1521 = vpack.c.b16 %v1081, %v1073
  %v1522 = vpack.c.b16 %v1082, %v1074
  %v1523 = vpack.c.b16 %v1083, %v1075
  %v1524 = vpack.c.b16 %v1084, %v1076
  %v1525 = vpack.c.b16 %v1093, %v1085
  %v1526 = vpack.c.b16 %v1094, %v1086
  %v1527 = vpack.c.b16 %v1095, %v1087
  %v1528 = vpack.c.b16 %v1096, %v1088
  %v1529 = vpack.c.b16 %v1097, %v1089
  %v1530 = vpack.c.b16 %v1098, %v1090
  %v1531 = vpack.c.b16 %v1099, %v1091
  %v1532 = vpack.c.b16 %v1100, %v1092
  %v1533 = vpack.c.b16 %v1109, %v1101
  %v1534 = vpack.c.b16 %v1110, %v1102
  %v1535 = vpack.c.b16 %v1111, %v1103
  %v1536 = vpack.c.b16 %v1112, %v1104
  %v1537 = vpack.c.b16 %v1113, %v1105
  %v1538 = vpack.c.b16 %v1114, %v1106
  %v1539 = vpack.c.b16 %v1115, %v1107
  %v1540 = vpack.c.b16 %v1116, %v1108
  %v1541 = vpack.c.b16 %v1125, %v1117
  %v1542 = vpack.c.b16 %v1126, %v1118
  %v1543 = vpack.c.b16 %v1127, %v1119
  %v1544 = vpack.c.b16 %v1128, %v1120
  %v1545 = vpack.c.b16 %v1129, %v1121
  %v1546 = vpack.c.b16 %v1130, %v1122
  %v1547 = vpack.c.b16 %v1131, %v1123
  %v1548 = vpack.c.b16 %v1132, %v1124
  %v1549 = vpack.c.b16 %v1141, %v1133
  %v1550 = vpack.c.b16 %v1142, %v1134
  %v1551 = vpack.c.b16 %v1143, %v1135
  %v1552 = vpack.c.b16 %v1144, %v1136
  %v1553 = vpack.c.b16 %v1145, %v1137
  %v1554 = vpack.c.b16 %v1146, %v1138
  %v1555 = vpack.c.b16 %v1147, %v1139
  %v1556 = vpack.c.b16 %v1148, %v1140
  %v1557 = vpack.c.b16 %v1157, %v1149
  %v1558 = vpack.c.b16 %v1158, %v1150
  %v1559 = vpack.c.b16 %v1159, %v1151
  %v1560 = vpack.c.b16 %v1160, %v1152
  %v1561 = vpack.c.b16 %v1161, %v1153
  %v1562 = vpack.c.b16 %v1162, %v1154
  %v1563 = vpack.c.b16 %v1163, %v1155
  %v1564 = vpack.c.b16 %v1164, %v1156
  %v1565 = vpack.c.b16 %v1173, %v1165
  %v1566 = vpack.c.b16 %v1174, %v1166
  %v1567 = vpack.c.b16 %v1175, %v1167
  %v1568 = vpack.c.b16 %v1176, %v1168
  %v1569 = vpack.c.b16 %v1177, %v1169
  %v1570 = vpack.c.b16 %v1178, %v1170
  %v1571 = vpack.c.b16 %v1179, %v1171
  %v1572 = vpack.c.b16 %v1180, %v1172
  %v1573 = vpack.c.b16 %v1189, %v1181
  %v1574 = vpack.c.b16 %v1190, %v1182
  %v1575 = vpack.c.b16 %v1191, %v1183
  %v1576 = vpack.c.b16 %v1192, %v1184
  %v1577 = vpack.c.b16 %v1193, %v1185
  %v1578 = vpack.c.b16 %v1194, %v1186
  %v1579 = vpack.c.b16 %v1195, %v1187
  %v1580 = vpack.c.b16 %v1196, %v1188
  %v1581 = vpack.c.b16 %v1205, %v1197
  %v1582 = vpack.c.b16 %v1206, %v1198
  %v1583 = vpack.c.b16 %v1207, %v1199
  %v1584 = vpack.c.b16 %v1208, %v1200
  %v1585 = vpack.c.b16 %v1209, %v1201
  %v1586 = vpack.c.b16 %v1210, %v1202
  %v1587 = vpack.c.b16 %v1211, %v1203
  %v1588 = vpack.c.b16 %v1212, %v1204
  %v1589 = vpack.c.b16 %v1221, %v1213
  %v1590 = vpack.c.b16 %v1222, %v1214
  %v1591 = vpack.c.b16 %v1223, %v1215
  %v1592 = vpack.c.b16 %v1224, %v1216
  %v1593 = vpack.c.b16 %v1225, %v1217
  %v1594 = vpack.c.b16 %v1226, %v1218
  %v1595 = vpack.c.b16 %v1227, %v1219
  %v1596 = vpack.c.b16 %v1228, %v1220
  %v1597 = vpack.c.b16 %v1237, %v1229
  %v1598 = vpack.c.b16 %v1238, %v1230
  %v1599 = vpack.c.b16 %v1239, %v1231
  %v1600 = vpack.c.b16 %v1240, %v1232
  %v1601 = vpack.c.b16 %v1241, %v1233
  %v1602 = vpack.c.b16 %v1242, %v1234
  %v1603 = vpack.c.b16 %v1243, %v1235
  %v1604 = vpack.c.b16 %v1244, %v1236
  %v1605 = vpack.c.b16 %v1253, %v1245
  %v1606 = vpack.c.b16 %v1254, %v1246
  %v1607 = vpack.c.b16 %v1255, %v1247
  %v1608 = vpack.c.b16 %v1256, %v1248
  %v1609 = vpack.c.b16 %v1257, %v1249
  %v1610 = vpack.c.b16 %v1258, %v1250
  %v1611 = vpack.c.b16 %v1259, %v1251
  %v1612 = vpack.c.b16 %v1260, %v1252
  %v1613 = vpack.c.b16 %v1269, %v1261
  %v1614 = vpack.c.b16 %v1270, %v1262
  %v1615 = vpack.c.b16 %v1271, %v1263
  %v1616 = vpack.c.b16 %v1272, %v1264
  %v1617 = vpack.c.b16 %v1273, %v1265
  %v1618 = vpack.c.b16 %v1274, %v1266
  %v1619 = vpack.c.b16 %v1275, %v1267
  %v1620 = vpack.c.b16 %v1276, %v1268
  %v1621 = vpack.c.b16 %v1285, %v1277
  %v1622 = vpack.c.b16 %v1286, %v1278
  %v1623 = vpack.c.b16 %v1287, %v1279
  %v1624 = vpack.c.b16 %v1288, %v1280
  %v1625 = vpack.c.b16 %v1289, %v1281
  %v1626 = vpack.c.b16 %v1290, %v1282
  %v1627 = vpack.c.b16 %v1291, %v1283
  %v1628 = vpack.c.b16 %v1292, %v1284
  %v1629 = vpack.c.b16 %v1301, %v1293
  %v1630 = vpack.c.b16 %v1302, %v1294
  %v1631 = vpack.c.b16 %v1303, %v1295
  %v1632 = vpack.c.b16 %v1304, %v1296
  %v1633 = vpack.c.b16 %v1305, %v1297
  %v1634 = vpack.c.b16 %v1306, %v1298
  %v1635 = vpack.c.b16 %v1307, %v1299
  %v1636 = vpack.c.b16 %v1308, %v1300
  %v1637 = vpack.c.b16 %v1317, %v1309
  %v1638 = vpack.c.b16 %v1318, %v1310
  %v1639 = vpack.c.b16 %v1319, %v1311
  %v1640 = vpack.c.b16 %v1320, %v1312
  %v1641 = vpack.c.b16 %v1321, %v1313
  %v1642 = vpack.c.b16 %v1322, %v1314
  %v1643 = vpack.c.b16 %v1323, %v1315
  %v1644 = vpack.c.b16 %v1324, %v1316
  %v1645 = vpack.c.b16 %v1333, %v1325
  %v1646 = vpack.c.b16 %v1334, %v1326
  %v1647 = vpack.c.b16 %v1335, %v1327
  %v1648 = vpack.c.b16 %v1336, %v1328
  %v1649 = vpack.c.b16 %v1337, %v1329
  %v1650 = vpack.c.b16 %v1338, %v1330
  %v1651 = vpack.c.b16 %v1339, %v1331
  %v1652 = vpack.c.b16 %v1340, %v1332
  %v1653 = vpack.c.b16 %v1349, %v1341
  %v1654 = vpack.c.b16 %v1350, %v1342
  %v1655 = vpack.c.b16 %v1351, %v1343
  %v1656 = vpack.c.b16 %v1352, %v1344
  %v1657 = vpack.c.b16 %v1353, %v1345
  %v1658 = vpack.c.b16 %v1354, %v1346
  %v1659 = vpack.c.b16 %v1355, %v1347
  %v1660 = vpack.c.b16 %v1356, %v1348
  %v1661 = vpack.c.b16 %v1365, %v1357
  %v1662 = vpack.c.b16 %v1366, %v1358
  %v1663 = vpack.c.b16 %v1367, %v1359
  %v1664 = vpack.c.b16 %v1368, %v1360
  %v1665 = vpack.c.b16 %v1369, %v1361
  %v1666 = vpack.c.b16 %v1370, %v1362
  %v1667 = vpack.c.b16 %v1371, %v1363
  %v1668 = vpack.c.b16 %v1372, %v1364
  %v1669 = vpack.c.b16 %v1381, %v1373
  %v1670 = vpack.c.b16 %v1382, %v1374
  %v1671 = vpack.c.b16 %v1383, %v1375
  %v1672 = vpack.c.b16 %v1384, %v1376
  %v1673 = vpack.c.b16 %v1385, %v1377
  %v1674 = vpack.c.b16 %v1386, %v1378
  %v1675 = vpack.c.b16 %v1387, %v1379
  %v1676 = vpack.c.b16 %v1388, %v1380
  %v1677 = vpack.c.b16 %v1397, %v1389
  %v1678 = vpack.c.b16 %v1398, %v1390
  %v1679 = vpack.c.b16 %v1399, %v1391
  %v1680 = vpack.c.b16 %v1400, %v1392
  %v1681 = vpack.c.b16 %v1401, %v1393
  %v1682 = vpack.c.b16 %v1402, %v1394
  %v1683 = vpack.c.b16 %v1403, %v1395
  %v1684 = vpack.c.b16 %v1404, %v1396
  %v1685 = vpack.c.b16 %v1413, %v1405
  %v1686 = vpack.c.b16 %v1414, %v1406
  %v1687 = vpack.c.b16 %v1415, %v1407
  %v1688 = vpack.c.b16 %v1416, %v1408
  %v1689 = vpack.c.b16 %v1417, %v1409
  %v1690 = vpack.c.b16 %v1418, %v1410
  %v1691 = vpack.c.b16 %v1419, %v1411
  %v1692 = vpack.c.b16 %v1420, %v1412
  %v1693 = vpack.c.b16 %v1429, %v1421
  %v1694 = vpack.c.b16 %v1430, %v1422
  %v1695 = vpack.c.b16 %v1431, %v1423
  %v1696 = vpack.c.b16 %v1432, %v1424
  %v1697 = vpack.c.b16 %v1433, %v1425
  %v1698 = vpack.c.b16 %v1434, %v1426
  %v1699 = vpack.c.b16 %v1435, %v1427
  %v1700 = vpack.c.b16 %v1436, %v1428
  %v1701 = vpack.c.b16 %v1445, %v1437
  %v1702 = vpack.c.b16 %v1446, %v1438
  %v1703 = vpack.c.b16 %v1447, %v1439
  %v1704 = vpack.c.b16 %v1448, %v1440
  %v1705 = vpack.c.b16 %v1449, %v1441
  %v1706 = vpack.c.b16 %v1450, %v1442
  %v1707 = vpack.c.b16 %v1451, %v1443
  %v1708 = vpack.c.b16 %v1452, %v1444
  %1965 = vmatprep.subr.bf16.mxu0 %v1510
  %1966 = vmatpush1.bf16.msra.mxu0 %v1509
  %1967 = vmatprep.subr.bf16.mxu0 %v1502
  %1968 = vmatpush1.bf16.msra.mxu0 %v1501
  %1969 = vmatprep.subr.bf16.mxu0 %v1494
  %1970 = vmatpush1.bf16.msra.mxu0 %v1493
  %1971 = vmatprep.subr.bf16.mxu0 %v1486
  %1972 = vmatpush1.bf16.msra.mxu0 %v1485
  %1973 = vmatprep.subr.bf16.mxu0 %v1478
  %1974 = vmatpush1.bf16.msra.mxu0 %v1477
  %1975 = vmatprep.subr.bf16.mxu0 %v1470
  %1976 = vmatpush1.bf16.msra.mxu0 %v1469
  %1977 = vmatprep.subr.bf16.mxu0 %v1462
  %1978 = vmatpush1.bf16.msra.mxu0 %v1461
  %1979 = vmatprep.subr.bf16.mxu0 %v1454
  %1980 = vmatpush1.bf16.msra.mxu0 %v1453
  %1981 = vmatprep.subr.bf16.mxu0 %v1574
  %1982 = vmatpush2.bf16.msra.mxu0 %v1573
  %1983 = vmatprep.subr.bf16.mxu0 %v1566
  %1984 = vmatpush2.bf16.msra.mxu0 %v1565
  %1985 = vmatprep.subr.bf16.mxu0 %v1558
  %1986 = vmatpush2.bf16.msra.mxu0 %v1557
  %1987 = vmatprep.subr.bf16.mxu0 %v1550
  %1988 = vmatpush2.bf16.msra.mxu0 %v1549
  %1989 = vmatprep.subr.bf16.mxu0 %v1542
  %1990 = vmatpush2.bf16.msra.mxu0 %v1541
  %1991 = vmatprep.subr.bf16.mxu0 %v1534
  %1992 = vmatpush2.bf16.msra.mxu0 %v1533
  %1993 = vmatprep.subr.bf16.mxu0 %v1526
  %1994 = vmatpush2.bf16.msra.mxu0 %v1525
  %1995 = vmatprep.subr.bf16.mxu0 %v1518
  %1996 = vmatpush2.bf16.msra.mxu0 %v1517
  %1997 = vmatprep.mubr.bf16.mxu0 %v384
  %1998 = vmatmul.mubr.bf16.gmra.mxu0 %v383
  %v1999 = vpop.f32.mrf.mxu0
  %v2000 = vadd.f32 %v648, %v1999
  %v2001 = vpop.f32.mrf.mxu0
  %v2002 = vadd.f32 %v652, %v2001
  %v2003 = vpop.f32.mrf.mxu0
  %v2004 = vpop.f32.mrf.mxu0
  %2005 = vdwg.mxu0
  %2006 = vmatprep.subr.bf16.mxu0 %v1638
  %2007 = vmatpush1.bf16.msra.mxu0 %v1637
  %2008 = vmatprep.subr.bf16.mxu0 %v1630
  %2009 = vmatpush1.bf16.msra.mxu0 %v1629
  %2010 = vmatprep.subr.bf16.mxu0 %v1622
  %2011 = vmatpush1.bf16.msra.mxu0 %v1621
  %2012 = vmatprep.subr.bf16.mxu0 %v1614
  %2013 = vmatpush1.bf16.msra.mxu0 %v1613
  %2014 = vmatprep.subr.bf16.mxu0 %v1606
  %2015 = vmatpush1.bf16.msra.mxu0 %v1605
  %2016 = vmatprep.subr.bf16.mxu0 %v1598
  %2017 = vmatpush1.bf16.msra.mxu0 %v1597
  %2018 = vmatprep.subr.bf16.mxu0 %v1590
  %2019 = vmatpush1.bf16.msra.mxu0 %v1589
  %2020 = vmatprep.subr.bf16.mxu0 %v1582
  %2021 = vmatpush1.bf16.msra.mxu0 %v1581
  %2022 = vmatprep.subr.bf16.mxu0 %v1702
  %2023 = vmatpush2.bf16.msra.mxu0 %v1701
  %2024 = vmatprep.subr.bf16.mxu0 %v1694
  %2025 = vmatpush2.bf16.msra.mxu0 %v1693
  %2026 = vmatprep.subr.bf16.mxu0 %v1686
  %2027 = vmatpush2.bf16.msra.mxu0 %v1685
  %2028 = vmatprep.subr.bf16.mxu0 %v1678
  %2029 = vmatpush2.bf16.msra.mxu0 %v1677
  %2030 = vmatprep.subr.bf16.mxu0 %v1670
  %2031 = vmatpush2.bf16.msra.mxu0 %v1669
  %2032 = vmatprep.subr.bf16.mxu0 %v1662
  %2033 = vmatpush2.bf16.msra.mxu0 %v1661
  %2034 = vmatprep.subr.bf16.mxu0 %v1654
  %2035 = vmatpush2.bf16.msra.mxu0 %v1653
  %2036 = vmatprep.subr.bf16.mxu0 %v1646
  %2037 = vmatpush2.bf16.msra.mxu0 %v1645
  %2038 = vmatprep.mubr.bf16.mxu0 %v386
  %2039 = vmatmul.mubr.bf16.gmra.mxu0 %v385
  %v2040 = vpop.f32.mrf.mxu0
  %v2041 = vadd.f32 %v2000, %v2040
  %v2042 = vpop.f32.mrf.mxu0
  %v2043 = vadd.f32 %v2002, %v2042
  %v2044 = vpop.f32.mrf.mxu0
  %v2045 = vpop.f32.mrf.mxu0
  %2046 = vdwg.mxu0
  %2047 = vmatprep.subr.bf16.mxu0 %v1512
  %2048 = vmatpush1.bf16.msra.mxu0 %v1511
  %2049 = vmatprep.subr.bf16.mxu0 %v1504
  %2050 = vmatpush1.bf16.msra.mxu0 %v1503
  %2051 = vmatprep.subr.bf16.mxu0 %v1496
  %2052 = vmatpush1.bf16.msra.mxu0 %v1495
  %2053 = vmatprep.subr.bf16.mxu0 %v1488
  %2054 = vmatpush1.bf16.msra.mxu0 %v1487
  %2055 = vmatprep.subr.bf16.mxu0 %v1480
  %2056 = vmatpush1.bf16.msra.mxu0 %v1479
  %2057 = vmatprep.subr.bf16.mxu0 %v1472
  %2058 = vmatpush1.bf16.msra.mxu0 %v1471
  %2059 = vmatprep.subr.bf16.mxu0 %v1464
  %2060 = vmatpush1.bf16.msra.mxu0 %v1463
  %2061 = vmatprep.subr.bf16.mxu0 %v1456
  %2062 = vmatpush1.bf16.msra.mxu0 %v1455
  %2063 = vmatprep.subr.bf16.mxu0 %v1576
  %2064 = vmatpush2.bf16.msra.mxu0 %v1575
  %2065 = vmatprep.subr.bf16.mxu0 %v1568
  %2066 = vmatpush2.bf16.msra.mxu0 %v1567
  %2067 = vmatprep.subr.bf16.mxu0 %v1560
  %2068 = vmatpush2.bf16.msra.mxu0 %v1559
  %2069 = vmatprep.subr.bf16.mxu0 %v1552
  %2070 = vmatpush2.bf16.msra.mxu0 %v1551
  %2071 = vmatprep.subr.bf16.mxu0 %v1544
  %2072 = vmatpush2.bf16.msra.mxu0 %v1543
  %2073 = vmatprep.subr.bf16.mxu0 %v1536
  %2074 = vmatpush2.bf16.msra.mxu0 %v1535
  %2075 = vmatprep.subr.bf16.mxu0 %v1528
  %2076 = vmatpush2.bf16.msra.mxu0 %v1527
  %2077 = vmatprep.subr.bf16.mxu0 %v1520
  %2078 = vmatpush2.bf16.msra.mxu0 %v1519
  %2079 = vmatprep.mubr.bf16.mxu0 %v384
  %2080 = vmatmul.mubr.bf16.gmra.mxu0 %v383
  %v2081 = vpop.f32.mrf.mxu0
  %v2082 = vadd.f32 %v656, %v2081
  %v2083 = vpop.f32.mrf.mxu0
  %v2084 = vadd.f32 %v660, %v2083
  %v2085 = vpop.f32.mrf.mxu0
  %v2086 = vpop.f32.mrf.mxu0
  %2087 = vdwg.mxu0
  %2088 = vmatprep.subr.bf16.mxu0 %v1640
  %2089 = vmatpush1.bf16.msra.mxu0 %v1639
  %2090 = vmatprep.subr.bf16.mxu0 %v1632
  %2091 = vmatpush1.bf16.msra.mxu0 %v1631
  %2092 = vmatprep.subr.bf16.mxu0 %v1624
  %2093 = vmatpush1.bf16.msra.mxu0 %v1623
  %2094 = vmatprep.subr.bf16.mxu0 %v1616
  %2095 = vmatpush1.bf16.msra.mxu0 %v1615
  %2096 = vmatprep.subr.bf16.mxu0 %v1608
  %2097 = vmatpush1.bf16.msra.mxu0 %v1607
  %2098 = vmatprep.subr.bf16.mxu0 %v1600
  %2099 = vmatpush1.bf16.msra.mxu0 %v1599
  %2100 = vmatprep.subr.bf16.mxu0 %v1592
  %2101 = vmatpush1.bf16.msra.mxu0 %v1591
  %2102 = vmatprep.subr.bf16.mxu0 %v1584
  %2103 = vmatpush1.bf16.msra.mxu0 %v1583
  %2104 = vmatprep.subr.bf16.mxu0 %v1704
  %2105 = vmatpush2.bf16.msra.mxu0 %v1703
  %2106 = vmatprep.subr.bf16.mxu0 %v1696
  %2107 = vmatpush2.bf16.msra.mxu0 %v1695
  %2108 = vmatprep.subr.bf16.mxu0 %v1688
  %2109 = vmatpush2.bf16.msra.mxu0 %v1687
  %2110 = vmatprep.subr.bf16.mxu0 %v1680
  %2111 = vmatpush2.bf16.msra.mxu0 %v1679
  %2112 = vmatprep.subr.bf16.mxu0 %v1672
  %2113 = vmatpush2.bf16.msra.mxu0 %v1671
  %2114 = vmatprep.subr.bf16.mxu0 %v1664
  %2115 = vmatpush2.bf16.msra.mxu0 %v1663
  %2116 = vmatprep.subr.bf16.mxu0 %v1656
  %2117 = vmatpush2.bf16.msra.mxu0 %v1655
  %2118 = vmatprep.subr.bf16.mxu0 %v1648
  %2119 = vmatpush2.bf16.msra.mxu0 %v1647
  %2120 = vmatprep.mubr.bf16.mxu0 %v386
  %2121 = vmatmul.mubr.bf16.gmra.mxu0 %v385
  %v2122 = vpop.f32.mrf.mxu0
  %v2123 = vadd.f32 %v2082, %v2122
  %v2124 = vpop.f32.mrf.mxu0
  %v2125 = vadd.f32 %v2084, %v2124
  %v2126 = vpop.f32.mrf.mxu0
  %v2127 = vpop.f32.mrf.mxu0
  %2128 = vdwg.mxu0
  %2129 = vmatprep.subr.bf16.mxu0 %v1514
  %2130 = vmatpush1.bf16.msra.mxu0 %v1513
  %2131 = vmatprep.subr.bf16.mxu0 %v1506
  %2132 = vmatpush1.bf16.msra.mxu0 %v1505
  %2133 = vmatprep.subr.bf16.mxu0 %v1498
  %2134 = vmatpush1.bf16.msra.mxu0 %v1497
  %2135 = vmatprep.subr.bf16.mxu0 %v1490
  %2136 = vmatpush1.bf16.msra.mxu0 %v1489
  %2137 = vmatprep.subr.bf16.mxu0 %v1482
  %2138 = vmatpush1.bf16.msra.mxu0 %v1481
  %2139 = vmatprep.subr.bf16.mxu0 %v1474
  %2140 = vmatpush1.bf16.msra.mxu0 %v1473
  %2141 = vmatprep.subr.bf16.mxu0 %v1466
  %2142 = vmatpush1.bf16.msra.mxu0 %v1465
  %2143 = vmatprep.subr.bf16.mxu0 %v1458
  %2144 = vmatpush1.bf16.msra.mxu0 %v1457
  %2145 = vmatprep.subr.bf16.mxu0 %v1578
  %2146 = vmatpush2.bf16.msra.mxu0 %v1577
  %2147 = vmatprep.subr.bf16.mxu0 %v1570
  %2148 = vmatpush2.bf16.msra.mxu0 %v1569
  %2149 = vmatprep.subr.bf16.mxu0 %v1562
  %2150 = vmatpush2.bf16.msra.mxu0 %v1561
  %2151 = vmatprep.subr.bf16.mxu0 %v1554
  %2152 = vmatpush2.bf16.msra.mxu0 %v1553
  %2153 = vmatprep.subr.bf16.mxu0 %v1546
  %2154 = vmatpush2.bf16.msra.mxu0 %v1545
  %2155 = vmatprep.subr.bf16.mxu0 %v1538
  %2156 = vmatpush2.bf16.msra.mxu0 %v1537
  %2157 = vmatprep.subr.bf16.mxu0 %v1530
  %2158 = vmatpush2.bf16.msra.mxu0 %v1529
  %2159 = vmatprep.subr.bf16.mxu0 %v1522
  %2160 = vmatpush2.bf16.msra.mxu0 %v1521
  %2161 = vmatprep.mubr.bf16.mxu0 %v384
  %2162 = vmatmul.mubr.bf16.gmra.mxu0 %v383
  %v2163 = vpop.f32.mrf.mxu0
  %v2164 = vadd.f32 %v664, %v2163
  %v2165 = vpop.f32.mrf.mxu0
  %v2166 = vadd.f32 %v668, %v2165
  %v2167 = vpop.f32.mrf.mxu0
  %v2168 = vpop.f32.mrf.mxu0
  %2169 = vdwg.mxu0
  %2170 = vmatprep.subr.bf16.mxu0 %v1642
  %2171 = vmatpush1.bf16.msra.mxu0 %v1641
  %2172 = vmatprep.subr.bf16.mxu0 %v1634
  %2173 = vmatpush1.bf16.msra.mxu0 %v1633
  %2174 = vmatprep.subr.bf16.mxu0 %v1626
  %2175 = vmatpush1.bf16.msra.mxu0 %v1625
  %2176 = vmatprep.subr.bf16.mxu0 %v1618
  %2177 = vmatpush1.bf16.msra.mxu0 %v1617
  %2178 = vmatprep.subr.bf16.mxu0 %v1610
  %2179 = vmatpush1.bf16.msra.mxu0 %v1609
  %2180 = vmatprep.subr.bf16.mxu0 %v1602
  %2181 = vmatpush1.bf16.msra.mxu0 %v1601
  %2182 = vmatprep.subr.bf16.mxu0 %v1594
  %2183 = vmatpush1.bf16.msra.mxu0 %v1593
  %2184 = vmatprep.subr.bf16.mxu0 %v1586
  %2185 = vmatpush1.bf16.msra.mxu0 %v1585
  %2186 = vmatprep.subr.bf16.mxu0 %v1706
  %2187 = vmatpush2.bf16.msra.mxu0 %v1705
  %2188 = vmatprep.subr.bf16.mxu0 %v1698
  %2189 = vmatpush2.bf16.msra.mxu0 %v1697
  %2190 = vmatprep.subr.bf16.mxu0 %v1690
  %2191 = vmatpush2.bf16.msra.mxu0 %v1689
  %2192 = vmatprep.subr.bf16.mxu0 %v1682
  %2193 = vmatpush2.bf16.msra.mxu0 %v1681
  %2194 = vmatprep.subr.bf16.mxu0 %v1674
  %2195 = vmatpush2.bf16.msra.mxu0 %v1673
  %2196 = vmatprep.subr.bf16.mxu0 %v1666
  %2197 = vmatpush2.bf16.msra.mxu0 %v1665
  %2198 = vmatprep.subr.bf16.mxu0 %v1658
  %2199 = vmatpush2.bf16.msra.mxu0 %v1657
  %2200 = vmatprep.subr.bf16.mxu0 %v1650
  %2201 = vmatpush2.bf16.msra.mxu0 %v1649
  %2202 = vmatprep.mubr.bf16.mxu0 %v386
  %2203 = vmatmul.mubr.bf16.gmra.mxu0 %v385
  %v2204 = vpop.f32.mrf.mxu0
  %v2205 = vadd.f32 %v2164, %v2204
  %v2206 = vpop.f32.mrf.mxu0
  %v2207 = vadd.f32 %v2166, %v2206
  %v2208 = vpop.f32.mrf.mxu0
  %v2209 = vpop.f32.mrf.mxu0
  %2210 = vdwg.mxu0
  %2211 = vmatprep.subr.bf16.mxu0 %v1516
  %2212 = vmatpush1.bf16.msra.mxu0 %v1515
  %2213 = vmatprep.subr.bf16.mxu0 %v1508
  %2214 = vmatpush1.bf16.msra.mxu0 %v1507
  %2215 = vmatprep.subr.bf16.mxu0 %v1500
  %2216 = vmatpush1.bf16.msra.mxu0 %v1499
  %2217 = vmatprep.subr.bf16.mxu0 %v1492
  %2218 = vmatpush1.bf16.msra.mxu0 %v1491
  %2219 = vmatprep.subr.bf16.mxu0 %v1484
  %2220 = vmatpush1.bf16.msra.mxu0 %v1483
  %2221 = vmatprep.subr.bf16.mxu0 %v1476
  %2222 = vmatpush1.bf16.msra.mxu0 %v1475
  %2223 = vmatprep.subr.bf16.mxu0 %v1468
  %2224 = vmatpush1.bf16.msra.mxu0 %v1467
  %2225 = vmatprep.subr.bf16.mxu0 %v1460
  %2226 = vmatpush1.bf16.msra.mxu0 %v1459
  %2227 = vmatprep.subr.bf16.mxu0 %v1580
  %2228 = vmatpush2.bf16.msra.mxu0 %v1579
  %2229 = vmatprep.subr.bf16.mxu0 %v1572
  %2230 = vmatpush2.bf16.msra.mxu0 %v1571
  %2231 = vmatprep.subr.bf16.mxu0 %v1564
  %2232 = vmatpush2.bf16.msra.mxu0 %v1563
  %2233 = vmatprep.subr.bf16.mxu0 %v1556
  %2234 = vmatpush2.bf16.msra.mxu0 %v1555
  %2235 = vmatprep.subr.bf16.mxu0 %v1548
  %2236 = vmatpush2.bf16.msra.mxu0 %v1547
  %2237 = vmatprep.subr.bf16.mxu0 %v1540
  %2238 = vmatpush2.bf16.msra.mxu0 %v1539
  %2239 = vmatprep.subr.bf16.mxu0 %v1532
  %2240 = vmatpush2.bf16.msra.mxu0 %v1531
  %2241 = vmatprep.subr.bf16.mxu0 %v1524
  %2242 = vmatpush2.bf16.msra.mxu0 %v1523
  %2243 = vmatprep.mubr.bf16.mxu0 %v384
  %2244 = vmatmul.mubr.bf16.gmra.mxu0 %v383
  %v2245 = vpop.f32.mrf.mxu0
  %v2246 = vadd.f32 %v672, %v2245
  %v2247 = vpop.f32.mrf.mxu0
  %v2248 = vadd.f32 %v676, %v2247
  %v2249 = vpop.f32.mrf.mxu0
  %v2250 = vpop.f32.mrf.mxu0
  %2251 = vdwg.mxu0
  %2252 = vmatprep.subr.bf16.mxu0 %v1644
  %2253 = vmatpush1.bf16.msra.mxu0 %v1643
  %2254 = vmatprep.subr.bf16.mxu0 %v1636
  %2255 = vmatpush1.bf16.msra.mxu0 %v1635
  %2256 = vmatprep.subr.bf16.mxu0 %v1628
  %2257 = vmatpush1.bf16.msra.mxu0 %v1627
  %2258 = vmatprep.subr.bf16.mxu0 %v1620
  %2259 = vmatpush1.bf16.msra.mxu0 %v1619
  %2260 = vmatprep.subr.bf16.mxu0 %v1612
  %2261 = vmatpush1.bf16.msra.mxu0 %v1611
  %2262 = vmatprep.subr.bf16.mxu0 %v1604
  %2263 = vmatpush1.bf16.msra.mxu0 %v1603
  %2264 = vmatprep.subr.bf16.mxu0 %v1596
  %2265 = vmatpush1.bf16.msra.mxu0 %v1595
  %2266 = vmatprep.subr.bf16.mxu0 %v1588
  %2267 = vmatpush1.bf16.msra.mxu0 %v1587
  %2268 = vmatprep.subr.bf16.mxu0 %v1708
  %2269 = vmatpush2.bf16.msra.mxu0 %v1707
  %2270 = vmatprep.subr.bf16.mxu0 %v1700
  %2271 = vmatpush2.bf16.msra.mxu0 %v1699
  %2272 = vmatprep.subr.bf16.mxu0 %v1692
  %2273 = vmatpush2.bf16.msra.mxu0 %v1691
  %2274 = vmatprep.subr.bf16.mxu0 %v1684
  %2275 = vmatpush2.bf16.msra.mxu0 %v1683
  %2276 = vmatprep.subr.bf16.mxu0 %v1676
  %2277 = vmatpush2.bf16.msra.mxu0 %v1675
  %2278 = vmatprep.subr.bf16.mxu0 %v1668
  %2279 = vmatpush2.bf16.msra.mxu0 %v1667
  %2280 = vmatprep.subr.bf16.mxu0 %v1660
  %2281 = vmatpush2.bf16.msra.mxu0 %v1659
  %2282 = vmatprep.subr.bf16.mxu0 %v1652
  %2283 = vmatpush2.bf16.msra.mxu0 %v1651
  %2284 = vmatprep.mubr.bf16.mxu0 %v386
  %2285 = vmatmul.mubr.bf16.gmra.mxu0 %v385
  %v2286 = vpop.f32.mrf.mxu0
  %v2287 = vadd.f32 %v2246, %v2286
  %v2288 = vpop.f32.mrf.mxu0
  %v2289 = vadd.f32 %v2248, %v2288
  %v2290 = vpop.f32.mrf.mxu0
  %v2291 = vpop.f32.mrf.mxu0
  %2292 = vdwg.mxu0
  %v2293 = vmax.f32 %v2041, 0.0
  %v2294 = vmax.f32 %v2043, 0.0
  %v2295 = vmax.f32 %v2123, 0.0
  %v2296 = vmax.f32 %v2125, 0.0
  %v2297 = vmax.f32 %v2205, 0.0
  %v2298 = vmax.f32 %v2207, 0.0
  %v2299 = vmax.f32 %v2287, 0.0
  %v2300 = vmax.f32 %v2289, 0.0
  %v2301 = vpack.c.bf16 %v2293, %v2293
  %v2302 = vpack.c.bf16 %v2294, %v2294
  %v2303 = vpack.c.bf16 %v2295, %v2295
  %v2304 = vpack.c.bf16 %v2296, %v2296
  %v2305 = vpack.c.bf16 %v2297, %v2297
  %v2306 = vpack.c.bf16 %v2298, %v2298
  %v2307 = vpack.c.bf16 %v2299, %v2299
  %v2308 = vpack.c.bf16 %v2300, %v2300
  %v2309 = vld [vmem:[%s5] sm:$0xff]
  %v2310 = vld [vmem:[%s5 + $0x8] sm:$0xff]
  %v2311 = vld [vmem:[%s5 + $0x10] sm:$0xff]
  %v2312 = vld [vmem:[%s5 + $0x18] sm:$0xf]
  %v2313 = vld [vmem:[%s5 + $0x1c] sm:$0xff]
  %v2314 = vld [vmem:[%s5 + $0x24] sm:$0xff]
  %v2315 = vld [vmem:[%s5 + $0x2c] sm:$0xff]
  %v2316 = vld [vmem:[%s5 + $0x34] sm:$0xf]
  %v2317 = vld [vmem:[%s5 + $0x38] sm:$0xff]
  %v2318 = vld [vmem:[%s5 + $0x40] sm:$0xff]
  %v2319 = vld [vmem:[%s5 + $0x48] sm:$0xff]
  %v2320 = vld [vmem:[%s5 + $0x50] sm:$0xf]
  %v2321 = vld [vmem:[%s5 + $0x54] sm:$0xff]
  %v2322 = vld [vmem:[%s5 + $0x5c] sm:$0xff]
  %v2323 = vld [vmem:[%s5 + $0x64] sm:$0xff]
  %v2324 = vld [vmem:[%s5 + $0x6c] sm:$0xf]
  %v2325 = vld [vmem:[%s5 + $0x70] sm:$0xff]
  %v2326 = vld [vmem:[%s5 + $0x78] sm:$0xff]
  %v2327 = vld [vmem:[%s5 + $0x80] sm:$0xff]
  %v2328 = vld [vmem:[%s5 + $0x88] sm:$0xf]
  %v2329 = vld [vmem:[%s5 + $0x8c] sm:$0xff]
  %v2330 = vld [vmem:[%s5 + $0x94] sm:$0xff]
  %v2331 = vld [vmem:[%s5 + $0x9c] sm:$0xff]
  %v2332 = vld [vmem:[%s5 + $0xa4] sm:$0xf]
  %v2333 = vld [vmem:[%s5 + $0xa8] sm:$0xff]
  %v2334 = vld [vmem:[%s5 + $0xb0] sm:$0xff]
  %v2335 = vld [vmem:[%s5 + $0xb8] sm:$0xff]
  %v2336 = vld [vmem:[%s5 + $0xc0] sm:$0xf]
  %v2337 = vld [vmem:[%s5 + $0xc4] sm:$0xff]
  %v2338 = vld [vmem:[%s5 + $0xcc] sm:$0xff]
  %v2339 = vld [vmem:[%s5 + $0xd4] sm:$0xff]
  %v2340 = vld [vmem:[%s5 + $0xdc] sm:$0xf]
  %v2341 = vld [vmem:[%s5 + $0xe0] sm:$0xff]
  %v2342 = vld [vmem:[%s5 + $0xe8] sm:$0xff]
  %v2343 = vld [vmem:[%s5 + $0xf0] sm:$0xff]
  %v2344 = vld [vmem:[%s5 + $0xf8] sm:$0xf]
  %v2345 = vld [vmem:[%s5 + $0xfc] sm:$0xff]
  %v2346 = vld [vmem:[%s5 + $0x104] sm:$0xff]
  %v2347 = vld [vmem:[%s5 + $0x10c] sm:$0xff]
  %v2348 = vld [vmem:[%s5 + $0x114] sm:$0xf]
  %v2349 = vld [vmem:[%s5 + $0x118] sm:$0xff]
  %v2350 = vld [vmem:[%s5 + $0x120] sm:$0xff]
  %v2351 = vld [vmem:[%s5 + $0x128] sm:$0xff]
  %v2352 = vld [vmem:[%s5 + $0x130] sm:$0xf]
  %v2353 = vld [vmem:[%s5 + $0x134] sm:$0xff]
  %v2354 = vld [vmem:[%s5 + $0x13c] sm:$0xff]
  %v2355 = vld [vmem:[%s5 + $0x144] sm:$0xff]
  %v2356 = vld [vmem:[%s5 + $0x14c] sm:$0xf]
  %v2357 = vld [vmem:[%s5 + $0x150] sm:$0xff]
  %v2358 = vld [vmem:[%s5 + $0x158] sm:$0xff]
  %v2359 = vld [vmem:[%s5 + $0x160] sm:$0xff]
  %v2360 = vld [vmem:[%s5 + $0x168] sm:$0xf]
  %v2361 = vld [vmem:[%s5 + $0x16c] sm:$0xff]
  %v2362 = vld [vmem:[%s5 + $0x174] sm:$0xff]
  %v2363 = vld [vmem:[%s5 + $0x17c] sm:$0xff]
  %v2364 = vld [vmem:[%s5 + $0x184] sm:$0xf]
  %v2365 = vld [vmem:[%s5 + $0x188] sm:$0xff]
  %v2366 = vld [vmem:[%s5 + $0x190] sm:$0xff]
  %v2367 = vld [vmem:[%s5 + $0x198] sm:$0xff]
  %v2368 = vld [vmem:[%s5 + $0x1a0] sm:$0xf]
  %v2369 = vld [vmem:[%s5 + $0x1a4] sm:$0xff]
  %v2370 = vld [vmem:[%s5 + $0x1ac] sm:$0xff]
  %v2371 = vld [vmem:[%s5 + $0x1b4] sm:$0xff]
  %v2372 = vld [vmem:[%s5 + $0x1bc] sm:$0xf]
  %v2373 = vld [vmem:[%s5 + $0x1c0] sm:$0xff]
  %v2374 = vld [vmem:[%s5 + $0x1c8] sm:$0xff]
  %v2375 = vld [vmem:[%s5 + $0x1d0] sm:$0xff]
  %v2376 = vld [vmem:[%s5 + $0x1d8] sm:$0xf]
  %v2377 = vld [vmem:[%s5 + $0x1dc] sm:$0xff]
  %v2378 = vld [vmem:[%s5 + $0x1e4] sm:$0xff]
  %v2379 = vld [vmem:[%s5 + $0x1ec] sm:$0xff]
  %v2380 = vld [vmem:[%s5 + $0x1f4] sm:$0xf]
  %v2381 = vld [vmem:[%s5 + $0x1f8] sm:$0xff]
  %v2382 = vld [vmem:[%s5 + $0x200] sm:$0xff]
  %v2383 = vld [vmem:[%s5 + $0x208] sm:$0xff]
  %v2384 = vld [vmem:[%s5 + $0x210] sm:$0xf]
  %v2385 = vld [vmem:[%s5 + $0x214] sm:$0xff]
  %v2386 = vld [vmem:[%s5 + $0x21c] sm:$0xff]
  %v2387 = vld [vmem:[%s5 + $0x224] sm:$0xff]
  %v2388 = vld [vmem:[%s5 + $0x22c] sm:$0xf]
  %v2389 = vld [vmem:[%s5 + $0x230] sm:$0xff]
  %v2390 = vld [vmem:[%s5 + $0x238] sm:$0xff]
  %v2391 = vld [vmem:[%s5 + $0x240] sm:$0xff]
  %v2392 = vld [vmem:[%s5 + $0x248] sm:$0xf]
  %v2393 = vld [vmem:[%s5 + $0x24c] sm:$0xff]
  %v2394 = vld [vmem:[%s5 + $0x254] sm:$0xff]
  %v2395 = vld [vmem:[%s5 + $0x25c] sm:$0xff]
  %v2396 = vld [vmem:[%s5 + $0x264] sm:$0xf]
  %v2397 = vld [vmem:[%s5 + $0x268] sm:$0xff]
  %v2398 = vld [vmem:[%s5 + $0x270] sm:$0xff]
  %v2399 = vld [vmem:[%s5 + $0x278] sm:$0xff]
  %v2400 = vld [vmem:[%s5 + $0x280] sm:$0xf]
  %v2401 = vld [vmem:[%s5 + $0x284] sm:$0xff]
  %v2402 = vld [vmem:[%s5 + $0x28c] sm:$0xff]
  %v2403 = vld [vmem:[%s5 + $0x294] sm:$0xff]
  %v2404 = vld [vmem:[%s5 + $0x29c] sm:$0xf]
  %v2405 = vld [vmem:[%s5 + $0x2a0] sm:$0xff]
  %v2406 = vld [vmem:[%s5 + $0x2a8] sm:$0xff]
  %v2407 = vld [vmem:[%s5 + $0x2b0] sm:$0xff]
  %v2408 = vld [vmem:[%s5 + $0x2b8] sm:$0xf]
  %v2409 = vld [vmem:[%s5 + $0x2bc] sm:$0xff]
  %v2410 = vld [vmem:[%s5 + $0x2c4] sm:$0xff]
  %v2411 = vld [vmem:[%s5 + $0x2cc] sm:$0xff]
  %v2412 = vld [vmem:[%s5 + $0x2d4] sm:$0xf]
  %v2413 = vld [vmem:[%s5 + $0x2d8] sm:$0xff]
  %v2414 = vld [vmem:[%s5 + $0x2e0] sm:$0xff]
  %v2415 = vld [vmem:[%s5 + $0x2e8] sm:$0xff]
  %v2416 = vld [vmem:[%s5 + $0x2f0] sm:$0xf]
  %v2417 = vld [vmem:[%s5 + $0x2f4] sm:$0xff]
  %v2418 = vld [vmem:[%s5 + $0x2fc] sm:$0xff]
  %v2419 = vld [vmem:[%s5 + $0x304] sm:$0xff]
  %v2420 = vld [vmem:[%s5 + $0x30c] sm:$0xf]
  %v2421 = vld [vmem:[%s5 + $0x310] sm:$0xff]
  %v2422 = vld [vmem:[%s5 + $0x318] sm:$0xff]
  %v2423 = vld [vmem:[%s5 + $0x320] sm:$0xff]
  %v2424 = vld [vmem:[%s5 + $0x328] sm:$0xf]
  %v2425 = vld [vmem:[%s5 + $0x32c] sm:$0xff]
  %v2426 = vld [vmem:[%s5 + $0x334] sm:$0xff]
  %v2427 = vld [vmem:[%s5 + $0x33c] sm:$0xff]
  %v2428 = vld [vmem:[%s5 + $0x344] sm:$0xf]
  %v2429 = vld [vmem:[%s5 + $0x348] sm:$0xff]
  %v2430 = vld [vmem:[%s5 + $0x350] sm:$0xff]
  %v2431 = vld [vmem:[%s5 + $0x358] sm:$0xff]
  %v2432 = vld [vmem:[%s5 + $0x360] sm:$0xf]
  %v2433 = vld [vmem:[%s5 + $0x364] sm:$0xff]
  %v2434 = vld [vmem:[%s5 + $0x36c] sm:$0xff]
  %v2435 = vld [vmem:[%s5 + $0x374] sm:$0xff]
  %v2436 = vld [vmem:[%s5 + $0x37c] sm:$0xf]
  %v2437 = vld [vmem:[%s5 + $0x380] sm:$0xff]
  %v2438 = vld [vmem:[%s5 + $0x388] sm:$0xff]
  %v2439 = vld [vmem:[%s5 + $0x390] sm:$0xff]
  %v2440 = vld [vmem:[%s5 + $0x398] sm:$0xf]
  %v2441 = vld [vmem:[%s5 + $0x39c] sm:$0xff]
  %v2442 = vld [vmem:[%s5 + $0x3a4] sm:$0xff]
  %v2443 = vld [vmem:[%s5 + $0x3ac] sm:$0xff]
  %v2444 = vld [vmem:[%s5 + $0x3b4] sm:$0xf]
  %v2445 = vld [vmem:[%s5 + $0x3b8] sm:$0xff]
  %v2446 = vld [vmem:[%s5 + $0x3c0] sm:$0xff]
  %v2447 = vld [vmem:[%s5 + $0x3c8] sm:$0xff]
  %v2448 = vld [vmem:[%s5 + $0x3d0] sm:$0xf]
  %v2449 = vld [vmem:[%s5 + $0x3d4] sm:$0xff]
  %v2450 = vld [vmem:[%s5 + $0x3dc] sm:$0xff]
  %v2451 = vld [vmem:[%s5 + $0x3e4] sm:$0xff]
  %v2452 = vld [vmem:[%s5 + $0x3ec] sm:$0xf]
  %v2453 = vld [vmem:[%s5 + $0x3f0] sm:$0xff]
  %v2454 = vld [vmem:[%s5 + $0x3f8] sm:$0xff]
  %v2455 = vld [vmem:[%s5 + $0x400] sm:$0xff]
  %v2456 = vld [vmem:[%s5 + $0x408] sm:$0xf]
  %v2457 = vld [vmem:[%s5 + $0x40c] sm:$0xff]
  %v2458 = vld [vmem:[%s5 + $0x414] sm:$0xff]
  %v2459 = vld [vmem:[%s5 + $0x41c] sm:$0xff]
  %v2460 = vld [vmem:[%s5 + $0x424] sm:$0xf]
  %v2461 = vld [vmem:[%s5 + $0x428] sm:$0xff]
  %v2462 = vld [vmem:[%s5 + $0x430] sm:$0xff]
  %v2463 = vld [vmem:[%s5 + $0x438] sm:$0xff]
  %v2464 = vld [vmem:[%s5 + $0x440] sm:$0xf]
  %v2465 = vld [vmem:[%s5 + $0x444] sm:$0xff]
  %v2466 = vld [vmem:[%s5 + $0x44c] sm:$0xff]
  %v2467 = vld [vmem:[%s5 + $0x454] sm:$0xff]
  %v2468 = vld [vmem:[%s5 + $0x45c] sm:$0xf]
  %v2469 = vld [vmem:[%s5 + $0x460] sm:$0xff]
  %v2470 = vld [vmem:[%s5 + $0x468] sm:$0xff]
  %v2471 = vld [vmem:[%s5 + $0x470] sm:$0xff]
  %v2472 = vld [vmem:[%s5 + $0x478] sm:$0xf]
  %v2473 = vld [vmem:[%s5 + $0x47c] sm:$0xff]
  %v2474 = vld [vmem:[%s5 + $0x484] sm:$0xff]
  %v2475 = vld [vmem:[%s5 + $0x48c] sm:$0xff]
  %v2476 = vld [vmem:[%s5 + $0x494] sm:$0xf]
  %v2477 = vld [vmem:[%s5 + $0x498] sm:$0xff]
  %v2478 = vld [vmem:[%s5 + $0x4a0] sm:$0xff]
  %v2479 = vld [vmem:[%s5 + $0x4a8] sm:$0xff]
  %v2480 = vld [vmem:[%s5 + $0x4b0] sm:$0xf]
  %v2481 = vld [vmem:[%s5 + $0x4b4] sm:$0xff]
  %v2482 = vld [vmem:[%s5 + $0x4bc] sm:$0xff]
  %v2483 = vld [vmem:[%s5 + $0x4c4] sm:$0xff]
  %v2484 = vld [vmem:[%s5 + $0x4cc] sm:$0xf]
  %v2485 = vld [vmem:[%s5 + $0x4d0] sm:$0xff]
  %v2486 = vld [vmem:[%s5 + $0x4d8] sm:$0xff]
  %v2487 = vld [vmem:[%s5 + $0x4e0] sm:$0xff]
  %v2488 = vld [vmem:[%s5 + $0x4e8] sm:$0xf]
  %v2489 = vld [vmem:[%s5 + $0x4ec] sm:$0xff]
  %v2490 = vld [vmem:[%s5 + $0x4f4] sm:$0xff]
  %v2491 = vld [vmem:[%s5 + $0x4fc] sm:$0xff]
  %v2492 = vld [vmem:[%s5 + $0x504] sm:$0xf]
  %v2493 = vld [vmem:[%s5 + $0x508] sm:$0xff]
  %v2494 = vld [vmem:[%s5 + $0x510] sm:$0xff]
  %v2495 = vld [vmem:[%s5 + $0x518] sm:$0xff]
  %v2496 = vld [vmem:[%s5 + $0x520] sm:$0xf]
  %v2497 = vld [vmem:[%s5 + $0x524] sm:$0xff]
  %v2498 = vld [vmem:[%s5 + $0x52c] sm:$0xff]
  %v2499 = vld [vmem:[%s5 + $0x534] sm:$0xff]
  %v2500 = vld [vmem:[%s5 + $0x53c] sm:$0xf]
  %v2501 = vld [vmem:[%s5 + $0x540] sm:$0xff]
  %v2502 = vld [vmem:[%s5 + $0x548] sm:$0xff]
  %v2503 = vld [vmem:[%s5 + $0x550] sm:$0xff]
  %v2504 = vld [vmem:[%s5 + $0x558] sm:$0xf]
  %v2505 = vld [vmem:[%s5 + $0x55c] sm:$0xff]
  %v2506 = vld [vmem:[%s5 + $0x564] sm:$0xff]
  %v2507 = vld [vmem:[%s5 + $0x56c] sm:$0xff]
  %v2508 = vld [vmem:[%s5 + $0x574] sm:$0xf]
  %v2509 = vld [vmem:[%s5 + $0x578] sm:$0xff]
  %v2510 = vld [vmem:[%s5 + $0x580] sm:$0xff]
  %v2511 = vld [vmem:[%s5 + $0x588] sm:$0xff]
  %v2512 = vld [vmem:[%s5 + $0x590] sm:$0xf]
  %v2513 = vld [vmem:[%s5 + $0x594] sm:$0xff]
  %v2514 = vld [vmem:[%s5 + $0x59c] sm:$0xff]
  %v2515 = vld [vmem:[%s5 + $0x5a4] sm:$0xff]
  %v2516 = vld [vmem:[%s5 + $0x5ac] sm:$0xf]
  %v2517 = vld [vmem:[%s5 + $0x5b0] sm:$0xff]
  %v2518 = vld [vmem:[%s5 + $0x5b8] sm:$0xff]
  %v2519 = vld [vmem:[%s5 + $0x5c0] sm:$0xff]
  %v2520 = vld [vmem:[%s5 + $0x5c8] sm:$0xf]
  %v2521 = vld [vmem:[%s5 + $0x5cc] sm:$0xff]
  %v2522 = vld [vmem:[%s5 + $0x5d4] sm:$0xff]
  %v2523 = vld [vmem:[%s5 + $0x5dc] sm:$0xff]
  %v2524 = vld [vmem:[%s5 + $0x5e4] sm:$0xf]
  %v2525 = vld [vmem:[%s5 + $0x5e8] sm:$0xff]
  %v2526 = vld [vmem:[%s5 + $0x5f0] sm:$0xff]
  %v2527 = vld [vmem:[%s5 + $0x5f8] sm:$0xff]
  %v2528 = vld [vmem:[%s5 + $0x600] sm:$0xf]
  %v2529 = vld [vmem:[%s5 + $0x604] sm:$0xff]
  %v2530 = vld [vmem:[%s5 + $0x60c] sm:$0xff]
  %v2531 = vld [vmem:[%s5 + $0x614] sm:$0xff]
  %v2532 = vld [vmem:[%s5 + $0x61c] sm:$0xf]
  %v2533 = vld [vmem:[%s5 + $0x620] sm:$0xff]
  %v2534 = vld [vmem:[%s5 + $0x628] sm:$0xff]
  %v2535 = vld [vmem:[%s5 + $0x630] sm:$0xff]
  %v2536 = vld [vmem:[%s5 + $0x638] sm:$0xf]
  %v2537 = vld [vmem:[%s5 + $0x63c] sm:$0xff]
  %v2538 = vld [vmem:[%s5 + $0x644] sm:$0xff]
  %v2539 = vld [vmem:[%s5 + $0x64c] sm:$0xff]
  %v2540 = vld [vmem:[%s5 + $0x654] sm:$0xf]
  %v2541 = vld [vmem:[%s5 + $0x658] sm:$0xff]
  %v2542 = vld [vmem:[%s5 + $0x660] sm:$0xff]
  %v2543 = vld [vmem:[%s5 + $0x668] sm:$0xff]
  %v2544 = vld [vmem:[%s5 + $0x670] sm:$0xf]
  %v2545 = vld [vmem:[%s5 + $0x674] sm:$0xff]
  %v2546 = vld [vmem:[%s5 + $0x67c] sm:$0xff]
  %v2547 = vld [vmem:[%s5 + $0x684] sm:$0xff]
  %v2548 = vld [vmem:[%s5 + $0x68c] sm:$0xf]
  %v2549 = vld [vmem:[%s5 + $0x690] sm:$0xff]
  %v2550 = vld [vmem:[%s5 + $0x698] sm:$0xff]
  %v2551 = vld [vmem:[%s5 + $0x6a0] sm:$0xff]
  %v2552 = vld [vmem:[%s5 + $0x6a8] sm:$0xf]
  %v2553 = vld [vmem:[%s5 + $0x6ac] sm:$0xff]
  %v2554 = vld [vmem:[%s5 + $0x6b4] sm:$0xff]
  %v2555 = vld [vmem:[%s5 + $0x6bc] sm:$0xff]
  %v2556 = vld [vmem:[%s5 + $0x6c4] sm:$0xf]
  %v2557 = vld [vmem:[%s5 + $0x6c8] sm:$0xff]
  %v2558 = vld [vmem:[%s5 + $0x6d0] sm:$0xff]
  %v2559 = vld [vmem:[%s5 + $0x6d8] sm:$0xff]
  %v2560 = vld [vmem:[%s5 + $0x6e0] sm:$0xf]
  %v2561 = vld [vmem:[%s5 + $0x6e4] sm:$0xff]
  %v2562 = vld [vmem:[%s5 + $0x6ec] sm:$0xff]
  %v2563 = vld [vmem:[%s5 + $0x6f4] sm:$0xff]
  %v2564 = vld [vmem:[%s5 + $0x6fc] sm:$0xf]
  %v2565 = vld [vmem:[%s5 + $0x700] sm:$0xff]
  %v2566 = vld [vmem:[%s5 + $0x708] sm:$0xff]
  %v2567 = vld [vmem:[%s5 + $0x710] sm:$0xff]
  %v2568 = vld [vmem:[%s5 + $0x718] sm:$0xf]
  %v2569 = vld [vmem:[%s5 + $0x71c] sm:$0xff]
  %v2570 = vld [vmem:[%s5 + $0x724] sm:$0xff]
  %v2571 = vld [vmem:[%s5 + $0x72c] sm:$0xff]
  %v2572 = vld [vmem:[%s5 + $0x734] sm:$0xf]
  %v2573 = vld [vmem:[%s5 + $0x738] sm:$0xff]
  %v2574 = vld [vmem:[%s5 + $0x740] sm:$0xff]
  %v2575 = vld [vmem:[%s5 + $0x748] sm:$0xff]
  %v2576 = vld [vmem:[%s5 + $0x750] sm:$0xf]
  %v2577 = vld [vmem:[%s5 + $0x754] sm:$0xff]
  %v2578 = vld [vmem:[%s5 + $0x75c] sm:$0xff]
  %v2579 = vld [vmem:[%s5 + $0x764] sm:$0xff]
  %v2580 = vld [vmem:[%s5 + $0x76c] sm:$0xf]
  %v2581 = vld [vmem:[%s5 + $0x770] sm:$0xff]
  %v2582 = vld [vmem:[%s5 + $0x778] sm:$0xff]
  %v2583 = vld [vmem:[%s5 + $0x780] sm:$0xff]
  %v2584 = vld [vmem:[%s5 + $0x788] sm:$0xf]
  %v2585 = vld [vmem:[%s5 + $0x78c] sm:$0xff]
  %v2586 = vld [vmem:[%s5 + $0x794] sm:$0xff]
  %v2587 = vld [vmem:[%s5 + $0x79c] sm:$0xff]
  %v2588 = vld [vmem:[%s5 + $0x7a4] sm:$0xf]
  %v2589 = vld [vmem:[%s5 + $0x7a8] sm:$0xff]
  %v2590 = vld [vmem:[%s5 + $0x7b0] sm:$0xff]
  %v2591 = vld [vmem:[%s5 + $0x7b8] sm:$0xff]
  %v2592 = vld [vmem:[%s5 + $0x7c0] sm:$0xf]
  %v2593 = vld [vmem:[%s5 + $0x7c4] sm:$0xff]
  %v2594 = vld [vmem:[%s5 + $0x7cc] sm:$0xff]
  %v2595 = vld [vmem:[%s5 + $0x7d4] sm:$0xff]
  %v2596 = vld [vmem:[%s5 + $0x7dc] sm:$0xf]
  %v2597 = vld [vmem:[%s5 + $0x7e0] sm:$0xff]
  %v2598 = vld [vmem:[%s5 + $0x7e8] sm:$0xff]
  %v2599 = vld [vmem:[%s5 + $0x7f0] sm:$0xff]
  %v2600 = vld [vmem:[%s5 + $0x7f8] sm:$0xf]
  %v2601 = vld [vmem:[%s5 + $0x7fc] sm:$0xff]
  %v2602 = vld [vmem:[%s5 + $0x804] sm:$0xff]
  %v2603 = vld [vmem:[%s5 + $0x80c] sm:$0xff]
  %v2604 = vld [vmem:[%s5 + $0x814] sm:$0xf]
  %v2605 = vld [vmem:[%s5 + $0x818] sm:$0xff]
  %v2606 = vld [vmem:[%s5 + $0x820] sm:$0xff]
  %v2607 = vld [vmem:[%s5 + $0x828] sm:$0xff]
  %v2608 = vld [vmem:[%s5 + $0x830] sm:$0xf]
  %v2609 = vld [vmem:[%s5 + $0x834] sm:$0xff]
  %v2610 = vld [vmem:[%s5 + $0x83c] sm:$0xff]
  %v2611 = vld [vmem:[%s5 + $0x844] sm:$0xff]
  %v2612 = vld [vmem:[%s5 + $0x84c] sm:$0xf]
  %v2613 = vld [vmem:[%s5 + $0x850] sm:$0xff]
  %v2614 = vld [vmem:[%s5 + $0x858] sm:$0xff]
  %v2615 = vld [vmem:[%s5 + $0x860] sm:$0xff]
  %v2616 = vld [vmem:[%s5 + $0x868] sm:$0xf]
  %v2617 = vld [vmem:[%s5 + $0x86c] sm:$0xff]
  %v2618 = vld [vmem:[%s5 + $0x874] sm:$0xff]
  %v2619 = vld [vmem:[%s5 + $0x87c] sm:$0xff]
  %v2620 = vld [vmem:[%s5 + $0x884] sm:$0xf]
  %v2621 = vld [vmem:[%s5 + $0x888] sm:$0xff]
  %v2622 = vld [vmem:[%s5 + $0x890] sm:$0xff]
  %v2623 = vld [vmem:[%s5 + $0x898] sm:$0xff]
  %v2624 = vld [vmem:[%s5 + $0x8a0] sm:$0xf]
  %v2625 = vld [vmem:[%s5 + $0x8a4] sm:$0xff]
  %v2626 = vld [vmem:[%s5 + $0x8ac] sm:$0xff]
  %v2627 = vld [vmem:[%s5 + $0x8b4] sm:$0xff]
  %v2628 = vld [vmem:[%s5 + $0x8bc] sm:$0xf]
  %v2629 = vld [vmem:[%s5 + $0x8c0] sm:$0xff]
  %v2630 = vld [vmem:[%s5 + $0x8c8] sm:$0xff]
  %v2631 = vld [vmem:[%s5 + $0x8d0] sm:$0xff]
  %v2632 = vld [vmem:[%s5 + $0x8d8] sm:$0xf]
  %v2633 = vld [vmem:[%s5 + $0x8dc] sm:$0xff]
  %v2634 = vld [vmem:[%s5 + $0x8e4] sm:$0xff]
  %v2635 = vld [vmem:[%s5 + $0x8ec] sm:$0xff]
  %v2636 = vld [vmem:[%s5 + $0x8f4] sm:$0xf]
  %v2637 = vld [vmem:[%s5 + $0x8f8] sm:$0xff]
  %v2638 = vld [vmem:[%s5 + $0x900] sm:$0xff]
  %v2639 = vld [vmem:[%s5 + $0x908] sm:$0xff]
  %v2640 = vld [vmem:[%s5 + $0x910] sm:$0xf]
  %v2641 = vld [vmem:[%s5 + $0x914] sm:$0xff]
  %v2642 = vld [vmem:[%s5 + $0x91c] sm:$0xff]
  %v2643 = vld [vmem:[%s5 + $0x924] sm:$0xff]
  %v2644 = vld [vmem:[%s5 + $0x92c] sm:$0xf]
  %v2645 = vld [vmem:[%s5 + $0x930] sm:$0xff]
  %v2646 = vld [vmem:[%s5 + $0x938] sm:$0xff]
  %v2647 = vld [vmem:[%s5 + $0x940] sm:$0xff]
  %v2648 = vld [vmem:[%s5 + $0x948] sm:$0xf]
  %v2649 = vld [vmem:[%s5 + $0x94c] sm:$0xff]
  %v2650 = vld [vmem:[%s5 + $0x954] sm:$0xff]
  %v2651 = vld [vmem:[%s5 + $0x95c] sm:$0xff]
  %v2652 = vld [vmem:[%s5 + $0x964] sm:$0xf]
  %v2653 = vld [vmem:[%s5 + $0x968] sm:$0xff]
  %v2654 = vld [vmem:[%s5 + $0x970] sm:$0xff]
  %v2655 = vld [vmem:[%s5 + $0x978] sm:$0xff]
  %v2656 = vld [vmem:[%s5 + $0x980] sm:$0xf]
  %v2657 = vld [vmem:[%s5 + $0x984] sm:$0xff]
  %v2658 = vld [vmem:[%s5 + $0x98c] sm:$0xff]
  %v2659 = vld [vmem:[%s5 + $0x994] sm:$0xff]
  %v2660 = vld [vmem:[%s5 + $0x99c] sm:$0xf]
  %v2661 = vld [vmem:[%s5 + $0x9a0] sm:$0xff]
  %v2662 = vld [vmem:[%s5 + $0x9a8] sm:$0xff]
  %v2663 = vld [vmem:[%s5 + $0x9b0] sm:$0xff]
  %v2664 = vld [vmem:[%s5 + $0x9b8] sm:$0xf]
  %v2665 = vld [vmem:[%s5 + $0x9bc] sm:$0xff]
  %v2666 = vld [vmem:[%s5 + $0x9c4] sm:$0xff]
  %v2667 = vld [vmem:[%s5 + $0x9cc] sm:$0xff]
  %v2668 = vld [vmem:[%s5 + $0x9d4] sm:$0xf]
  %v2669 = vld [vmem:[%s5 + $0x9d8] sm:$0xff]
  %v2670 = vld [vmem:[%s5 + $0x9e0] sm:$0xff]
  %v2671 = vld [vmem:[%s5 + $0x9e8] sm:$0xff]
  %v2672 = vld [vmem:[%s5 + $0x9f0] sm:$0xf]
  %v2673 = vld [vmem:[%s5 + $0x9f4] sm:$0xff]
  %v2674 = vld [vmem:[%s5 + $0x9fc] sm:$0xff]
  %v2675 = vld [vmem:[%s5 + $0xa04] sm:$0xff]
  %v2676 = vld [vmem:[%s5 + $0xa0c] sm:$0xf]
  %v2677 = vld [vmem:[%s5 + $0xa10] sm:$0xff]
  %v2678 = vld [vmem:[%s5 + $0xa18] sm:$0xff]
  %v2679 = vld [vmem:[%s5 + $0xa20] sm:$0xff]
  %v2680 = vld [vmem:[%s5 + $0xa28] sm:$0xf]
  %v2681 = vld [vmem:[%s5 + $0xa2c] sm:$0xff]
  %v2682 = vld [vmem:[%s5 + $0xa34] sm:$0xff]
  %v2683 = vld [vmem:[%s5 + $0xa3c] sm:$0xff]
  %v2684 = vld [vmem:[%s5 + $0xa44] sm:$0xf]
  %v2685 = vld [vmem:[%s5 + $0xa48] sm:$0xff]
  %v2686 = vld [vmem:[%s5 + $0xa50] sm:$0xff]
  %v2687 = vld [vmem:[%s5 + $0xa58] sm:$0xff]
  %v2688 = vld [vmem:[%s5 + $0xa60] sm:$0xf]
  %v2689 = vld [vmem:[%s5 + $0xa64] sm:$0xff]
  %v2690 = vld [vmem:[%s5 + $0xa6c] sm:$0xff]
  %v2691 = vld [vmem:[%s5 + $0xa74] sm:$0xff]
  %v2692 = vld [vmem:[%s5 + $0xa7c] sm:$0xf]
  %v2693 = vld [vmem:[%s5 + $0xa80] sm:$0xff]
  %v2694 = vld [vmem:[%s5 + $0xa88] sm:$0xff]
  %v2695 = vld [vmem:[%s5 + $0xa90] sm:$0xff]
  %v2696 = vld [vmem:[%s5 + $0xa98] sm:$0xf]
  %v2697 = vld [vmem:[%s5 + $0xa9c] sm:$0xff]
  %v2698 = vld [vmem:[%s5 + $0xaa4] sm:$0xff]
  %v2699 = vld [vmem:[%s5 + $0xaac] sm:$0xff]
  %v2700 = vld [vmem:[%s5 + $0xab4] sm:$0xf]
  %v2701 = vld [vmem:[%s5 + $0xab8] sm:$0xff]
  %v2702 = vld [vmem:[%s5 + $0xac0] sm:$0xff]
  %v2703 = vld [vmem:[%s5 + $0xac8] sm:$0xff]
  %v2704 = vld [vmem:[%s5 + $0xad0] sm:$0xf]
  %v2705 = vld [vmem:[%s5 + $0xad4] sm:$0xff]
  %v2706 = vld [vmem:[%s5 + $0xadc] sm:$0xff]
  %v2707 = vld [vmem:[%s5 + $0xae4] sm:$0xff]
  %v2708 = vld [vmem:[%s5 + $0xaec] sm:$0xf]
  %v2709 = vld [vmem:[%s5 + $0xaf0] sm:$0xff]
  %v2710 = vld [vmem:[%s5 + $0xaf8] sm:$0xff]
  %v2711 = vld [vmem:[%s5 + $0xb00] sm:$0xff]
  %v2712 = vld [vmem:[%s5 + $0xb08] sm:$0xf]
  %v2713 = vld [vmem:[%s5 + $0xb0c] sm:$0xff]
  %v2714 = vld [vmem:[%s5 + $0xb14] sm:$0xff]
  %v2715 = vld [vmem:[%s5 + $0xb1c] sm:$0xff]
  %v2716 = vld [vmem:[%s5 + $0xb24] sm:$0xf]
  %v2717 = vld [vmem:[%s5 + $0xb28] sm:$0xff]
  %v2718 = vld [vmem:[%s5 + $0xb30] sm:$0xff]
  %v2719 = vld [vmem:[%s5 + $0xb38] sm:$0xff]
  %v2720 = vld [vmem:[%s5 + $0xb40] sm:$0xf]
  %v2721 = vld [vmem:[%s5 + $0xb44] sm:$0xff]
  %v2722 = vld [vmem:[%s5 + $0xb4c] sm:$0xff]
  %v2723 = vld [vmem:[%s5 + $0xb54] sm:$0xff]
  %v2724 = vld [vmem:[%s5 + $0xb5c] sm:$0xf]
  %v2725 = vld [vmem:[%s5 + $0xb60] sm:$0xff]
  %v2726 = vld [vmem:[%s5 + $0xb68] sm:$0xff]
  %v2727 = vld [vmem:[%s5 + $0xb70] sm:$0xff]
  %v2728 = vld [vmem:[%s5 + $0xb78] sm:$0xf]
  %v2729 = vld [vmem:[%s5 + $0xb7c] sm:$0xff]
  %v2730 = vld [vmem:[%s5 + $0xb84] sm:$0xff]
  %v2731 = vld [vmem:[%s5 + $0xb8c] sm:$0xff]
  %v2732 = vld [vmem:[%s5 + $0xb94] sm:$0xf]
  %v2733 = vld [vmem:[%s5 + $0xb98] sm:$0xff]
  %v2734 = vld [vmem:[%s5 + $0xba0] sm:$0xff]
  %v2735 = vld [vmem:[%s5 + $0xba8] sm:$0xff]
  %v2736 = vld [vmem:[%s5 + $0xbb0] sm:$0xf]
  %v2737 = vld [vmem:[%s5 + $0xbb4] sm:$0xff]
  %v2738 = vld [vmem:[%s5 + $0xbbc] sm:$0xff]
  %v2739 = vld [vmem:[%s5 + $0xbc4] sm:$0xff]
  %v2740 = vld [vmem:[%s5 + $0xbcc] sm:$0xf]
  %v2741 = vld [vmem:[%s5 + $0xbd0] sm:$0xff]
  %v2742 = vld [vmem:[%s5 + $0xbd8] sm:$0xff]
  %v2743 = vld [vmem:[%s5 + $0xbe0] sm:$0xff]
  %v2744 = vld [vmem:[%s5 + $0xbe8] sm:$0xf]
  %v2745 = vld [vmem:[%s5 + $0xbec] sm:$0xff]
  %v2746 = vld [vmem:[%s5 + $0xbf4] sm:$0xff]
  %v2747 = vld [vmem:[%s5 + $0xbfc] sm:$0xff]
  %v2748 = vld [vmem:[%s5 + $0xc04] sm:$0xf]
  %v2749 = vld [vmem:[%s5 + $0xc08] sm:$0xff]
  %v2750 = vld [vmem:[%s5 + $0xc10] sm:$0xff]
  %v2751 = vld [vmem:[%s5 + $0xc18] sm:$0xff]
  %v2752 = vld [vmem:[%s5 + $0xc20] sm:$0xf]
  %v2753 = vld [vmem:[%s5 + $0xc24] sm:$0xff]
  %v2754 = vld [vmem:[%s5 + $0xc2c] sm:$0xff]
  %v2755 = vld [vmem:[%s5 + $0xc34] sm:$0xff]
  %v2756 = vld [vmem:[%s5 + $0xc3c] sm:$0xf]
  %v2757 = vld [vmem:[%s5 + $0xc40] sm:$0xff]
  %v2758 = vld [vmem:[%s5 + $0xc48] sm:$0xff]
  %v2759 = vld [vmem:[%s5 + $0xc50] sm:$0xff]
  %v2760 = vld [vmem:[%s5 + $0xc58] sm:$0xf]
  %v2761 = vld [vmem:[%s5 + $0xc5c] sm:$0xff]
  %v2762 = vld [vmem:[%s5 + $0xc64] sm:$0xff]
  %v2763 = vld [vmem:[%s5 + $0xc6c] sm:$0xff]
  %v2764 = vld [vmem:[%s5 + $0xc74] sm:$0xf]
  %v2765 = vld [vmem:[%s5 + $0xc78] sm:$0xff]
  %v2766 = vld [vmem:[%s5 + $0xc80] sm:$0xff]
  %v2767 = vld [vmem:[%s5 + $0xc88] sm:$0xff]
  %v2768 = vld [vmem:[%s5 + $0xc90] sm:$0xf]
  %v2769 = vld [vmem:[%s5 + $0xc94] sm:$0xff]
  %v2770 = vld [vmem:[%s5 + $0xc9c] sm:$0xff]
  %v2771 = vld [vmem:[%s5 + $0xca4] sm:$0xff]
  %v2772 = vld [vmem:[%s5 + $0xcac] sm:$0xf]
  %v2773 = vld [vmem:[%s5 + $0xcb0] sm:$0xff]
  %v2774 = vld [vmem:[%s5 + $0xcb8] sm:$0xff]
  %v2775 = vld [vmem:[%s5 + $0xcc0] sm:$0xff]
  %v2776 = vld [vmem:[%s5 + $0xcc8] sm:$0xf]
  %v2777 = vld [vmem:[%s5 + $0xccc] sm:$0xff]
  %v2778 = vld [vmem:[%s5 + $0xcd4] sm:$0xff]
  %v2779 = vld [vmem:[%s5 + $0xcdc] sm:$0xff]
  %v2780 = vld [vmem:[%s5 + $0xce4] sm:$0xf]
  %v2781 = vld [vmem:[%s5 + $0xce8] sm:$0xff]
  %v2782 = vld [vmem:[%s5 + $0xcf0] sm:$0xff]
  %v2783 = vld [vmem:[%s5 + $0xcf8] sm:$0xff]
  %v2784 = vld [vmem:[%s5 + $0xd00] sm:$0xf]
  %v2785 = vld [vmem:[%s5 + $0xd04] sm:$0xff]
  %v2786 = vld [vmem:[%s5 + $0xd0c] sm:$0xff]
  %v2787 = vld [vmem:[%s5 + $0xd14] sm:$0xff]
  %v2788 = vld [vmem:[%s5 + $0xd1c] sm:$0xf]
  %v2789 = vld [vmem:[%s5 + $0xd20] sm:$0xff]
  %v2790 = vld [vmem:[%s5 + $0xd28] sm:$0xff]
  %v2791 = vld [vmem:[%s5 + $0xd30] sm:$0xff]
  %v2792 = vld [vmem:[%s5 + $0xd38] sm:$0xf]
  %v2793 = vld [vmem:[%s5 + $0xd3c] sm:$0xff]
  %v2794 = vld [vmem:[%s5 + $0xd44] sm:$0xff]
  %v2795 = vld [vmem:[%s5 + $0xd4c] sm:$0xff]
  %v2796 = vld [vmem:[%s5 + $0xd54] sm:$0xf]
  %v2797 = vld [vmem:[%s5 + $0xd58] sm:$0xff]
  %v2798 = vld [vmem:[%s5 + $0xd60] sm:$0xff]
  %v2799 = vld [vmem:[%s5 + $0xd68] sm:$0xff]
  %v2800 = vld [vmem:[%s5 + $0xd70] sm:$0xf]
  %v2801 = vld [vmem:[%s5 + $0xd74] sm:$0xff]
  %v2802 = vld [vmem:[%s5 + $0xd7c] sm:$0xff]
  %v2803 = vld [vmem:[%s5 + $0xd84] sm:$0xff]
  %v2804 = vld [vmem:[%s5 + $0xd8c] sm:$0xf]
  %v2805 = vld [vmem:[%s5 + $0xd90] sm:$0xff]
  %v2806 = vld [vmem:[%s5 + $0xd98] sm:$0xff]
  %v2807 = vld [vmem:[%s5 + $0xda0] sm:$0xff]
  %v2808 = vld [vmem:[%s5 + $0xda8] sm:$0xf]
  %v2809 = vld [vmem:[%s5 + $0xdac] sm:$0xff]
  %v2810 = vld [vmem:[%s5 + $0xdb4] sm:$0xff]
  %v2811 = vld [vmem:[%s5 + $0xdbc] sm:$0xff]
  %v2812 = vld [vmem:[%s5 + $0xdc4] sm:$0xf]
  %v2813 = vld [vmem:[%s5 + $0xdc8] sm:$0xff]
  %v2814 = vld [vmem:[%s5 + $0xdd0] sm:$0xff]
  %v2815 = vld [vmem:[%s5 + $0xdd8] sm:$0xff]
  %v2816 = vld [vmem:[%s5 + $0xde0] sm:$0xf]
  %v2817 = vld [vmem:[%s5 + $0xde4] sm:$0xff]
  %v2818 = vld [vmem:[%s5 + $0xdec] sm:$0xff]
  %v2819 = vld [vmem:[%s5 + $0xdf4] sm:$0xff]
  %v2820 = vld [vmem:[%s5 + $0xdfc] sm:$0xf]
  %v2821 = vld [vmem:[%s6] sm:$0x7f]
  %v2823 = vlaneseq
  %v2824 = vshrl.u32 %v2823, 7
  %v2825 = vsub.s32 0, %v2824
  %v2826 = vrot.slane %v2821, %v2825
  %v2827 = vlaneseq
  %v2828 = vshrl.u32 %v2827, 7
  %v2829 = vsub.s32 1, %v2828
  %v2830 = vrot.slane %v2821, %v2829
  %v2831 = vlaneseq
  %v2832 = vshrl.u32 %v2831, 7
  %v2833 = vsub.s32 2, %v2832
  %v2834 = vrot.slane %v2821, %v2833
  %v2835 = vlaneseq
  %v2836 = vshrl.u32 %v2835, 7
  %v2837 = vsub.s32 3, %v2836
  %v2838 = vrot.slane %v2821, %v2837
  %v2839 = vlaneseq
  %v2840 = vshrl.u32 %v2839, 7
  %v2841 = vsub.s32 4, %v2840
  %v2842 = vrot.slane %v2821, %v2841
  %v2843 = vlaneseq
  %v2844 = vshrl.u32 %v2843, 7
  %v2845 = vsub.s32 5, %v2844
  %v2846 = vrot.slane %v2821, %v2845
  %v2847 = vlaneseq
  %v2848 = vshrl.u32 %v2847, 7
  %v2849 = vsub.s32 6, %v2848
  %v2850 = vrot.slane %v2821, %v2849
  %v3370 = vunpack.c.l.b16 %v2309
  %v3371 = vunpack.c.h.b16 %v2309
  %v3372 = vunpack.c.l.b16 %v2310
  %v3373 = vunpack.c.h.b16 %v2310
  %v3374 = vunpack.c.l.b16 %v2311
  %v3375 = vunpack.c.h.b16 %v2311
  %v3376 = vunpack.c.l.b16 %v2312
  %v3377 = vunpack.c.l.b16 %v2313
  %v3378 = vunpack.c.h.b16 %v2313
  %v3379 = vunpack.c.l.b16 %v2314
  %v3380 = vunpack.c.h.b16 %v2314
  %v3381 = vunpack.c.l.b16 %v2315
  %v3382 = vunpack.c.h.b16 %v2315
  %v3383 = vunpack.c.l.b16 %v2316
  %v3384 = vunpack.c.l.b16 %v2317
  %v3385 = vunpack.c.h.b16 %v2317
  %v3386 = vunpack.c.l.b16 %v2318
  %v3387 = vunpack.c.h.b16 %v2318
  %v3388 = vunpack.c.l.b16 %v2319
  %v3389 = vunpack.c.h.b16 %v2319
  %v3390 = vunpack.c.l.b16 %v2320
  %v3391 = vunpack.c.l.b16 %v2321
  %v3392 = vunpack.c.h.b16 %v2321
  %v3393 = vunpack.c.l.b16 %v2322
  %v3394 = vunpack.c.h.b16 %v2322
  %v3395 = vunpack.c.l.b16 %v2323
  %v3396 = vunpack.c.h.b16 %v2323
  %v3397 = vunpack.c.l.b16 %v2324
  %v3398 = vunpack.c.l.b16 %v2325
  %v3399 = vunpack.c.h.b16 %v2325
  %v3400 = vunpack.c.l.b16 %v2326
  %v3401 = vunpack.c.h.b16 %v2326
  %v3402 = vunpack.c.l.b16 %v2327
  %v3403 = vunpack.c.h.b16 %v2327
  %v3404 = vunpack.c.l.b16 %v2328
  %v3405 = vunpack.c.l.b16 %v2329
  %v3406 = vunpack.c.h.b16 %v2329
  %v3407 = vunpack.c.l.b16 %v2330
  %v3408 = vunpack.c.h.b16 %v2330
  %v3409 = vunpack.c.l.b16 %v2331
  %v3410 = vunpack.c.h.b16 %v2331
  %v3411 = vunpack.c.l.b16 %v2332
  %v3412 = vunpack.c.l.b16 %v2333
  %v3413 = vunpack.c.h.b16 %v2333
  %v3414 = vunpack.c.l.b16 %v2334
  %v3415 = vunpack.c.h.b16 %v2334
  %v3416 = vunpack.c.l.b16 %v2335
  %v3417 = vunpack.c.h.b16 %v2335
  %v3418 = vunpack.c.l.b16 %v2336
  %v3419 = vunpack.c.l.b16 %v2337
  %v3420 = vunpack.c.h.b16 %v2337
  %v3421 = vunpack.c.l.b16 %v2338
  %v3422 = vunpack.c.h.b16 %v2338
  %v3423 = vunpack.c.l.b16 %v2339
  %v3424 = vunpack.c.h.b16 %v2339
  %v3425 = vunpack.c.l.b16 %v2340
  %v3426 = vunpack.c.l.b16 %v2341
  %v3427 = vunpack.c.h.b16 %v2341
  %v3428 = vunpack.c.l.b16 %v2342
  %v3429 = vunpack.c.h.b16 %v2342
  %v3430 = vunpack.c.l.b16 %v2343
  %v3431 = vunpack.c.h.b16 %v2343
  %v3432 = vunpack.c.l.b16 %v2344
  %v3433 = vunpack.c.l.b16 %v2345
  %v3434 = vunpack.c.h.b16 %v2345
  %v3435 = vunpack.c.l.b16 %v2346
  %v3436 = vunpack.c.h.b16 %v2346
  %v3437 = vunpack.c.l.b16 %v2347
  %v3438 = vunpack.c.h.b16 %v2347
  %v3439 = vunpack.c.l.b16 %v2348
  %v3440 = vunpack.c.l.b16 %v2349
  %v3441 = vunpack.c.h.b16 %v2349
  %v3442 = vunpack.c.l.b16 %v2350
  %v3443 = vunpack.c.h.b16 %v2350
  %v3444 = vunpack.c.l.b16 %v2351
  %v3445 = vunpack.c.h.b16 %v2351
  %v3446 = vunpack.c.l.b16 %v2352
  %v3447 = vunpack.c.l.b16 %v2353
  %v3448 = vunpack.c.h.b16 %v2353
  %v3449 = vunpack.c.l.b16 %v2354
  %v3450 = vunpack.c.h.b16 %v2354
  %v3451 = vunpack.c.l.b16 %v2355
  %v3452 = vunpack.c.h.b16 %v2355
  %v3453 = vunpack.c.l.b16 %v2356
  %v3454 = vunpack.c.l.b16 %v2357
  %v3455 = vunpack.c.h.b16 %v2357
  %v3456 = vunpack.c.l.b16 %v2358
  %v3457 = vunpack.c.h.b16 %v2358
  %v3458 = vunpack.c.l.b16 %v2359
  %v3459 = vunpack.c.h.b16 %v2359
  %v3460 = vunpack.c.l.b16 %v2360
  %v3461 = vunpack.c.l.b16 %v2361
  %v3462 = vunpack.c.h.b16 %v2361
  %v3463 = vunpack.c.l.b16 %v2362
  %v3464 = vunpack.c.h.b16 %v2362
  %v3465 = vunpack.c.l.b16 %v2363
  %v3466 = vunpack.c.h.b16 %v2363
  %v3467 = vunpack.c.l.b16 %v2364
  %v3468 = vunpack.c.l.b16 %v2365
  %v3469 = vunpack.c.h.b16 %v2365
  %v3470 = vunpack.c.l.b16 %v2366
  %v3471 = vunpack.c.h.b16 %v2366
  %v3472 = vunpack.c.l.b16 %v2367
  %v3473 = vunpack.c.h.b16 %v2367
  %v3474 = vunpack.c.l.b16 %v2368
  %v3475 = vunpack.c.l.b16 %v2369
  %v3476 = vunpack.c.h.b16 %v2369
  %v3477 = vunpack.c.l.b16 %v2370
  %v3478 = vunpack.c.h.b16 %v2370
  %v3479 = vunpack.c.l.b16 %v2371
  %v3480 = vunpack.c.h.b16 %v2371
  %v3481 = vunpack.c.l.b16 %v2372
  %v3482 = vunpack.c.l.b16 %v2373
  %v3483 = vunpack.c.h.b16 %v2373
  %v3484 = vunpack.c.l.b16 %v2374
  %v3485 = vunpack.c.h.b16 %v2374
  %v3486 = vunpack.c.l.b16 %v2375
  %v3487 = vunpack.c.h.b16 %v2375
  %v3488 = vunpack.c.l.b16 %v2376
  %v3489 = vunpack.c.l.b16 %v2377
  %v3490 = vunpack.c.h.b16 %v2377
  %v3491 = vunpack.c.l.b16 %v2378
  %v3492 = vunpack.c.h.b16 %v2378
  %v3493 = vunpack.c.l.b16 %v2379
  %v3494 = vunpack.c.h.b16 %v2379
  %v3495 = vunpack.c.l.b16 %v2380
  %v3496 = vunpack.c.l.b16 %v2381
  %v3497 = vunpack.c.h.b16 %v2381
  %v3498 = vunpack.c.l.b16 %v2382
  %v3499 = vunpack.c.h.b16 %v2382
  %v3500 = vunpack.c.l.b16 %v2383
  %v3501 = vunpack.c.h.b16 %v2383
  %v3502 = vunpack.c.l.b16 %v2384
  %v3503 = vunpack.c.l.b16 %v2385
  %v3504 = vunpack.c.h.b16 %v2385
  %v3505 = vunpack.c.l.b16 %v2386
  %v3506 = vunpack.c.h.b16 %v2386
  %v3507 = vunpack.c.l.b16 %v2387
  %v3508 = vunpack.c.h.b16 %v2387
  %v3509 = vunpack.c.l.b16 %v2388
  %v3510 = vunpack.c.l.b16 %v2389
  %v3511 = vunpack.c.h.b16 %v2389
  %v3512 = vunpack.c.l.b16 %v2390
  %v3513 = vunpack.c.h.b16 %v2390
  %v3514 = vunpack.c.l.b16 %v2391
  %v3515 = vunpack.c.h.b16 %v2391
  %v3516 = vunpack.c.l.b16 %v2392
  %v3517 = vunpack.c.l.b16 %v2393
  %v3518 = vunpack.c.h.b16 %v2393
  %v3519 = vunpack.c.l.b16 %v2394
  %v3520 = vunpack.c.h.b16 %v2394
  %v3521 = vunpack.c.l.b16 %v2395
  %v3522 = vunpack.c.h.b16 %v2395
  %v3523 = vunpack.c.l.b16 %v2396
  %v3524 = vunpack.c.l.b16 %v2397
  %v3525 = vunpack.c.h.b16 %v2397
  %v3526 = vunpack.c.l.b16 %v2398
  %v3527 = vunpack.c.h.b16 %v2398
  %v3528 = vunpack.c.l.b16 %v2399
  %v3529 = vunpack.c.h.b16 %v2399
  %v3530 = vunpack.c.l.b16 %v2400
  %v3531 = vunpack.c.l.b16 %v2401
  %v3532 = vunpack.c.h.b16 %v2401
  %v3533 = vunpack.c.l.b16 %v2402
  %v3534 = vunpack.c.h.b16 %v2402
  %v3535 = vunpack.c.l.b16 %v2403
  %v3536 = vunpack.c.h.b16 %v2403
  %v3537 = vunpack.c.l.b16 %v2404
  %v3538 = vunpack.c.l.b16 %v2405
  %v3539 = vunpack.c.h.b16 %v2405
  %v3540 = vunpack.c.l.b16 %v2406
  %v3541 = vunpack.c.h.b16 %v2406
  %v3542 = vunpack.c.l.b16 %v2407
  %v3543 = vunpack.c.h.b16 %v2407
  %v3544 = vunpack.c.l.b16 %v2408
  %v3545 = vunpack.c.l.b16 %v2409
  %v3546 = vunpack.c.h.b16 %v2409
  %v3547 = vunpack.c.l.b16 %v2410
  %v3548 = vunpack.c.h.b16 %v2410
  %v3549 = vunpack.c.l.b16 %v2411
  %v3550 = vunpack.c.h.b16 %v2411
  %v3551 = vunpack.c.l.b16 %v2412
  %v3552 = vunpack.c.l.b16 %v2413
  %v3553 = vunpack.c.h.b16 %v2413
  %v3554 = vunpack.c.l.b16 %v2414
  %v3555 = vunpack.c.h.b16 %v2414
  %v3556 = vunpack.c.l.b16 %v2415
  %v3557 = vunpack.c.h.b16 %v2415
  %v3558 = vunpack.c.l.b16 %v2416
  %v3559 = vunpack.c.l.b16 %v2417
  %v3560 = vunpack.c.h.b16 %v2417
  %v3561 = vunpack.c.l.b16 %v2418
  %v3562 = vunpack.c.h.b16 %v2418
  %v3563 = vunpack.c.l.b16 %v2419
  %v3564 = vunpack.c.h.b16 %v2419
  %v3565 = vunpack.c.l.b16 %v2420
  %v3566 = vunpack.c.l.b16 %v2421
  %v3567 = vunpack.c.h.b16 %v2421
  %v3568 = vunpack.c.l.b16 %v2422
  %v3569 = vunpack.c.h.b16 %v2422
  %v3570 = vunpack.c.l.b16 %v2423
  %v3571 = vunpack.c.h.b16 %v2423
  %v3572 = vunpack.c.l.b16 %v2424
  %v3573 = vunpack.c.l.b16 %v2425
  %v3574 = vunpack.c.h.b16 %v2425
  %v3575 = vunpack.c.l.b16 %v2426
  %v3576 = vunpack.c.h.b16 %v2426
  %v3577 = vunpack.c.l.b16 %v2427
  %v3578 = vunpack.c.h.b16 %v2427
  %v3579 = vunpack.c.l.b16 %v2428
  %v3580 = vunpack.c.l.b16 %v2429
  %v3581 = vunpack.c.h.b16 %v2429
  %v3582 = vunpack.c.l.b16 %v2430
  %v3583 = vunpack.c.h.b16 %v2430
  %v3584 = vunpack.c.l.b16 %v2431
  %v3585 = vunpack.c.h.b16 %v2431
  %v3586 = vunpack.c.l.b16 %v2432
  %v3587 = vunpack.c.l.b16 %v2433
  %v3588 = vunpack.c.h.b16 %v2433
  %v3589 = vunpack.c.l.b16 %v2434
  %v3590 = vunpack.c.h.b16 %v2434
  %v3591 = vunpack.c.l.b16 %v2435
  %v3592 = vunpack.c.h.b16 %v2435
  %v3593 = vunpack.c.l.b16 %v2436
  %v3594 = vunpack.c.l.b16 %v2437
  %v3595 = vunpack.c.h.b16 %v2437
  %v3596 = vunpack.c.l.b16 %v2438
  %v3597 = vunpack.c.h.b16 %v2438
  %v3598 = vunpack.c.l.b16 %v2439
  %v3599 = vunpack.c.h.b16 %v2439
  %v3600 = vunpack.c.l.b16 %v2440
  %v3601 = vunpack.c.l.b16 %v2441
  %v3602 = vunpack.c.h.b16 %v2441
  %v3603 = vunpack.c.l.b16 %v2442
  %v3604 = vunpack.c.h.b16 %v2442
  %v3605 = vunpack.c.l.b16 %v2443
  %v3606 = vunpack.c.h.b16 %v2443
  %v3607 = vunpack.c.l.b16 %v2444
  %v3608 = vunpack.c.l.b16 %v2445
  %v3609 = vunpack.c.h.b16 %v2445
  %v3610 = vunpack.c.l.b16 %v2446
  %v3611 = vunpack.c.h.b16 %v2446
  %v3612 = vunpack.c.l.b16 %v2447
  %v3613 = vunpack.c.h.b16 %v2447
  %v3614 = vunpack.c.l.b16 %v2448
  %v3615 = vunpack.c.l.b16 %v2449
  %v3616 = vunpack.c.h.b16 %v2449
  %v3617 = vunpack.c.l.b16 %v2450
  %v3618 = vunpack.c.h.b16 %v2450
  %v3619 = vunpack.c.l.b16 %v2451
  %v3620 = vunpack.c.h.b16 %v2451
  %v3621 = vunpack.c.l.b16 %v2452
  %v3622 = vunpack.c.l.b16 %v2453
  %v3623 = vunpack.c.h.b16 %v2453
  %v3624 = vunpack.c.l.b16 %v2454
  %v3625 = vunpack.c.h.b16 %v2454
  %v3626 = vunpack.c.l.b16 %v2455
  %v3627 = vunpack.c.h.b16 %v2455
  %v3628 = vunpack.c.l.b16 %v2456
  %v3629 = vunpack.c.l.b16 %v2457
  %v3630 = vunpack.c.h.b16 %v2457
  %v3631 = vunpack.c.l.b16 %v2458
  %v3632 = vunpack.c.h.b16 %v2458
  %v3633 = vunpack.c.l.b16 %v2459
  %v3634 = vunpack.c.h.b16 %v2459
  %v3635 = vunpack.c.l.b16 %v2460
  %v3636 = vunpack.c.l.b16 %v2461
  %v3637 = vunpack.c.h.b16 %v2461
  %v3638 = vunpack.c.l.b16 %v2462
  %v3639 = vunpack.c.h.b16 %v2462
  %v3640 = vunpack.c.l.b16 %v2463
  %v3641 = vunpack.c.h.b16 %v2463
  %v3642 = vunpack.c.l.b16 %v2464
  %v3643 = vunpack.c.l.b16 %v2465
  %v3644 = vunpack.c.h.b16 %v2465
  %v3645 = vunpack.c.l.b16 %v2466
  %v3646 = vunpack.c.h.b16 %v2466
  %v3647 = vunpack.c.l.b16 %v2467
  %v3648 = vunpack.c.h.b16 %v2467
  %v3649 = vunpack.c.l.b16 %v2468
  %v3650 = vunpack.c.l.b16 %v2469
  %v3651 = vunpack.c.h.b16 %v2469
  %v3652 = vunpack.c.l.b16 %v2470
  %v3653 = vunpack.c.h.b16 %v2470
  %v3654 = vunpack.c.l.b16 %v2471
  %v3655 = vunpack.c.h.b16 %v2471
  %v3656 = vunpack.c.l.b16 %v2472
  %v3657 = vunpack.c.l.b16 %v2473
  %v3658 = vunpack.c.h.b16 %v2473
  %v3659 = vunpack.c.l.b16 %v2474
  %v3660 = vunpack.c.h.b16 %v2474
  %v3661 = vunpack.c.l.b16 %v2475
  %v3662 = vunpack.c.h.b16 %v2475
  %v3663 = vunpack.c.l.b16 %v2476
  %v3664 = vunpack.c.l.b16 %v2477
  %v3665 = vunpack.c.h.b16 %v2477
  %v3666 = vunpack.c.l.b16 %v2478
  %v3667 = vunpack.c.h.b16 %v2478
  %v3668 = vunpack.c.l.b16 %v2479
  %v3669 = vunpack.c.h.b16 %v2479
  %v3670 = vunpack.c.l.b16 %v2480
  %v3671 = vunpack.c.l.b16 %v2481
  %v3672 = vunpack.c.h.b16 %v2481
  %v3673 = vunpack.c.l.b16 %v2482
  %v3674 = vunpack.c.h.b16 %v2482
  %v3675 = vunpack.c.l.b16 %v2483
  %v3676 = vunpack.c.h.b16 %v2483
  %v3677 = vunpack.c.l.b16 %v2484
  %v3678 = vunpack.c.l.b16 %v2485
  %v3679 = vunpack.c.h.b16 %v2485
  %v3680 = vunpack.c.l.b16 %v2486
  %v3681 = vunpack.c.h.b16 %v2486
  %v3682 = vunpack.c.l.b16 %v2487
  %v3683 = vunpack.c.h.b16 %v2487
  %v3684 = vunpack.c.l.b16 %v2488
  %v3685 = vunpack.c.l.b16 %v2489
  %v3686 = vunpack.c.h.b16 %v2489
  %v3687 = vunpack.c.l.b16 %v2490
  %v3688 = vunpack.c.h.b16 %v2490
  %v3689 = vunpack.c.l.b16 %v2491
  %v3690 = vunpack.c.h.b16 %v2491
  %v3691 = vunpack.c.l.b16 %v2492
  %v3692 = vunpack.c.l.b16 %v2493
  %v3693 = vunpack.c.h.b16 %v2493
  %v3694 = vunpack.c.l.b16 %v2494
  %v3695 = vunpack.c.h.b16 %v2494
  %v3696 = vunpack.c.l.b16 %v2495
  %v3697 = vunpack.c.h.b16 %v2495
  %v3698 = vunpack.c.l.b16 %v2496
  %v3699 = vunpack.c.l.b16 %v2497
  %v3700 = vunpack.c.h.b16 %v2497
  %v3701 = vunpack.c.l.b16 %v2498
  %v3702 = vunpack.c.h.b16 %v2498
  %v3703 = vunpack.c.l.b16 %v2499
  %v3704 = vunpack.c.h.b16 %v2499
  %v3705 = vunpack.c.l.b16 %v2500
  %v3706 = vunpack.c.l.b16 %v2501
  %v3707 = vunpack.c.h.b16 %v2501
  %v3708 = vunpack.c.l.b16 %v2502
  %v3709 = vunpack.c.h.b16 %v2502
  %v3710 = vunpack.c.l.b16 %v2503
  %v3711 = vunpack.c.h.b16 %v2503
  %v3712 = vunpack.c.l.b16 %v2504
  %v3713 = vunpack.c.l.b16 %v2505
  %v3714 = vunpack.c.h.b16 %v2505
  %v3715 = vunpack.c.l.b16 %v2506
  %v3716 = vunpack.c.h.b16 %v2506
  %v3717 = vunpack.c.l.b16 %v2507
  %v3718 = vunpack.c.h.b16 %v2507
  %v3719 = vunpack.c.l.b16 %v2508
  %v3720 = vunpack.c.l.b16 %v2509
  %v3721 = vunpack.c.h.b16 %v2509
  %v3722 = vunpack.c.l.b16 %v2510
  %v3723 = vunpack.c.h.b16 %v2510
  %v3724 = vunpack.c.l.b16 %v2511
  %v3725 = vunpack.c.h.b16 %v2511
  %v3726 = vunpack.c.l.b16 %v2512
  %v3727 = vunpack.c.l.b16 %v2513
  %v3728 = vunpack.c.h.b16 %v2513
  %v3729 = vunpack.c.l.b16 %v2514
  %v3730 = vunpack.c.h.b16 %v2514
  %v3731 = vunpack.c.l.b16 %v2515
  %v3732 = vunpack.c.h.b16 %v2515
  %v3733 = vunpack.c.l.b16 %v2516
  %v3734 = vunpack.c.l.b16 %v2517
  %v3735 = vunpack.c.h.b16 %v2517
  %v3736 = vunpack.c.l.b16 %v2518
  %v3737 = vunpack.c.h.b16 %v2518
  %v3738 = vunpack.c.l.b16 %v2519
  %v3739 = vunpack.c.h.b16 %v2519
  %v3740 = vunpack.c.l.b16 %v2520
  %v3741 = vunpack.c.l.b16 %v2521
  %v3742 = vunpack.c.h.b16 %v2521
  %v3743 = vunpack.c.l.b16 %v2522
  %v3744 = vunpack.c.h.b16 %v2522
  %v3745 = vunpack.c.l.b16 %v2523
  %v3746 = vunpack.c.h.b16 %v2523
  %v3747 = vunpack.c.l.b16 %v2524
  %v3748 = vunpack.c.l.b16 %v2525
  %v3749 = vunpack.c.h.b16 %v2525
  %v3750 = vunpack.c.l.b16 %v2526
  %v3751 = vunpack.c.h.b16 %v2526
  %v3752 = vunpack.c.l.b16 %v2527
  %v3753 = vunpack.c.h.b16 %v2527
  %v3754 = vunpack.c.l.b16 %v2528
  %v3755 = vunpack.c.l.b16 %v2529
  %v3756 = vunpack.c.h.b16 %v2529
  %v3757 = vunpack.c.l.b16 %v2530
  %v3758 = vunpack.c.h.b16 %v2530
  %v3759 = vunpack.c.l.b16 %v2531
  %v3760 = vunpack.c.h.b16 %v2531
  %v3761 = vunpack.c.l.b16 %v2532
  %v3762 = vunpack.c.l.b16 %v2533
  %v3763 = vunpack.c.h.b16 %v2533
  %v3764 = vunpack.c.l.b16 %v2534
  %v3765 = vunpack.c.h.b16 %v2534
  %v3766 = vunpack.c.l.b16 %v2535
  %v3767 = vunpack.c.h.b16 %v2535
  %v3768 = vunpack.c.l.b16 %v2536
  %v3769 = vunpack.c.l.b16 %v2537
  %v3770 = vunpack.c.h.b16 %v2537
  %v3771 = vunpack.c.l.b16 %v2538
  %v3772 = vunpack.c.h.b16 %v2538
  %v3773 = vunpack.c.l.b16 %v2539
  %v3774 = vunpack.c.h.b16 %v2539
  %v3775 = vunpack.c.l.b16 %v2540
  %v3776 = vunpack.c.l.b16 %v2541
  %v3777 = vunpack.c.h.b16 %v2541
  %v3778 = vunpack.c.l.b16 %v2542
  %v3779 = vunpack.c.h.b16 %v2542
  %v3780 = vunpack.c.l.b16 %v2543
  %v3781 = vunpack.c.h.b16 %v2543
  %v3782 = vunpack.c.l.b16 %v2544
  %v3783 = vunpack.c.l.b16 %v2545
  %v3784 = vunpack.c.h.b16 %v2545
  %v3785 = vunpack.c.l.b16 %v2546
  %v3786 = vunpack.c.h.b16 %v2546
  %v3787 = vunpack.c.l.b16 %v2547
  %v3788 = vunpack.c.h.b16 %v2547
  %v3789 = vunpack.c.l.b16 %v2548
  %v3790 = vunpack.c.l.b16 %v2549
  %v3791 = vunpack.c.h.b16 %v2549
  %v3792 = vunpack.c.l.b16 %v2550
  %v3793 = vunpack.c.h.b16 %v2550
  %v3794 = vunpack.c.l.b16 %v2551
  %v3795 = vunpack.c.h.b16 %v2551
  %v3796 = vunpack.c.l.b16 %v2552
  %v3797 = vunpack.c.l.b16 %v2553
  %v3798 = vunpack.c.h.b16 %v2553
  %v3799 = vunpack.c.l.b16 %v2554
  %v3800 = vunpack.c.h.b16 %v2554
  %v3801 = vunpack.c.l.b16 %v2555
  %v3802 = vunpack.c.h.b16 %v2555
  %v3803 = vunpack.c.l.b16 %v2556
  %v3804 = vunpack.c.l.b16 %v2557
  %v3805 = vunpack.c.h.b16 %v2557
  %v3806 = vunpack.c.l.b16 %v2558
  %v3807 = vunpack.c.h.b16 %v2558
  %v3808 = vunpack.c.l.b16 %v2559
  %v3809 = vunpack.c.h.b16 %v2559
  %v3810 = vunpack.c.l.b16 %v2560
  %v3811 = vunpack.c.l.b16 %v2561
  %v3812 = vunpack.c.h.b16 %v2561
  %v3813 = vunpack.c.l.b16 %v2562
  %v3814 = vunpack.c.h.b16 %v2562
  %v3815 = vunpack.c.l.b16 %v2563
  %v3816 = vunpack.c.h.b16 %v2563
  %v3817 = vunpack.c.l.b16 %v2564
  %v3818 = vunpack.c.l.b16 %v2565
  %v3819 = vunpack.c.h.b16 %v2565
  %v3820 = vunpack.c.l.b16 %v2566
  %v3821 = vunpack.c.h.b16 %v2566
  %v3822 = vunpack.c.l.b16 %v2567
  %v3823 = vunpack.c.h.b16 %v2567
  %v3824 = vunpack.c.l.b16 %v2568
  %v3825 = vunpack.c.l.b16 %v2569
  %v3826 = vunpack.c.h.b16 %v2569
  %v3827 = vunpack.c.l.b16 %v2570
  %v3828 = vunpack.c.h.b16 %v2570
  %v3829 = vunpack.c.l.b16 %v2571
  %v3830 = vunpack.c.h.b16 %v2571
  %v3831 = vunpack.c.l.b16 %v2572
  %v3832 = vunpack.c.l.b16 %v2573
  %v3833 = vunpack.c.h.b16 %v2573
  %v3834 = vunpack.c.l.b16 %v2574
  %v3835 = vunpack.c.h.b16 %v2574
  %v3836 = vunpack.c.l.b16 %v2575
  %v3837 = vunpack.c.h.b16 %v2575
  %v3838 = vunpack.c.l.b16 %v2576
  %v3839 = vunpack.c.l.b16 %v2577
  %v3840 = vunpack.c.h.b16 %v2577
  %v3841 = vunpack.c.l.b16 %v2578
  %v3842 = vunpack.c.h.b16 %v2578
  %v3843 = vunpack.c.l.b16 %v2579
  %v3844 = vunpack.c.h.b16 %v2579
  %v3845 = vunpack.c.l.b16 %v2580
  %v3846 = vunpack.c.l.b16 %v2581
  %v3847 = vunpack.c.h.b16 %v2581
  %v3848 = vunpack.c.l.b16 %v2582
  %v3849 = vunpack.c.h.b16 %v2582
  %v3850 = vunpack.c.l.b16 %v2583
  %v3851 = vunpack.c.h.b16 %v2583
  %v3852 = vunpack.c.l.b16 %v2584
  %v3853 = vunpack.c.l.b16 %v2585
  %v3854 = vunpack.c.h.b16 %v2585
  %v3855 = vunpack.c.l.b16 %v2586
  %v3856 = vunpack.c.h.b16 %v2586
  %v3857 = vunpack.c.l.b16 %v2587
  %v3858 = vunpack.c.h.b16 %v2587
  %v3859 = vunpack.c.l.b16 %v2588
  %v3860 = vunpack.c.l.b16 %v2589
  %v3861 = vunpack.c.h.b16 %v2589
  %v3862 = vunpack.c.l.b16 %v2590
  %v3863 = vunpack.c.h.b16 %v2590
  %v3864 = vunpack.c.l.b16 %v2591
  %v3865 = vunpack.c.h.b16 %v2591
  %v3866 = vunpack.c.l.b16 %v2592
  %v3867 = vunpack.c.l.b16 %v2593
  %v3868 = vunpack.c.h.b16 %v2593
  %v3869 = vunpack.c.l.b16 %v2594
  %v3870 = vunpack.c.h.b16 %v2594
  %v3871 = vunpack.c.l.b16 %v2595
  %v3872 = vunpack.c.h.b16 %v2595
  %v3873 = vunpack.c.l.b16 %v2596
  %v3874 = vunpack.c.l.b16 %v2597
  %v3875 = vunpack.c.h.b16 %v2597
  %v3876 = vunpack.c.l.b16 %v2598
  %v3877 = vunpack.c.h.b16 %v2598
  %v3878 = vunpack.c.l.b16 %v2599
  %v3879 = vunpack.c.h.b16 %v2599
  %v3880 = vunpack.c.l.b16 %v2600
  %v3881 = vunpack.c.l.b16 %v2601
  %v3882 = vunpack.c.h.b16 %v2601
  %v3883 = vunpack.c.l.b16 %v2602
  %v3884 = vunpack.c.h.b16 %v2602
  %v3885 = vunpack.c.l.b16 %v2603
  %v3886 = vunpack.c.h.b16 %v2603
  %v3887 = vunpack.c.l.b16 %v2604
  %v3888 = vunpack.c.l.b16 %v2605
  %v3889 = vunpack.c.h.b16 %v2605
  %v3890 = vunpack.c.l.b16 %v2606
  %v3891 = vunpack.c.h.b16 %v2606
  %v3892 = vunpack.c.l.b16 %v2607
  %v3893 = vunpack.c.h.b16 %v2607
  %v3894 = vunpack.c.l.b16 %v2608
  %v3895 = vunpack.c.l.b16 %v2609
  %v3896 = vunpack.c.h.b16 %v2609
  %v3897 = vunpack.c.l.b16 %v2610
  %v3898 = vunpack.c.h.b16 %v2610
  %v3899 = vunpack.c.l.b16 %v2611
  %v3900 = vunpack.c.h.b16 %v2611
  %v3901 = vunpack.c.l.b16 %v2612
  %v3902 = vunpack.c.l.b16 %v2613
  %v3903 = vunpack.c.h.b16 %v2613
  %v3904 = vunpack.c.l.b16 %v2614
  %v3905 = vunpack.c.h.b16 %v2614
  %v3906 = vunpack.c.l.b16 %v2615
  %v3907 = vunpack.c.h.b16 %v2615
  %v3908 = vunpack.c.l.b16 %v2616
  %v3909 = vunpack.c.l.b16 %v2617
  %v3910 = vunpack.c.h.b16 %v2617
  %v3911 = vunpack.c.l.b16 %v2618
  %v3912 = vunpack.c.h.b16 %v2618
  %v3913 = vunpack.c.l.b16 %v2619
  %v3914 = vunpack.c.h.b16 %v2619
  %v3915 = vunpack.c.l.b16 %v2620
  %v3916 = vunpack.c.l.b16 %v2621
  %v3917 = vunpack.c.h.b16 %v2621
  %v3918 = vunpack.c.l.b16 %v2622
  %v3919 = vunpack.c.h.b16 %v2622
  %v3920 = vunpack.c.l.b16 %v2623
  %v3921 = vunpack.c.h.b16 %v2623
  %v3922 = vunpack.c.l.b16 %v2624
  %v3923 = vunpack.c.l.b16 %v2625
  %v3924 = vunpack.c.h.b16 %v2625
  %v3925 = vunpack.c.l.b16 %v2626
  %v3926 = vunpack.c.h.b16 %v2626
  %v3927 = vunpack.c.l.b16 %v2627
  %v3928 = vunpack.c.h.b16 %v2627
  %v3929 = vunpack.c.l.b16 %v2628
  %v3930 = vunpack.c.l.b16 %v2629
  %v3931 = vunpack.c.h.b16 %v2629
  %v3932 = vunpack.c.l.b16 %v2630
  %v3933 = vunpack.c.h.b16 %v2630
  %v3934 = vunpack.c.l.b16 %v2631
  %v3935 = vunpack.c.h.b16 %v2631
  %v3936 = vunpack.c.l.b16 %v2632
  %v3937 = vunpack.c.l.b16 %v2633
  %v3938 = vunpack.c.h.b16 %v2633
  %v3939 = vunpack.c.l.b16 %v2634
  %v3940 = vunpack.c.h.b16 %v2634
  %v3941 = vunpack.c.l.b16 %v2635
  %v3942 = vunpack.c.h.b16 %v2635
  %v3943 = vunpack.c.l.b16 %v2636
  %v3944 = vunpack.c.l.b16 %v2637
  %v3945 = vunpack.c.h.b16 %v2637
  %v3946 = vunpack.c.l.b16 %v2638
  %v3947 = vunpack.c.h.b16 %v2638
  %v3948 = vunpack.c.l.b16 %v2639
  %v3949 = vunpack.c.h.b16 %v2639
  %v3950 = vunpack.c.l.b16 %v2640
  %v3951 = vunpack.c.l.b16 %v2641
  %v3952 = vunpack.c.h.b16 %v2641
  %v3953 = vunpack.c.l.b16 %v2642
  %v3954 = vunpack.c.h.b16 %v2642
  %v3955 = vunpack.c.l.b16 %v2643
  %v3956 = vunpack.c.h.b16 %v2643
  %v3957 = vunpack.c.l.b16 %v2644
  %v3958 = vunpack.c.l.b16 %v2645
  %v3959 = vunpack.c.h.b16 %v2645
  %v3960 = vunpack.c.l.b16 %v2646
  %v3961 = vunpack.c.h.b16 %v2646
  %v3962 = vunpack.c.l.b16 %v2647
  %v3963 = vunpack.c.h.b16 %v2647
  %v3964 = vunpack.c.l.b16 %v2648
  %v3965 = vunpack.c.l.b16 %v2649
  %v3966 = vunpack.c.h.b16 %v2649
  %v3967 = vunpack.c.l.b16 %v2650
  %v3968 = vunpack.c.h.b16 %v2650
  %v3969 = vunpack.c.l.b16 %v2651
  %v3970 = vunpack.c.h.b16 %v2651
  %v3971 = vunpack.c.l.b16 %v2652
  %v3972 = vunpack.c.l.b16 %v2653
  %v3973 = vunpack.c.h.b16 %v2653
  %v3974 = vunpack.c.l.b16 %v2654
  %v3975 = vunpack.c.h.b16 %v2654
  %v3976 = vunpack.c.l.b16 %v2655
  %v3977 = vunpack.c.h.b16 %v2655
  %v3978 = vunpack.c.l.b16 %v2656
  %v3979 = vunpack.c.l.b16 %v2657
  %v3980 = vunpack.c.h.b16 %v2657
  %v3981 = vunpack.c.l.b16 %v2658
  %v3982 = vunpack.c.h.b16 %v2658
  %v3983 = vunpack.c.l.b16 %v2659
  %v3984 = vunpack.c.h.b16 %v2659
  %v3985 = vunpack.c.l.b16 %v2660
  %v3986 = vunpack.c.l.b16 %v2661
  %v3987 = vunpack.c.h.b16 %v2661
  %v3988 = vunpack.c.l.b16 %v2662
  %v3989 = vunpack.c.h.b16 %v2662
  %v3990 = vunpack.c.l.b16 %v2663
  %v3991 = vunpack.c.h.b16 %v2663
  %v3992 = vunpack.c.l.b16 %v2664
  %v3993 = vunpack.c.l.b16 %v2665
  %v3994 = vunpack.c.h.b16 %v2665
  %v3995 = vunpack.c.l.b16 %v2666
  %v3996 = vunpack.c.h.b16 %v2666
  %v3997 = vunpack.c.l.b16 %v2667
  %v3998 = vunpack.c.h.b16 %v2667
  %v3999 = vunpack.c.l.b16 %v2668
  %v4000 = vunpack.c.l.b16 %v2669
  %v4001 = vunpack.c.h.b16 %v2669
  %v4002 = vunpack.c.l.b16 %v2670
  %v4003 = vunpack.c.h.b16 %v2670
  %v4004 = vunpack.c.l.b16 %v2671
  %v4005 = vunpack.c.h.b16 %v2671
  %v4006 = vunpack.c.l.b16 %v2672
  %v4007 = vunpack.c.l.b16 %v2673
  %v4008 = vunpack.c.h.b16 %v2673
  %v4009 = vunpack.c.l.b16 %v2674
  %v4010 = vunpack.c.h.b16 %v2674
  %v4011 = vunpack.c.l.b16 %v2675
  %v4012 = vunpack.c.h.b16 %v2675
  %v4013 = vunpack.c.l.b16 %v2676
  %v4014 = vunpack.c.l.b16 %v2677
  %v4015 = vunpack.c.h.b16 %v2677
  %v4016 = vunpack.c.l.b16 %v2678
  %v4017 = vunpack.c.h.b16 %v2678
  %v4018 = vunpack.c.l.b16 %v2679
  %v4019 = vunpack.c.h.b16 %v2679
  %v4020 = vunpack.c.l.b16 %v2680
  %v4021 = vunpack.c.l.b16 %v2681
  %v4022 = vunpack.c.h.b16 %v2681
  %v4023 = vunpack.c.l.b16 %v2682
  %v4024 = vunpack.c.h.b16 %v2682
  %v4025 = vunpack.c.l.b16 %v2683
  %v4026 = vunpack.c.h.b16 %v2683
  %v4027 = vunpack.c.l.b16 %v2684
  %v4028 = vunpack.c.l.b16 %v2685
  %v4029 = vunpack.c.h.b16 %v2685
  %v4030 = vunpack.c.l.b16 %v2686
  %v4031 = vunpack.c.h.b16 %v2686
  %v4032 = vunpack.c.l.b16 %v2687
  %v4033 = vunpack.c.h.b16 %v2687
  %v4034 = vunpack.c.l.b16 %v2688
  %v4035 = vunpack.c.l.b16 %v2689
  %v4036 = vunpack.c.h.b16 %v2689
  %v4037 = vunpack.c.l.b16 %v2690
  %v4038 = vunpack.c.h.b16 %v2690
  %v4039 = vunpack.c.l.b16 %v2691
  %v4040 = vunpack.c.h.b16 %v2691
  %v4041 = vunpack.c.l.b16 %v2692
  %v4042 = vunpack.c.l.b16 %v2693
  %v4043 = vunpack.c.h.b16 %v2693
  %v4044 = vunpack.c.l.b16 %v2694
  %v4045 = vunpack.c.h.b16 %v2694
  %v4046 = vunpack.c.l.b16 %v2695
  %v4047 = vunpack.c.h.b16 %v2695
  %v4048 = vunpack.c.l.b16 %v2696
  %v4049 = vunpack.c.l.b16 %v2697
  %v4050 = vunpack.c.h.b16 %v2697
  %v4051 = vunpack.c.l.b16 %v2698
  %v4052 = vunpack.c.h.b16 %v2698
  %v4053 = vunpack.c.l.b16 %v2699
  %v4054 = vunpack.c.h.b16 %v2699
  %v4055 = vunpack.c.l.b16 %v2700
  %v4056 = vunpack.c.l.b16 %v2701
  %v4057 = vunpack.c.h.b16 %v2701
  %v4058 = vunpack.c.l.b16 %v2702
  %v4059 = vunpack.c.h.b16 %v2702
  %v4060 = vunpack.c.l.b16 %v2703
  %v4061 = vunpack.c.h.b16 %v2703
  %v4062 = vunpack.c.l.b16 %v2704
  %v4063 = vunpack.c.l.b16 %v2705
  %v4064 = vunpack.c.h.b16 %v2705
  %v4065 = vunpack.c.l.b16 %v2706
  %v4066 = vunpack.c.h.b16 %v2706
  %v4067 = vunpack.c.l.b16 %v2707
  %v4068 = vunpack.c.h.b16 %v2707
  %v4069 = vunpack.c.l.b16 %v2708
  %v4070 = vunpack.c.l.b16 %v2709
  %v4071 = vunpack.c.h.b16 %v2709
  %v4072 = vunpack.c.l.b16 %v2710
  %v4073 = vunpack.c.h.b16 %v2710
  %v4074 = vunpack.c.l.b16 %v2711
  %v4075 = vunpack.c.h.b16 %v2711
  %v4076 = vunpack.c.l.b16 %v2712
  %v4077 = vunpack.c.l.b16 %v2713
  %v4078 = vunpack.c.h.b16 %v2713
  %v4079 = vunpack.c.l.b16 %v2714
  %v4080 = vunpack.c.h.b16 %v2714
  %v4081 = vunpack.c.l.b16 %v2715
  %v4082 = vunpack.c.h.b16 %v2715
  %v4083 = vunpack.c.l.b16 %v2716
  %v4084 = vunpack.c.l.b16 %v2717
  %v4085 = vunpack.c.h.b16 %v2717
  %v4086 = vunpack.c.l.b16 %v2718
  %v4087 = vunpack.c.h.b16 %v2718
  %v4088 = vunpack.c.l.b16 %v2719
  %v4089 = vunpack.c.h.b16 %v2719
  %v4090 = vunpack.c.l.b16 %v2720
  %v4091 = vunpack.c.l.b16 %v2721
  %v4092 = vunpack.c.h.b16 %v2721
  %v4093 = vunpack.c.l.b16 %v2722
  %v4094 = vunpack.c.h.b16 %v2722
  %v4095 = vunpack.c.l.b16 %v2723
  %v4096 = vunpack.c.h.b16 %v2723
  %v4097 = vunpack.c.l.b16 %v2724
  %v4098 = vunpack.c.l.b16 %v2725
  %v4099 = vunpack.c.h.b16 %v2725
  %v4100 = vunpack.c.l.b16 %v2726
  %v4101 = vunpack.c.h.b16 %v2726
  %v4102 = vunpack.c.l.b16 %v2727
  %v4103 = vunpack.c.h.b16 %v2727
  %v4104 = vunpack.c.l.b16 %v2728
  %v4105 = vunpack.c.l.b16 %v2729
  %v4106 = vunpack.c.h.b16 %v2729
  %v4107 = vunpack.c.l.b16 %v2730
  %v4108 = vunpack.c.h.b16 %v2730
  %v4109 = vunpack.c.l.b16 %v2731
  %v4110 = vunpack.c.h.b16 %v2731
  %v4111 = vunpack.c.l.b16 %v2732
  %v4112 = vunpack.c.l.b16 %v2733
  %v4113 = vunpack.c.h.b16 %v2733
  %v4114 = vunpack.c.l.b16 %v2734
  %v4115 = vunpack.c.h.b16 %v2734
  %v4116 = vunpack.c.l.b16 %v2735
  %v4117 = vunpack.c.h.b16 %v2735
  %v4118 = vunpack.c.l.b16 %v2736
  %v4119 = vunpack.c.l.b16 %v2737
  %v4120 = vunpack.c.h.b16 %v2737
  %v4121 = vunpack.c.l.b16 %v2738
  %v4122 = vunpack.c.h.b16 %v2738
  %v4123 = vunpack.c.l.b16 %v2739
  %v4124 = vunpack.c.h.b16 %v2739
  %v4125 = vunpack.c.l.b16 %v2740
  %v4126 = vunpack.c.l.b16 %v2741
  %v4127 = vunpack.c.h.b16 %v2741
  %v4128 = vunpack.c.l.b16 %v2742
  %v4129 = vunpack.c.h.b16 %v2742
  %v4130 = vunpack.c.l.b16 %v2743
  %v4131 = vunpack.c.h.b16 %v2743
  %v4132 = vunpack.c.l.b16 %v2744
  %v4133 = vunpack.c.l.b16 %v2745
  %v4134 = vunpack.c.h.b16 %v2745
  %v4135 = vunpack.c.l.b16 %v2746
  %v4136 = vunpack.c.h.b16 %v2746
  %v4137 = vunpack.c.l.b16 %v2747
  %v4138 = vunpack.c.h.b16 %v2747
  %v4139 = vunpack.c.l.b16 %v2748
  %v4140 = vunpack.c.l.b16 %v2749
  %v4141 = vunpack.c.h.b16 %v2749
  %v4142 = vunpack.c.l.b16 %v2750
  %v4143 = vunpack.c.h.b16 %v2750
  %v4144 = vunpack.c.l.b16 %v2751
  %v4145 = vunpack.c.h.b16 %v2751
  %v4146 = vunpack.c.l.b16 %v2752
  %v4147 = vunpack.c.l.b16 %v2753
  %v4148 = vunpack.c.h.b16 %v2753
  %v4149 = vunpack.c.l.b16 %v2754
  %v4150 = vunpack.c.h.b16 %v2754
  %v4151 = vunpack.c.l.b16 %v2755
  %v4152 = vunpack.c.h.b16 %v2755
  %v4153 = vunpack.c.l.b16 %v2756
  %v4154 = vunpack.c.l.b16 %v2757
  %v4155 = vunpack.c.h.b16 %v2757
  %v4156 = vunpack.c.l.b16 %v2758
  %v4157 = vunpack.c.h.b16 %v2758
  %v4158 = vunpack.c.l.b16 %v2759
  %v4159 = vunpack.c.h.b16 %v2759
  %v4160 = vunpack.c.l.b16 %v2760
  %v4161 = vunpack.c.l.b16 %v2761
  %v4162 = vunpack.c.h.b16 %v2761
  %v4163 = vunpack.c.l.b16 %v2762
  %v4164 = vunpack.c.h.b16 %v2762
  %v4165 = vunpack.c.l.b16 %v2763
  %v4166 = vunpack.c.h.b16 %v2763
  %v4167 = vunpack.c.l.b16 %v2764
  %v4168 = vunpack.c.l.b16 %v2765
  %v4169 = vunpack.c.h.b16 %v2765
  %v4170 = vunpack.c.l.b16 %v2766
  %v4171 = vunpack.c.h.b16 %v2766
  %v4172 = vunpack.c.l.b16 %v2767
  %v4173 = vunpack.c.h.b16 %v2767
  %v4174 = vunpack.c.l.b16 %v2768
  %v4175 = vunpack.c.l.b16 %v2769
  %v4176 = vunpack.c.h.b16 %v2769
  %v4177 = vunpack.c.l.b16 %v2770
  %v4178 = vunpack.c.h.b16 %v2770
  %v4179 = vunpack.c.l.b16 %v2771
  %v4180 = vunpack.c.h.b16 %v2771
  %v4181 = vunpack.c.l.b16 %v2772
  %v4182 = vunpack.c.l.b16 %v2773
  %v4183 = vunpack.c.h.b16 %v2773
  %v4184 = vunpack.c.l.b16 %v2774
  %v4185 = vunpack.c.h.b16 %v2774
  %v4186 = vunpack.c.l.b16 %v2775
  %v4187 = vunpack.c.h.b16 %v2775
  %v4188 = vunpack.c.l.b16 %v2776
  %v4189 = vunpack.c.l.b16 %v2777
  %v4190 = vunpack.c.h.b16 %v2777
  %v4191 = vunpack.c.l.b16 %v2778
  %v4192 = vunpack.c.h.b16 %v2778
  %v4193 = vunpack.c.l.b16 %v2779
  %v4194 = vunpack.c.h.b16 %v2779
  %v4195 = vunpack.c.l.b16 %v2780
  %v4196 = vunpack.c.l.b16 %v2781
  %v4197 = vunpack.c.h.b16 %v2781
  %v4198 = vunpack.c.l.b16 %v2782
  %v4199 = vunpack.c.h.b16 %v2782
  %v4200 = vunpack.c.l.b16 %v2783
  %v4201 = vunpack.c.h.b16 %v2783
  %v4202 = vunpack.c.l.b16 %v2784
  %v4203 = vunpack.c.l.b16 %v2785
  %v4204 = vunpack.c.h.b16 %v2785
  %v4205 = vunpack.c.l.b16 %v2786
  %v4206 = vunpack.c.h.b16 %v2786
  %v4207 = vunpack.c.l.b16 %v2787
  %v4208 = vunpack.c.h.b16 %v2787
  %v4209 = vunpack.c.l.b16 %v2788
  %v4210 = vunpack.c.l.b16 %v2789
  %v4211 = vunpack.c.h.b16 %v2789
  %v4212 = vunpack.c.l.b16 %v2790
  %v4213 = vunpack.c.h.b16 %v2790
  %v4214 = vunpack.c.l.b16 %v2791
  %v4215 = vunpack.c.h.b16 %v2791
  %v4216 = vunpack.c.l.b16 %v2792
  %v4217 = vunpack.c.l.b16 %v2793
  %v4218 = vunpack.c.h.b16 %v2793
  %v4219 = vunpack.c.l.b16 %v2794
  %v4220 = vunpack.c.h.b16 %v2794
  %v4221 = vunpack.c.l.b16 %v2795
  %v4222 = vunpack.c.h.b16 %v2795
  %v4223 = vunpack.c.l.b16 %v2796
  %v4224 = vunpack.c.l.b16 %v2797
  %v4225 = vunpack.c.h.b16 %v2797
  %v4226 = vunpack.c.l.b16 %v2798
  %v4227 = vunpack.c.h.b16 %v2798
  %v4228 = vunpack.c.l.b16 %v2799
  %v4229 = vunpack.c.h.b16 %v2799
  %v4230 = vunpack.c.l.b16 %v2800
  %v4231 = vunpack.c.l.b16 %v2801
  %v4232 = vunpack.c.h.b16 %v2801
  %v4233 = vunpack.c.l.b16 %v2802
  %v4234 = vunpack.c.h.b16 %v2802
  %v4235 = vunpack.c.l.b16 %v2803
  %v4236 = vunpack.c.h.b16 %v2803
  %v4237 = vunpack.c.l.b16 %v2804
  %v4238 = vunpack.c.l.b16 %v2805
  %v4239 = vunpack.c.h.b16 %v2805
  %v4240 = vunpack.c.l.b16 %v2806
  %v4241 = vunpack.c.h.b16 %v2806
  %v4242 = vunpack.c.l.b16 %v2807
  %v4243 = vunpack.c.h.b16 %v2807
  %v4244 = vunpack.c.l.b16 %v2808
  %v4245 = vunpack.c.l.b16 %v2809
  %v4246 = vunpack.c.h.b16 %v2809
  %v4247 = vunpack.c.l.b16 %v2810
  %v4248 = vunpack.c.h.b16 %v2810
  %v4249 = vunpack.c.l.b16 %v2811
  %v4250 = vunpack.c.h.b16 %v2811
  %v4251 = vunpack.c.l.b16 %v2812
  %v4252 = vunpack.c.l.b16 %v2813
  %v4253 = vunpack.c.h.b16 %v2813
  %v4254 = vunpack.c.l.b16 %v2814
  %v4255 = vunpack.c.h.b16 %v2814
  %v4256 = vunpack.c.l.b16 %v2815
  %v4257 = vunpack.c.h.b16 %v2815
  %v4258 = vunpack.c.l.b16 %v2816
  %v4259 = vunpack.c.l.b16 %v2817
  %v4260 = vunpack.c.h.b16 %v2817
  %v4261 = vunpack.c.l.b16 %v2818
  %v4262 = vunpack.c.h.b16 %v2818
  %v4263 = vunpack.c.l.b16 %v2819
  %v4264 = vunpack.c.h.b16 %v2819
  %v4265 = vunpack.c.l.b16 %v2820
  %v4266 = vpack.c.b16 %v3377, %v3370
  %v4267 = vpack.c.b16 %v3378, %v3371
  %v4268 = vpack.c.b16 %v3379, %v3372
  %v4269 = vpack.c.b16 %v3380, %v3373
  %v4270 = vpack.c.b16 %v3381, %v3374
  %v4271 = vpack.c.b16 %v3382, %v3375
  %v4272 = vpack.c.b16 %v3383, %v3376
  %v4273 = vpack.c.b16 %v3391, %v3384
  %v4274 = vpack.c.b16 %v3392, %v3385
  %v4275 = vpack.c.b16 %v3393, %v3386
  %v4276 = vpack.c.b16 %v3394, %v3387
  %v4277 = vpack.c.b16 %v3395, %v3388
  %v4278 = vpack.c.b16 %v3396, %v3389
  %v4279 = vpack.c.b16 %v3397, %v3390
  %v4280 = vpack.c.b16 %v3405, %v3398
  %v4281 = vpack.c.b16 %v3406, %v3399
  %v4282 = vpack.c.b16 %v3407, %v3400
  %v4283 = vpack.c.b16 %v3408, %v3401
  %v4284 = vpack.c.b16 %v3409, %v3402
  %v4285 = vpack.c.b16 %v3410, %v3403
  %v4286 = vpack.c.b16 %v3411, %v3404
  %v4287 = vpack.c.b16 %v3419, %v3412
  %v4288 = vpack.c.b16 %v3420, %v3413
  %v4289 = vpack.c.b16 %v3421, %v3414
  %v4290 = vpack.c.b16 %v3422, %v3415
  %v4291 = vpack.c.b16 %v3423, %v3416
  %v4292 = vpack.c.b16 %v3424, %v3417
  %v4293 = vpack.c.b16 %v3425, %v3418
  %v4294 = vpack.c.b16 %v3433, %v3426
  %v4295 = vpack.c.b16 %v3434, %v3427
  %v4296 = vpack.c.b16 %v3435, %v3428
  %v4297 = vpack.c.b16 %v3436, %v3429
  %v4298 = vpack.c.b16 %v3437, %v3430
  %v4299 = vpack.c.b16 %v3438, %v3431
  %v4300 = vpack.c.b16 %v3439, %v3432
  %v4301 = vpack.c.b16 %v3447, %v3440
  %v4302 = vpack.c.b16 %v3448, %v3441
  %v4303 = vpack.c.b16 %v3449, %v3442
  %v4304 = vpack.c.b16 %v3450, %v3443
  %v4305 = vpack.c.b16 %v3451, %v3444
  %v4306 = vpack.c.b16 %v3452, %v3445
  %v4307 = vpack.c.b16 %v3453, %v3446
  %v4308 = vpack.c.b16 %v3461, %v3454
  %v4309 = vpack.c.b16 %v3462, %v3455
  %v4310 = vpack.c.b16 %v3463, %v3456
  %v4311 = vpack.c.b16 %v3464, %v3457
  %v4312 = vpack.c.b16 %v3465, %v3458
  %v4313 = vpack.c.b16 %v3466, %v3459
  %v4314 = vpack.c.b16 %v3467, %v3460
  %v4315 = vpack.c.b16 %v3475, %v3468
  %v4316 = vpack.c.b16 %v3476, %v3469
  %v4317 = vpack.c.b16 %v3477, %v3470
  %v4318 = vpack.c.b16 %v3478, %v3471
  %v4319 = vpack.c.b16 %v3479, %v3472
  %v4320 = vpack.c.b16 %v3480, %v3473
  %v4321 = vpack.c.b16 %v3481, %v3474
  %v4322 = vpack.c.b16 %v3489, %v3482
  %v4323 = vpack.c.b16 %v3490, %v3483
  %v4324 = vpack.c.b16 %v3491, %v3484
  %v4325 = vpack.c.b16 %v3492, %v3485
  %v4326 = vpack.c.b16 %v3493, %v3486
  %v4327 = vpack.c.b16 %v3494, %v3487
  %v4328 = vpack.c.b16 %v3495, %v3488
  %v4329 = vpack.c.b16 %v3503, %v3496
  %v4330 = vpack.c.b16 %v3504, %v3497
  %v4331 = vpack.c.b16 %v3505, %v3498
  %v4332 = vpack.c.b16 %v3506, %v3499
  %v4333 = vpack.c.b16 %v3507, %v3500
  %v4334 = vpack.c.b16 %v3508, %v3501
  %v4335 = vpack.c.b16 %v3509, %v3502
  %v4336 = vpack.c.b16 %v3517, %v3510
  %v4337 = vpack.c.b16 %v3518, %v3511
  %v4338 = vpack.c.b16 %v3519, %v3512
  %v4339 = vpack.c.b16 %v3520, %v3513
  %v4340 = vpack.c.b16 %v3521, %v3514
  %v4341 = vpack.c.b16 %v3522, %v3515
  %v4342 = vpack.c.b16 %v3523, %v3516
  %v4343 = vpack.c.b16 %v3531, %v3524
  %v4344 = vpack.c.b16 %v3532, %v3525
  %v4345 = vpack.c.b16 %v3533, %v3526
  %v4346 = vpack.c.b16 %v3534, %v3527
  %v4347 = vpack.c.b16 %v3535, %v3528
  %v4348 = vpack.c.b16 %v3536, %v3529
  %v4349 = vpack.c.b16 %v3537, %v3530
  %v4350 = vpack.c.b16 %v3545, %v3538
  %v4351 = vpack.c.b16 %v3546, %v3539
  %v4352 = vpack.c.b16 %v3547, %v3540
  %v4353 = vpack.c.b16 %v3548, %v3541
  %v4354 = vpack.c.b16 %v3549, %v3542
  %v4355 = vpack.c.b16 %v3550, %v3543
  %v4356 = vpack.c.b16 %v3551, %v3544
  %v4357 = vpack.c.b16 %v3559, %v3552
  %v4358 = vpack.c.b16 %v3560, %v3553
  %v4359 = vpack.c.b16 %v3561, %v3554
  %v4360 = vpack.c.b16 %v3562, %v3555
  %v4361 = vpack.c.b16 %v3563, %v3556
  %v4362 = vpack.c.b16 %v3564, %v3557
  %v4363 = vpack.c.b16 %v3565, %v3558
  %v4364 = vpack.c.b16 %v3573, %v3566
  %v4365 = vpack.c.b16 %v3574, %v3567
  %v4366 = vpack.c.b16 %v3575, %v3568
  %v4367 = vpack.c.b16 %v3576, %v3569
  %v4368 = vpack.c.b16 %v3577, %v3570
  %v4369 = vpack.c.b16 %v3578, %v3571
  %v4370 = vpack.c.b16 %v3579, %v3572
  %v4371 = vpack.c.b16 %v3587, %v3580
  %v4372 = vpack.c.b16 %v3588, %v3581
  %v4373 = vpack.c.b16 %v3589, %v3582
  %v4374 = vpack.c.b16 %v3590, %v3583
  %v4375 = vpack.c.b16 %v3591, %v3584
  %v4376 = vpack.c.b16 %v3592, %v3585
  %v4377 = vpack.c.b16 %v3593, %v3586
  %v4378 = vpack.c.b16 %v3601, %v3594
  %v4379 = vpack.c.b16 %v3602, %v3595
  %v4380 = vpack.c.b16 %v3603, %v3596
  %v4381 = vpack.c.b16 %v3604, %v3597
  %v4382 = vpack.c.b16 %v3605, %v3598
  %v4383 = vpack.c.b16 %v3606, %v3599
  %v4384 = vpack.c.b16 %v3607, %v3600
  %v4385 = vpack.c.b16 %v3615, %v3608
  %v4386 = vpack.c.b16 %v3616, %v3609
  %v4387 = vpack.c.b16 %v3617, %v3610
  %v4388 = vpack.c.b16 %v3618, %v3611
  %v4389 = vpack.c.b16 %v3619, %v3612
  %v4390 = vpack.c.b16 %v3620, %v3613
  %v4391 = vpack.c.b16 %v3621, %v3614
  %v4392 = vpack.c.b16 %v3629, %v3622
  %v4393 = vpack.c.b16 %v3630, %v3623
  %v4394 = vpack.c.b16 %v3631, %v3624
  %v4395 = vpack.c.b16 %v3632, %v3625
  %v4396 = vpack.c.b16 %v3633, %v3626
  %v4397 = vpack.c.b16 %v3634, %v3627
  %v4398 = vpack.c.b16 %v3635, %v3628
  %v4399 = vpack.c.b16 %v3643, %v3636
  %v4400 = vpack.c.b16 %v3644, %v3637
  %v4401 = vpack.c.b16 %v3645, %v3638
  %v4402 = vpack.c.b16 %v3646, %v3639
  %v4403 = vpack.c.b16 %v3647, %v3640
  %v4404 = vpack.c.b16 %v3648, %v3641
  %v4405 = vpack.c.b16 %v3649, %v3642
  %v4406 = vpack.c.b16 %v3657, %v3650
  %v4407 = vpack.c.b16 %v3658, %v3651
  %v4408 = vpack.c.b16 %v3659, %v3652
  %v4409 = vpack.c.b16 %v3660, %v3653
  %v4410 = vpack.c.b16 %v3661, %v3654
  %v4411 = vpack.c.b16 %v3662, %v3655
  %v4412 = vpack.c.b16 %v3663, %v3656
  %v4413 = vpack.c.b16 %v3671, %v3664
  %v4414 = vpack.c.b16 %v3672, %v3665
  %v4415 = vpack.c.b16 %v3673, %v3666
  %v4416 = vpack.c.b16 %v3674, %v3667
  %v4417 = vpack.c.b16 %v3675, %v3668
  %v4418 = vpack.c.b16 %v3676, %v3669
  %v4419 = vpack.c.b16 %v3677, %v3670
  %v4420 = vpack.c.b16 %v3685, %v3678
  %v4421 = vpack.c.b16 %v3686, %v3679
  %v4422 = vpack.c.b16 %v3687, %v3680
  %v4423 = vpack.c.b16 %v3688, %v3681
  %v4424 = vpack.c.b16 %v3689, %v3682
  %v4425 = vpack.c.b16 %v3690, %v3683
  %v4426 = vpack.c.b16 %v3691, %v3684
  %v4427 = vpack.c.b16 %v3699, %v3692
  %v4428 = vpack.c.b16 %v3700, %v3693
  %v4429 = vpack.c.b16 %v3701, %v3694
  %v4430 = vpack.c.b16 %v3702, %v3695
  %v4431 = vpack.c.b16 %v3703, %v3696
  %v4432 = vpack.c.b16 %v3704, %v3697
  %v4433 = vpack.c.b16 %v3705, %v3698
  %v4434 = vpack.c.b16 %v3713, %v3706
  %v4435 = vpack.c.b16 %v3714, %v3707
  %v4436 = vpack.c.b16 %v3715, %v3708
  %v4437 = vpack.c.b16 %v3716, %v3709
  %v4438 = vpack.c.b16 %v3717, %v3710
  %v4439 = vpack.c.b16 %v3718, %v3711
  %v4440 = vpack.c.b16 %v3719, %v3712
  %v4441 = vpack.c.b16 %v3727, %v3720
  %v4442 = vpack.c.b16 %v3728, %v3721
  %v4443 = vpack.c.b16 %v3729, %v3722
  %v4444 = vpack.c.b16 %v3730, %v3723
  %v4445 = vpack.c.b16 %v3731, %v3724
  %v4446 = vpack.c.b16 %v3732, %v3725
  %v4447 = vpack.c.b16 %v3733, %v3726
  %v4448 = vpack.c.b16 %v3741, %v3734
  %v4449 = vpack.c.b16 %v3742, %v3735
  %v4450 = vpack.c.b16 %v3743, %v3736
  %v4451 = vpack.c.b16 %v3744, %v3737
  %v4452 = vpack.c.b16 %v3745, %v3738
  %v4453 = vpack.c.b16 %v3746, %v3739
  %v4454 = vpack.c.b16 %v3747, %v3740
  %v4455 = vpack.c.b16 %v3755, %v3748
  %v4456 = vpack.c.b16 %v3756, %v3749
  %v4457 = vpack.c.b16 %v3757, %v3750
  %v4458 = vpack.c.b16 %v3758, %v3751
  %v4459 = vpack.c.b16 %v3759, %v3752
  %v4460 = vpack.c.b16 %v3760, %v3753
  %v4461 = vpack.c.b16 %v3761, %v3754
  %v4462 = vpack.c.b16 %v3769, %v3762
  %v4463 = vpack.c.b16 %v3770, %v3763
  %v4464 = vpack.c.b16 %v3771, %v3764
  %v4465 = vpack.c.b16 %v3772, %v3765
  %v4466 = vpack.c.b16 %v3773, %v3766
  %v4467 = vpack.c.b16 %v3774, %v3767
  %v4468 = vpack.c.b16 %v3775, %v3768
  %v4469 = vpack.c.b16 %v3783, %v3776
  %v4470 = vpack.c.b16 %v3784, %v3777
  %v4471 = vpack.c.b16 %v3785, %v3778
  %v4472 = vpack.c.b16 %v3786, %v3779
  %v4473 = vpack.c.b16 %v3787, %v3780
  %v4474 = vpack.c.b16 %v3788, %v3781
  %v4475 = vpack.c.b16 %v3789, %v3782
  %v4476 = vpack.c.b16 %v3797, %v3790
  %v4477 = vpack.c.b16 %v3798, %v3791
  %v4478 = vpack.c.b16 %v3799, %v3792
  %v4479 = vpack.c.b16 %v3800, %v3793
  %v4480 = vpack.c.b16 %v3801, %v3794
  %v4481 = vpack.c.b16 %v3802, %v3795
  %v4482 = vpack.c.b16 %v3803, %v3796
  %v4483 = vpack.c.b16 %v3811, %v3804
  %v4484 = vpack.c.b16 %v3812, %v3805
  %v4485 = vpack.c.b16 %v3813, %v3806
  %v4486 = vpack.c.b16 %v3814, %v3807
  %v4487 = vpack.c.b16 %v3815, %v3808
  %v4488 = vpack.c.b16 %v3816, %v3809
  %v4489 = vpack.c.b16 %v3817, %v3810
  %v4490 = vpack.c.b16 %v3825, %v3818
  %v4491 = vpack.c.b16 %v3826, %v3819
  %v4492 = vpack.c.b16 %v3827, %v3820
  %v4493 = vpack.c.b16 %v3828, %v3821
  %v4494 = vpack.c.b16 %v3829, %v3822
  %v4495 = vpack.c.b16 %v3830, %v3823
  %v4496 = vpack.c.b16 %v3831, %v3824
  %v4497 = vpack.c.b16 %v3839, %v3832
  %v4498 = vpack.c.b16 %v3840, %v3833
  %v4499 = vpack.c.b16 %v3841, %v3834
  %v4500 = vpack.c.b16 %v3842, %v3835
  %v4501 = vpack.c.b16 %v3843, %v3836
  %v4502 = vpack.c.b16 %v3844, %v3837
  %v4503 = vpack.c.b16 %v3845, %v3838
  %v4504 = vpack.c.b16 %v3853, %v3846
  %v4505 = vpack.c.b16 %v3854, %v3847
  %v4506 = vpack.c.b16 %v3855, %v3848
  %v4507 = vpack.c.b16 %v3856, %v3849
  %v4508 = vpack.c.b16 %v3857, %v3850
  %v4509 = vpack.c.b16 %v3858, %v3851
  %v4510 = vpack.c.b16 %v3859, %v3852
  %v4511 = vpack.c.b16 %v3867, %v3860
  %v4512 = vpack.c.b16 %v3868, %v3861
  %v4513 = vpack.c.b16 %v3869, %v3862
  %v4514 = vpack.c.b16 %v3870, %v3863
  %v4515 = vpack.c.b16 %v3871, %v3864
  %v4516 = vpack.c.b16 %v3872, %v3865
  %v4517 = vpack.c.b16 %v3873, %v3866
  %v4518 = vpack.c.b16 %v3881, %v3874
  %v4519 = vpack.c.b16 %v3882, %v3875
  %v4520 = vpack.c.b16 %v3883, %v3876
  %v4521 = vpack.c.b16 %v3884, %v3877
  %v4522 = vpack.c.b16 %v3885, %v3878
  %v4523 = vpack.c.b16 %v3886, %v3879
  %v4524 = vpack.c.b16 %v3887, %v3880
  %v4525 = vpack.c.b16 %v3895, %v3888
  %v4526 = vpack.c.b16 %v3896, %v3889
  %v4527 = vpack.c.b16 %v3897, %v3890
  %v4528 = vpack.c.b16 %v3898, %v3891
  %v4529 = vpack.c.b16 %v3899, %v3892
  %v4530 = vpack.c.b16 %v3900, %v3893
  %v4531 = vpack.c.b16 %v3901, %v3894
  %v4532 = vpack.c.b16 %v3909, %v3902
  %v4533 = vpack.c.b16 %v3910, %v3903
  %v4534 = vpack.c.b16 %v3911, %v3904
  %v4535 = vpack.c.b16 %v3912, %v3905
  %v4536 = vpack.c.b16 %v3913, %v3906
  %v4537 = vpack.c.b16 %v3914, %v3907
  %v4538 = vpack.c.b16 %v3915, %v3908
  %v4539 = vpack.c.b16 %v3923, %v3916
  %v4540 = vpack.c.b16 %v3924, %v3917
  %v4541 = vpack.c.b16 %v3925, %v3918
  %v4542 = vpack.c.b16 %v3926, %v3919
  %v4543 = vpack.c.b16 %v3927, %v3920
  %v4544 = vpack.c.b16 %v3928, %v3921
  %v4545 = vpack.c.b16 %v3929, %v3922
  %v4546 = vpack.c.b16 %v3937, %v3930
  %v4547 = vpack.c.b16 %v3938, %v3931
  %v4548 = vpack.c.b16 %v3939, %v3932
  %v4549 = vpack.c.b16 %v3940, %v3933
  %v4550 = vpack.c.b16 %v3941, %v3934
  %v4551 = vpack.c.b16 %v3942, %v3935
  %v4552 = vpack.c.b16 %v3943, %v3936
  %v4553 = vpack.c.b16 %v3951, %v3944
  %v4554 = vpack.c.b16 %v3952, %v3945
  %v4555 = vpack.c.b16 %v3953, %v3946
  %v4556 = vpack.c.b16 %v3954, %v3947
  %v4557 = vpack.c.b16 %v3955, %v3948
  %v4558 = vpack.c.b16 %v3956, %v3949
  %v4559 = vpack.c.b16 %v3957, %v3950
  %v4560 = vpack.c.b16 %v3965, %v3958
  %v4561 = vpack.c.b16 %v3966, %v3959
  %v4562 = vpack.c.b16 %v3967, %v3960
  %v4563 = vpack.c.b16 %v3968, %v3961
  %v4564 = vpack.c.b16 %v3969, %v3962
  %v4565 = vpack.c.b16 %v3970, %v3963
  %v4566 = vpack.c.b16 %v3971, %v3964
  %v4567 = vpack.c.b16 %v3979, %v3972
  %v4568 = vpack.c.b16 %v3980, %v3973
  %v4569 = vpack.c.b16 %v3981, %v3974
  %v4570 = vpack.c.b16 %v3982, %v3975
  %v4571 = vpack.c.b16 %v3983, %v3976
  %v4572 = vpack.c.b16 %v3984, %v3977
  %v4573 = vpack.c.b16 %v3985, %v3978
  %v4574 = vpack.c.b16 %v3993, %v3986
  %v4575 = vpack.c.b16 %v3994, %v3987
  %v4576 = vpack.c.b16 %v3995, %v3988
  %v4577 = vpack.c.b16 %v3996, %v3989
  %v4578 = vpack.c.b16 %v3997, %v3990
  %v4579 = vpack.c.b16 %v3998, %v3991
  %v4580 = vpack.c.b16 %v3999, %v3992
  %v4581 = vpack.c.b16 %v4007, %v4000
  %v4582 = vpack.c.b16 %v4008, %v4001
  %v4583 = vpack.c.b16 %v4009, %v4002
  %v4584 = vpack.c.b16 %v4010, %v4003
  %v4585 = vpack.c.b16 %v4011, %v4004
  %v4586 = vpack.c.b16 %v4012, %v4005
  %v4587 = vpack.c.b16 %v4013, %v4006
  %v4588 = vpack.c.b16 %v4021, %v4014
  %v4589 = vpack.c.b16 %v4022, %v4015
  %v4590 = vpack.c.b16 %v4023, %v4016
  %v4591 = vpack.c.b16 %v4024, %v4017
  %v4592 = vpack.c.b16 %v4025, %v4018
  %v4593 = vpack.c.b16 %v4026, %v4019
  %v4594 = vpack.c.b16 %v4027, %v4020
  %v4595 = vpack.c.b16 %v4035, %v4028
  %v4596 = vpack.c.b16 %v4036, %v4029
  %v4597 = vpack.c.b16 %v4037, %v4030
  %v4598 = vpack.c.b16 %v4038, %v4031
  %v4599 = vpack.c.b16 %v4039, %v4032
  %v4600 = vpack.c.b16 %v4040, %v4033
  %v4601 = vpack.c.b16 %v4041, %v4034
  %v4602 = vpack.c.b16 %v4049, %v4042
  %v4603 = vpack.c.b16 %v4050, %v4043
  %v4604 = vpack.c.b16 %v4051, %v4044
  %v4605 = vpack.c.b16 %v4052, %v4045
  %v4606 = vpack.c.b16 %v4053, %v4046
  %v4607 = vpack.c.b16 %v4054, %v4047
  %v4608 = vpack.c.b16 %v4055, %v4048
  %v4609 = vpack.c.b16 %v4063, %v4056
  %v4610 = vpack.c.b16 %v4064, %v4057
  %v4611 = vpack.c.b16 %v4065, %v4058
  %v4612 = vpack.c.b16 %v4066, %v4059
  %v4613 = vpack.c.b16 %v4067, %v4060
  %v4614 = vpack.c.b16 %v4068, %v4061
  %v4615 = vpack.c.b16 %v4069, %v4062
  %v4616 = vpack.c.b16 %v4077, %v4070
  %v4617 = vpack.c.b16 %v4078, %v4071
  %v4618 = vpack.c.b16 %v4079, %v4072
  %v4619 = vpack.c.b16 %v4080, %v4073
  %v4620 = vpack.c.b16 %v4081, %v4074
  %v4621 = vpack.c.b16 %v4082, %v4075
  %v4622 = vpack.c.b16 %v4083, %v4076
  %v4623 = vpack.c.b16 %v4091, %v4084
  %v4624 = vpack.c.b16 %v4092, %v4085
  %v4625 = vpack.c.b16 %v4093, %v4086
  %v4626 = vpack.c.b16 %v4094, %v4087
  %v4627 = vpack.c.b16 %v4095, %v4088
  %v4628 = vpack.c.b16 %v4096, %v4089
  %v4629 = vpack.c.b16 %v4097, %v4090
  %v4630 = vpack.c.b16 %v4105, %v4098
  %v4631 = vpack.c.b16 %v4106, %v4099
  %v4632 = vpack.c.b16 %v4107, %v4100
  %v4633 = vpack.c.b16 %v4108, %v4101
  %v4634 = vpack.c.b16 %v4109, %v4102
  %v4635 = vpack.c.b16 %v4110, %v4103
  %v4636 = vpack.c.b16 %v4111, %v4104
  %v4637 = vpack.c.b16 %v4119, %v4112
  %v4638 = vpack.c.b16 %v4120, %v4113
  %v4639 = vpack.c.b16 %v4121, %v4114
  %v4640 = vpack.c.b16 %v4122, %v4115
  %v4641 = vpack.c.b16 %v4123, %v4116
  %v4642 = vpack.c.b16 %v4124, %v4117
  %v4643 = vpack.c.b16 %v4125, %v4118
  %v4644 = vpack.c.b16 %v4133, %v4126
  %v4645 = vpack.c.b16 %v4134, %v4127
  %v4646 = vpack.c.b16 %v4135, %v4128
  %v4647 = vpack.c.b16 %v4136, %v4129
  %v4648 = vpack.c.b16 %v4137, %v4130
  %v4649 = vpack.c.b16 %v4138, %v4131
  %v4650 = vpack.c.b16 %v4139, %v4132
  %v4651 = vpack.c.b16 %v4147, %v4140
  %v4652 = vpack.c.b16 %v4148, %v4141
  %v4653 = vpack.c.b16 %v4149, %v4142
  %v4654 = vpack.c.b16 %v4150, %v4143
  %v4655 = vpack.c.b16 %v4151, %v4144
  %v4656 = vpack.c.b16 %v4152, %v4145
  %v4657 = vpack.c.b16 %v4153, %v4146
  %v4658 = vpack.c.b16 %v4161, %v4154
  %v4659 = vpack.c.b16 %v4162, %v4155
  %v4660 = vpack.c.b16 %v4163, %v4156
  %v4661 = vpack.c.b16 %v4164, %v4157
  %v4662 = vpack.c.b16 %v4165, %v4158
  %v4663 = vpack.c.b16 %v4166, %v4159
  %v4664 = vpack.c.b16 %v4167, %v4160
  %v4665 = vpack.c.b16 %v4175, %v4168
  %v4666 = vpack.c.b16 %v4176, %v4169
  %v4667 = vpack.c.b16 %v4177, %v4170
  %v4668 = vpack.c.b16 %v4178, %v4171
  %v4669 = vpack.c.b16 %v4179, %v4172
  %v4670 = vpack.c.b16 %v4180, %v4173
  %v4671 = vpack.c.b16 %v4181, %v4174
  %v4672 = vpack.c.b16 %v4189, %v4182
  %v4673 = vpack.c.b16 %v4190, %v4183
  %v4674 = vpack.c.b16 %v4191, %v4184
  %v4675 = vpack.c.b16 %v4192, %v4185
  %v4676 = vpack.c.b16 %v4193, %v4186
  %v4677 = vpack.c.b16 %v4194, %v4187
  %v4678 = vpack.c.b16 %v4195, %v4188
  %v4679 = vpack.c.b16 %v4203, %v4196
  %v4680 = vpack.c.b16 %v4204, %v4197
  %v4681 = vpack.c.b16 %v4205, %v4198
  %v4682 = vpack.c.b16 %v4206, %v4199
  %v4683 = vpack.c.b16 %v4207, %v4200
  %v4684 = vpack.c.b16 %v4208, %v4201
  %v4685 = vpack.c.b16 %v4209, %v4202
  %v4686 = vpack.c.b16 %v4217, %v4210
  %v4687 = vpack.c.b16 %v4218, %v4211
  %v4688 = vpack.c.b16 %v4219, %v4212
  %v4689 = vpack.c.b16 %v4220, %v4213
  %v4690 = vpack.c.b16 %v4221, %v4214
  %v4691 = vpack.c.b16 %v4222, %v4215
  %v4692 = vpack.c.b16 %v4223, %v4216
  %v4693 = vpack.c.b16 %v4231, %v4224
  %v4694 = vpack.c.b16 %v4232, %v4225
  %v4695 = vpack.c.b16 %v4233, %v4226
  %v4696 = vpack.c.b16 %v4234, %v4227
  %v4697 = vpack.c.b16 %v4235, %v4228
  %v4698 = vpack.c.b16 %v4236, %v4229
  %v4699 = vpack.c.b16 %v4237, %v4230
  %v4700 = vpack.c.b16 %v4245, %v4238
  %v4701 = vpack.c.b16 %v4246, %v4239
  %v4702 = vpack.c.b16 %v4247, %v4240
  %v4703 = vpack.c.b16 %v4248, %v4241
  %v4704 = vpack.c.b16 %v4249, %v4242
  %v4705 = vpack.c.b16 %v4250, %v4243
  %v4706 = vpack.c.b16 %v4251, %v4244
  %v4707 = vpack.c.b16 %v4259, %v4252
  %v4708 = vpack.c.b16 %v4260, %v4253
  %v4709 = vpack.c.b16 %v4261, %v4254
  %v4710 = vpack.c.b16 %v4262, %v4255
  %v4711 = vpack.c.b16 %v4263, %v4256
  %v4712 = vpack.c.b16 %v4264, %v4257
  %v4713 = vpack.c.b16 %v4265, %v4258
  %5162 = vmatprep.subr.bf16.mxu0 %v4316
  %5163 = vmatpush1.bf16.msra.mxu0 %v4315
  %5164 = vmatprep.subr.bf16.mxu0 %v4309
  %5165 = vmatpush1.bf16.msra.mxu0 %v4308
  %5166 = vmatprep.subr.bf16.mxu0 %v4302
  %5167 = vmatpush1.bf16.msra.mxu0 %v4301
  %5168 = vmatprep.subr.bf16.mxu0 %v4295
  %5169 = vmatpush1.bf16.msra.mxu0 %v4294
  %5170 = vmatprep.subr.bf16.mxu0 %v4288
  %5171 = vmatpush1.bf16.msra.mxu0 %v4287
  %5172 = vmatprep.subr.bf16.mxu0 %v4281
  %5173 = vmatpush1.bf16.msra.mxu0 %v4280
  %5174 = vmatprep.subr.bf16.mxu0 %v4274
  %5175 = vmatpush1.bf16.msra.mxu0 %v4273
  %5176 = vmatprep.subr.bf16.mxu0 %v4267
  %5177 = vmatpush1.bf16.msra.mxu0 %v4266
  %5178 = vmatprep.subr.bf16.mxu0 %v4372
  %5179 = vmatpush2.bf16.msra.mxu0 %v4371
  %5180 = vmatprep.subr.bf16.mxu0 %v4365
  %5181 = vmatpush2.bf16.msra.mxu0 %v4364
  %5182 = vmatprep.subr.bf16.mxu0 %v4358
  %5183 = vmatpush2.bf16.msra.mxu0 %v4357
  %5184 = vmatprep.subr.bf16.mxu0 %v4351
  %5185 = vmatpush2.bf16.msra.mxu0 %v4350
  %5186 = vmatprep.subr.bf16.mxu0 %v4344
  %5187 = vmatpush2.bf16.msra.mxu0 %v4343
  %5188 = vmatprep.subr.bf16.mxu0 %v4337
  %5189 = vmatpush2.bf16.msra.mxu0 %v4336
  %5190 = vmatprep.subr.bf16.mxu0 %v4330
  %5191 = vmatpush2.bf16.msra.mxu0 %v4329
  %5192 = vmatprep.subr.bf16.mxu0 %v4323
  %5193 = vmatpush2.bf16.msra.mxu0 %v4322
  %5194 = vmatprep.mubr.bf16.mxu0 %v2302
  %5195 = vmatmul.mubr.bf16.gmra.mxu0 %v2301
  %v5196 = vpop.f32.mrf.mxu0
  %v5197 = vadd.f32 %v2826, %v5196
  %v5198 = vpop.f32.mrf.mxu0
  %v5199 = vadd.f32 %v2830, %v5198
  %v5200 = vpop.f32.mrf.mxu0
  %v5201 = vpop.f32.mrf.mxu0
  %5202 = vdwg.mxu0
  %5203 = vmatprep.subr.bf16.mxu0 %v4428
  %5204 = vmatpush1.bf16.msra.mxu0 %v4427
  %5205 = vmatprep.subr.bf16.mxu0 %v4421
  %5206 = vmatpush1.bf16.msra.mxu0 %v4420
  %5207 = vmatprep.subr.bf16.mxu0 %v4414
  %5208 = vmatpush1.bf16.msra.mxu0 %v4413
  %5209 = vmatprep.subr.bf16.mxu0 %v4407
  %5210 = vmatpush1.bf16.msra.mxu0 %v4406
  %5211 = vmatprep.subr.bf16.mxu0 %v4400
  %5212 = vmatpush1.bf16.msra.mxu0 %v4399
  %5213 = vmatprep.subr.bf16.mxu0 %v4393
  %5214 = vmatpush1.bf16.msra.mxu0 %v4392
  %5215 = vmatprep.subr.bf16.mxu0 %v4386
  %5216 = vmatpush1.bf16.msra.mxu0 %v4385
  %5217 = vmatprep.subr.bf16.mxu0 %v4379
  %5218 = vmatpush1.bf16.msra.mxu0 %v4378
  %5219 = vmatprep.subr.bf16.mxu0 %v4484
  %5220 = vmatpush2.bf16.msra.mxu0 %v4483
  %5221 = vmatprep.subr.bf16.mxu0 %v4477
  %5222 = vmatpush2.bf16.msra.mxu0 %v4476
  %5223 = vmatprep.subr.bf16.mxu0 %v4470
  %5224 = vmatpush2.bf16.msra.mxu0 %v4469
  %5225 = vmatprep.subr.bf16.mxu0 %v4463
  %5226 = vmatpush2.bf16.msra.mxu0 %v4462
  %5227 = vmatprep.subr.bf16.mxu0 %v4456
  %5228 = vmatpush2.bf16.msra.mxu0 %v4455
  %5229 = vmatprep.subr.bf16.mxu0 %v4449
  %5230 = vmatpush2.bf16.msra.mxu0 %v4448
  %5231 = vmatprep.subr.bf16.mxu0 %v4442
  %5232 = vmatpush2.bf16.msra.mxu0 %v4441
  %5233 = vmatprep.subr.bf16.mxu0 %v4435
  %5234 = vmatpush2.bf16.msra.mxu0 %v4434
  %5235 = vmatprep.mubr.bf16.mxu0 %v2304
  %5236 = vmatmul.mubr.bf16.gmra.mxu0 %v2303
  %v5237 = vpop.f32.mrf.mxu0
  %v5238 = vadd.f32 %v5197, %v5237
  %v5239 = vpop.f32.mrf.mxu0
  %v5240 = vadd.f32 %v5199, %v5239
  %v5241 = vpop.f32.mrf.mxu0
  %v5242 = vpop.f32.mrf.mxu0
  %5243 = vdwg.mxu0
  %5244 = vmatprep.subr.bf16.mxu0 %v4540
  %5245 = vmatpush1.bf16.msra.mxu0 %v4539
  %5246 = vmatprep.subr.bf16.mxu0 %v4533
  %5247 = vmatpush1.bf16.msra.mxu0 %v4532
  %5248 = vmatprep.subr.bf16.mxu0 %v4526
  %5249 = vmatpush1.bf16.msra.mxu0 %v4525
  %5250 = vmatprep.subr.bf16.mxu0 %v4519
  %5251 = vmatpush1.bf16.msra.mxu0 %v4518
  %5252 = vmatprep.subr.bf16.mxu0 %v4512
  %5253 = vmatpush1.bf16.msra.mxu0 %v4511
  %5254 = vmatprep.subr.bf16.mxu0 %v4505
  %5255 = vmatpush1.bf16.msra.mxu0 %v4504
  %5256 = vmatprep.subr.bf16.mxu0 %v4498
  %5257 = vmatpush1.bf16.msra.mxu0 %v4497
  %5258 = vmatprep.subr.bf16.mxu0 %v4491
  %5259 = vmatpush1.bf16.msra.mxu0 %v4490
  %5260 = vmatprep.subr.bf16.mxu0 %v4596
  %5261 = vmatpush2.bf16.msra.mxu0 %v4595
  %5262 = vmatprep.subr.bf16.mxu0 %v4589
  %5263 = vmatpush2.bf16.msra.mxu0 %v4588
  %5264 = vmatprep.subr.bf16.mxu0 %v4582
  %5265 = vmatpush2.bf16.msra.mxu0 %v4581
  %5266 = vmatprep.subr.bf16.mxu0 %v4575
  %5267 = vmatpush2.bf16.msra.mxu0 %v4574
  %5268 = vmatprep.subr.bf16.mxu0 %v4568
  %5269 = vmatpush2.bf16.msra.mxu0 %v4567
  %5270 = vmatprep.subr.bf16.mxu0 %v4561
  %5271 = vmatpush2.bf16.msra.mxu0 %v4560
  %5272 = vmatprep.subr.bf16.mxu0 %v4554
  %5273 = vmatpush2.bf16.msra.mxu0 %v4553
  %5274 = vmatprep.subr.bf16.mxu0 %v4547
  %5275 = vmatpush2.bf16.msra.mxu0 %v4546
  %5276 = vmatprep.mubr.bf16.mxu0 %v2306
  %5277 = vmatmul.mubr.bf16.gmra.mxu0 %v2305
  %v5278 = vpop.f32.mrf.mxu0
  %v5279 = vadd.f32 %v5238, %v5278
  %v5280 = vpop.f32.mrf.mxu0
  %v5281 = vadd.f32 %v5240, %v5280
  %v5282 = vpop.f32.mrf.mxu0
  %v5283 = vpop.f32.mrf.mxu0
  %5284 = vdwg.mxu0
  %5285 = vmatprep.subr.bf16.mxu0 %v4652
  %5286 = vmatpush1.bf16.msra.mxu0 %v4651
  %5287 = vmatprep.subr.bf16.mxu0 %v4645
  %5288 = vmatpush1.bf16.msra.mxu0 %v4644
  %5289 = vmatprep.subr.bf16.mxu0 %v4638
  %5290 = vmatpush1.bf16.msra.mxu0 %v4637
  %5291 = vmatprep.subr.bf16.mxu0 %v4631
  %5292 = vmatpush1.bf16.msra.mxu0 %v4630
  %5293 = vmatprep.subr.bf16.mxu0 %v4624
  %5294 = vmatpush1.bf16.msra.mxu0 %v4623
  %5295 = vmatprep.subr.bf16.mxu0 %v4617
  %5296 = vmatpush1.bf16.msra.mxu0 %v4616
  %5297 = vmatprep.subr.bf16.mxu0 %v4610
  %5298 = vmatpush1.bf16.msra.mxu0 %v4609
  %5299 = vmatprep.subr.bf16.mxu0 %v4603
  %5300 = vmatpush1.bf16.msra.mxu0 %v4602
  %5301 = vmatprep.subr.bf16.mxu0 %v4708
  %5302 = vmatpush2.bf16.msra.mxu0 %v4707
  %5303 = vmatprep.subr.bf16.mxu0 %v4701
  %5304 = vmatpush2.bf16.msra.mxu0 %v4700
  %5305 = vmatprep.subr.bf16.mxu0 %v4694
  %5306 = vmatpush2.bf16.msra.mxu0 %v4693
  %5307 = vmatprep.subr.bf16.mxu0 %v4687
  %5308 = vmatpush2.bf16.msra.mxu0 %v4686
  %5309 = vmatprep.subr.bf16.mxu0 %v4680
  %5310 = vmatpush2.bf16.msra.mxu0 %v4679
  %5311 = vmatprep.subr.bf16.mxu0 %v4673
  %5312 = vmatpush2.bf16.msra.mxu0 %v4672
  %5313 = vmatprep.subr.bf16.mxu0 %v4666
  %5314 = vmatpush2.bf16.msra.mxu0 %v4665
  %5315 = vmatprep.subr.bf16.mxu0 %v4659
  %5316 = vmatpush2.bf16.msra.mxu0 %v4658
  %5317 = vmatprep.mubr.bf16.mxu0 %v2308
  %5318 = vmatmul.mubr.bf16.gmra.mxu0 %v2307
  %v5319 = vpop.f32.mrf.mxu0
  %v5320 = vadd.f32 %v5279, %v5319
  %v5321 = vpop.f32.mrf.mxu0
  %v5322 = vadd.f32 %v5281, %v5321
  %v5323 = vpop.f32.mrf.mxu0
  %v5324 = vpop.f32.mrf.mxu0
  %5325 = vdwg.mxu0
  %5326 = vmatprep.subr.bf16.mxu0 %v4318
  %5327 = vmatpush1.bf16.msra.mxu0 %v4317
  %5328 = vmatprep.subr.bf16.mxu0 %v4311
  %5329 = vmatpush1.bf16.msra.mxu0 %v4310
  %5330 = vmatprep.subr.bf16.mxu0 %v4304
  %5331 = vmatpush1.bf16.msra.mxu0 %v4303
  %5332 = vmatprep.subr.bf16.mxu0 %v4297
  %5333 = vmatpush1.bf16.msra.mxu0 %v4296
  %5334 = vmatprep.subr.bf16.mxu0 %v4290
  %5335 = vmatpush1.bf16.msra.mxu0 %v4289
  %5336 = vmatprep.subr.bf16.mxu0 %v4283
  %5337 = vmatpush1.bf16.msra.mxu0 %v4282
  %5338 = vmatprep.subr.bf16.mxu0 %v4276
  %5339 = vmatpush1.bf16.msra.mxu0 %v4275
  %5340 = vmatprep.subr.bf16.mxu0 %v4269
  %5341 = vmatpush1.bf16.msra.mxu0 %v4268
  %5342 = vmatprep.subr.bf16.mxu0 %v4374
  %5343 = vmatpush2.bf16.msra.mxu0 %v4373
  %5344 = vmatprep.subr.bf16.mxu0 %v4367
  %5345 = vmatpush2.bf16.msra.mxu0 %v4366
  %5346 = vmatprep.subr.bf16.mxu0 %v4360
  %5347 = vmatpush2.bf16.msra.mxu0 %v4359
  %5348 = vmatprep.subr.bf16.mxu0 %v4353
  %5349 = vmatpush2.bf16.msra.mxu0 %v4352
  %5350 = vmatprep.subr.bf16.mxu0 %v4346
  %5351 = vmatpush2.bf16.msra.mxu0 %v4345
  %5352 = vmatprep.subr.bf16.mxu0 %v4339
  %5353 = vmatpush2.bf16.msra.mxu0 %v4338
  %5354 = vmatprep.subr.bf16.mxu0 %v4332
  %5355 = vmatpush2.bf16.msra.mxu0 %v4331
  %5356 = vmatprep.subr.bf16.mxu0 %v4325
  %5357 = vmatpush2.bf16.msra.mxu0 %v4324
  %5358 = vmatprep.mubr.bf16.mxu0 %v2302
  %5359 = vmatmul.mubr.bf16.gmra.mxu0 %v2301
  %v5360 = vpop.f32.mrf.mxu0
  %v5361 = vadd.f32 %v2834, %v5360
  %v5362 = vpop.f32.mrf.mxu0
  %v5363 = vadd.f32 %v2838, %v5362
  %v5364 = vpop.f32.mrf.mxu0
  %v5365 = vpop.f32.mrf.mxu0
  %5366 = vdwg.mxu0
  %5367 = vmatprep.subr.bf16.mxu0 %v4430
  %5368 = vmatpush1.bf16.msra.mxu0 %v4429
  %5369 = vmatprep.subr.bf16.mxu0 %v4423
  %5370 = vmatpush1.bf16.msra.mxu0 %v4422
  %5371 = vmatprep.subr.bf16.mxu0 %v4416
  %5372 = vmatpush1.bf16.msra.mxu0 %v4415
  %5373 = vmatprep.subr.bf16.mxu0 %v4409
  %5374 = vmatpush1.bf16.msra.mxu0 %v4408
  %5375 = vmatprep.subr.bf16.mxu0 %v4402
  %5376 = vmatpush1.bf16.msra.mxu0 %v4401
  %5377 = vmatprep.subr.bf16.mxu0 %v4395
  %5378 = vmatpush1.bf16.msra.mxu0 %v4394
  %5379 = vmatprep.subr.bf16.mxu0 %v4388
  %5380 = vmatpush1.bf16.msra.mxu0 %v4387
  %5381 = vmatprep.subr.bf16.mxu0 %v4381
  %5382 = vmatpush1.bf16.msra.mxu0 %v4380
  %5383 = vmatprep.subr.bf16.mxu0 %v4486
  %5384 = vmatpush2.bf16.msra.mxu0 %v4485
  %5385 = vmatprep.subr.bf16.mxu0 %v4479
  %5386 = vmatpush2.bf16.msra.mxu0 %v4478
  %5387 = vmatprep.subr.bf16.mxu0 %v4472
  %5388 = vmatpush2.bf16.msra.mxu0 %v4471
  %5389 = vmatprep.subr.bf16.mxu0 %v4465
  %5390 = vmatpush2.bf16.msra.mxu0 %v4464
  %5391 = vmatprep.subr.bf16.mxu0 %v4458
  %5392 = vmatpush2.bf16.msra.mxu0 %v4457
  %5393 = vmatprep.subr.bf16.mxu0 %v4451
  %5394 = vmatpush2.bf16.msra.mxu0 %v4450
  %5395 = vmatprep.subr.bf16.mxu0 %v4444
  %5396 = vmatpush2.bf16.msra.mxu0 %v4443
  %5397 = vmatprep.subr.bf16.mxu0 %v4437
  %5398 = vmatpush2.bf16.msra.mxu0 %v4436
  %5399 = vmatprep.mubr.bf16.mxu0 %v2304
  %5400 = vmatmul.mubr.bf16.gmra.mxu0 %v2303
  %v5401 = vpop.f32.mrf.mxu0
  %v5402 = vadd.f32 %v5361, %v5401
  %v5403 = vpop.f32.mrf.mxu0
  %v5404 = vadd.f32 %v5363, %v5403
  %v5405 = vpop.f32.mrf.mxu0
  %v5406 = vpop.f32.mrf.mxu0
  %5407 = vdwg.mxu0
  %5408 = vmatprep.subr.bf16.mxu0 %v4542
  %5409 = vmatpush1.bf16.msra.mxu0 %v4541
  %5410 = vmatprep.subr.bf16.mxu0 %v4535
  %5411 = vmatpush1.bf16.msra.mxu0 %v4534
  %5412 = vmatprep.subr.bf16.mxu0 %v4528
  %5413 = vmatpush1.bf16.msra.mxu0 %v4527
  %5414 = vmatprep.subr.bf16.mxu0 %v4521
  %5415 = vmatpush1.bf16.msra.mxu0 %v4520
  %5416 = vmatprep.subr.bf16.mxu0 %v4514
  %5417 = vmatpush1.bf16.msra.mxu0 %v4513
  %5418 = vmatprep.subr.bf16.mxu0 %v4507
  %5419 = vmatpush1.bf16.msra.mxu0 %v4506
  %5420 = vmatprep.subr.bf16.mxu0 %v4500
  %5421 = vmatpush1.bf16.msra.mxu0 %v4499
  %5422 = vmatprep.subr.bf16.mxu0 %v4493
  %5423 = vmatpush1.bf16.msra.mxu0 %v4492
  %5424 = vmatprep.subr.bf16.mxu0 %v4598
  %5425 = vmatpush2.bf16.msra.mxu0 %v4597
  %5426 = vmatprep.subr.bf16.mxu0 %v4591
  %5427 = vmatpush2.bf16.msra.mxu0 %v4590
  %5428 = vmatprep.subr.bf16.mxu0 %v4584
  %5429 = vmatpush2.bf16.msra.mxu0 %v4583
  %5430 = vmatprep.subr.bf16.mxu0 %v4577
  %5431 = vmatpush2.bf16.msra.mxu0 %v4576
  %5432 = vmatprep.subr.bf16.mxu0 %v4570
  %5433 = vmatpush2.bf16.msra.mxu0 %v4569
  %5434 = vmatprep.subr.bf16.mxu0 %v4563
  %5435 = vmatpush2.bf16.msra.mxu0 %v4562
  %5436 = vmatprep.subr.bf16.mxu0 %v4556
  %5437 = vmatpush2.bf16.msra.mxu0 %v4555
  %5438 = vmatprep.subr.bf16.mxu0 %v4549
  %5439 = vmatpush2.bf16.msra.mxu0 %v4548
  %5440 = vmatprep.mubr.bf16.mxu0 %v2306
  %5441 = vmatmul.mubr.bf16.gmra.mxu0 %v2305
  %v5442 = vpop.f32.mrf.mxu0
  %v5443 = vadd.f32 %v5402, %v5442
  %v5444 = vpop.f32.mrf.mxu0
  %v5445 = vadd.f32 %v5404, %v5444
  %v5446 = vpop.f32.mrf.mxu0
  %v5447 = vpop.f32.mrf.mxu0
  %5448 = vdwg.mxu0
  %5449 = vmatprep.subr.bf16.mxu0 %v4654
  %5450 = vmatpush1.bf16.msra.mxu0 %v4653
  %5451 = vmatprep.subr.bf16.mxu0 %v4647
  %5452 = vmatpush1.bf16.msra.mxu0 %v4646
  %5453 = vmatprep.subr.bf16.mxu0 %v4640
  %5454 = vmatpush1.bf16.msra.mxu0 %v4639
  %5455 = vmatprep.subr.bf16.mxu0 %v4633
  %5456 = vmatpush1.bf16.msra.mxu0 %v4632
  %5457 = vmatprep.subr.bf16.mxu0 %v4626
  %5458 = vmatpush1.bf16.msra.mxu0 %v4625
  %5459 = vmatprep.subr.bf16.mxu0 %v4619
  %5460 = vmatpush1.bf16.msra.mxu0 %v4618
  %5461 = vmatprep.subr.bf16.mxu0 %v4612
  %5462 = vmatpush1.bf16.msra.mxu0 %v4611
  %5463 = vmatprep.subr.bf16.mxu0 %v4605
  %5464 = vmatpush1.bf16.msra.mxu0 %v4604
  %5465 = vmatprep.subr.bf16.mxu0 %v4710
  %5466 = vmatpush2.bf16.msra.mxu0 %v4709
  %5467 = vmatprep.subr.bf16.mxu0 %v4703
  %5468 = vmatpush2.bf16.msra.mxu0 %v4702
  %5469 = vmatprep.subr.bf16.mxu0 %v4696
  %5470 = vmatpush2.bf16.msra.mxu0 %v4695
  %5471 = vmatprep.subr.bf16.mxu0 %v4689
  %5472 = vmatpush2.bf16.msra.mxu0 %v4688
  %5473 = vmatprep.subr.bf16.mxu0 %v4682
  %5474 = vmatpush2.bf16.msra.mxu0 %v4681
  %5475 = vmatprep.subr.bf16.mxu0 %v4675
  %5476 = vmatpush2.bf16.msra.mxu0 %v4674
  %5477 = vmatprep.subr.bf16.mxu0 %v4668
  %5478 = vmatpush2.bf16.msra.mxu0 %v4667
  %5479 = vmatprep.subr.bf16.mxu0 %v4661
  %5480 = vmatpush2.bf16.msra.mxu0 %v4660
  %5481 = vmatprep.mubr.bf16.mxu0 %v2308
  %5482 = vmatmul.mubr.bf16.gmra.mxu0 %v2307
  %v5483 = vpop.f32.mrf.mxu0
  %v5484 = vadd.f32 %v5443, %v5483
  %v5485 = vpop.f32.mrf.mxu0
  %v5486 = vadd.f32 %v5445, %v5485
  %v5487 = vpop.f32.mrf.mxu0
  %v5488 = vpop.f32.mrf.mxu0
  %5489 = vdwg.mxu0
  %5490 = vmatprep.subr.bf16.mxu0 %v4320
  %5491 = vmatpush1.bf16.msra.mxu0 %v4319
  %5492 = vmatprep.subr.bf16.mxu0 %v4313
  %5493 = vmatpush1.bf16.msra.mxu0 %v4312
  %5494 = vmatprep.subr.bf16.mxu0 %v4306
  %5495 = vmatpush1.bf16.msra.mxu0 %v4305
  %5496 = vmatprep.subr.bf16.mxu0 %v4299
  %5497 = vmatpush1.bf16.msra.mxu0 %v4298
  %5498 = vmatprep.subr.bf16.mxu0 %v4292
  %5499 = vmatpush1.bf16.msra.mxu0 %v4291
  %5500 = vmatprep.subr.bf16.mxu0 %v4285
  %5501 = vmatpush1.bf16.msra.mxu0 %v4284
  %5502 = vmatprep.subr.bf16.mxu0 %v4278
  %5503 = vmatpush1.bf16.msra.mxu0 %v4277
  %5504 = vmatprep.subr.bf16.mxu0 %v4271
  %5505 = vmatpush1.bf16.msra.mxu0 %v4270
  %5506 = vmatprep.subr.bf16.mxu0 %v4376
  %5507 = vmatpush2.bf16.msra.mxu0 %v4375
  %5508 = vmatprep.subr.bf16.mxu0 %v4369
  %5509 = vmatpush2.bf16.msra.mxu0 %v4368
  %5510 = vmatprep.subr.bf16.mxu0 %v4362
  %5511 = vmatpush2.bf16.msra.mxu0 %v4361
  %5512 = vmatprep.subr.bf16.mxu0 %v4355
  %5513 = vmatpush2.bf16.msra.mxu0 %v4354
  %5514 = vmatprep.subr.bf16.mxu0 %v4348
  %5515 = vmatpush2.bf16.msra.mxu0 %v4347
  %5516 = vmatprep.subr.bf16.mxu0 %v4341
  %5517 = vmatpush2.bf16.msra.mxu0 %v4340
  %5518 = vmatprep.subr.bf16.mxu0 %v4334
  %5519 = vmatpush2.bf16.msra.mxu0 %v4333
  %5520 = vmatprep.subr.bf16.mxu0 %v4327
  %5521 = vmatpush2.bf16.msra.mxu0 %v4326
  %5522 = vmatprep.mubr.bf16.mxu0 %v2302
  %5523 = vmatmul.mubr.bf16.gmra.mxu0 %v2301
  %v5524 = vpop.f32.mrf.mxu0
  %v5525 = vadd.f32 %v2842, %v5524
  %v5526 = vpop.f32.mrf.mxu0
  %v5527 = vadd.f32 %v2846, %v5526
  %v5528 = vpop.f32.mrf.mxu0
  %v5529 = vpop.f32.mrf.mxu0
  %5530 = vdwg.mxu0
  %5531 = vmatprep.subr.bf16.mxu0 %v4432
  %5532 = vmatpush1.bf16.msra.mxu0 %v4431
  %5533 = vmatprep.subr.bf16.mxu0 %v4425
  %5534 = vmatpush1.bf16.msra.mxu0 %v4424
  %5535 = vmatprep.subr.bf16.mxu0 %v4418
  %5536 = vmatpush1.bf16.msra.mxu0 %v4417
  %5537 = vmatprep.subr.bf16.mxu0 %v4411
  %5538 = vmatpush1.bf16.msra.mxu0 %v4410
  %5539 = vmatprep.subr.bf16.mxu0 %v4404
  %5540 = vmatpush1.bf16.msra.mxu0 %v4403
  %5541 = vmatprep.subr.bf16.mxu0 %v4397
  %5542 = vmatpush1.bf16.msra.mxu0 %v4396
  %5543 = vmatprep.subr.bf16.mxu0 %v4390
  %5544 = vmatpush1.bf16.msra.mxu0 %v4389
  %5545 = vmatprep.subr.bf16.mxu0 %v4383
  %5546 = vmatpush1.bf16.msra.mxu0 %v4382
  %5547 = vmatprep.subr.bf16.mxu0 %v4488
  %5548 = vmatpush2.bf16.msra.mxu0 %v4487
  %5549 = vmatprep.subr.bf16.mxu0 %v4481
  %5550 = vmatpush2.bf16.msra.mxu0 %v4480
  %5551 = vmatprep.subr.bf16.mxu0 %v4474
  %5552 = vmatpush2.bf16.msra.mxu0 %v4473
  %5553 = vmatprep.subr.bf16.mxu0 %v4467
  %5554 = vmatpush2.bf16.msra.mxu0 %v4466
  %5555 = vmatprep.subr.bf16.mxu0 %v4460
  %5556 = vmatpush2.bf16.msra.mxu0 %v4459
  %5557 = vmatprep.subr.bf16.mxu0 %v4453
  %5558 = vmatpush2.bf16.msra.mxu0 %v4452
  %5559 = vmatprep.subr.bf16.mxu0 %v4446
  %5560 = vmatpush2.bf16.msra.mxu0 %v4445
  %5561 = vmatprep.subr.bf16.mxu0 %v4439
  %5562 = vmatpush2.bf16.msra.mxu0 %v4438
  %5563 = vmatprep.mubr.bf16.mxu0 %v2304
  %5564 = vmatmul.mubr.bf16.gmra.mxu0 %v2303
  %v5565 = vpop.f32.mrf.mxu0
  %v5566 = vadd.f32 %v5525, %v5565
  %v5567 = vpop.f32.mrf.mxu0
  %v5568 = vadd.f32 %v5527, %v5567
  %v5569 = vpop.f32.mrf.mxu0
  %v5570 = vpop.f32.mrf.mxu0
  %5571 = vdwg.mxu0
  %5572 = vmatprep.subr.bf16.mxu0 %v4544
  %5573 = vmatpush1.bf16.msra.mxu0 %v4543
  %5574 = vmatprep.subr.bf16.mxu0 %v4537
  %5575 = vmatpush1.bf16.msra.mxu0 %v4536
  %5576 = vmatprep.subr.bf16.mxu0 %v4530
  %5577 = vmatpush1.bf16.msra.mxu0 %v4529
  %5578 = vmatprep.subr.bf16.mxu0 %v4523
  %5579 = vmatpush1.bf16.msra.mxu0 %v4522
  %5580 = vmatprep.subr.bf16.mxu0 %v4516
  %5581 = vmatpush1.bf16.msra.mxu0 %v4515
  %5582 = vmatprep.subr.bf16.mxu0 %v4509
  %5583 = vmatpush1.bf16.msra.mxu0 %v4508
  %5584 = vmatprep.subr.bf16.mxu0 %v4502
  %5585 = vmatpush1.bf16.msra.mxu0 %v4501
  %5586 = vmatprep.subr.bf16.mxu0 %v4495
  %5587 = vmatpush1.bf16.msra.mxu0 %v4494
  %5588 = vmatprep.subr.bf16.mxu0 %v4600
  %5589 = vmatpush2.bf16.msra.mxu0 %v4599
  %5590 = vmatprep.subr.bf16.mxu0 %v4593
  %5591 = vmatpush2.bf16.msra.mxu0 %v4592
  %5592 = vmatprep.subr.bf16.mxu0 %v4586
  %5593 = vmatpush2.bf16.msra.mxu0 %v4585
  %5594 = vmatprep.subr.bf16.mxu0 %v4579
  %5595 = vmatpush2.bf16.msra.mxu0 %v4578
  %5596 = vmatprep.subr.bf16.mxu0 %v4572
  %5597 = vmatpush2.bf16.msra.mxu0 %v4571
  %5598 = vmatprep.subr.bf16.mxu0 %v4565
  %5599 = vmatpush2.bf16.msra.mxu0 %v4564
  %5600 = vmatprep.subr.bf16.mxu0 %v4558
  %5601 = vmatpush2.bf16.msra.mxu0 %v4557
  %5602 = vmatprep.subr.bf16.mxu0 %v4551
  %5603 = vmatpush2.bf16.msra.mxu0 %v4550
  %5604 = vmatprep.mubr.bf16.mxu0 %v2306
  %5605 = vmatmul.mubr.bf16.gmra.mxu0 %v2305
  %v5606 = vpop.f32.mrf.mxu0
  %v5607 = vadd.f32 %v5566, %v5606
  %v5608 = vpop.f32.mrf.mxu0
  %v5609 = vadd.f32 %v5568, %v5608
  %v5610 = vpop.f32.mrf.mxu0
  %v5611 = vpop.f32.mrf.mxu0
  %5612 = vdwg.mxu0
  %5613 = vmatprep.subr.bf16.mxu0 %v4656
  %5614 = vmatpush1.bf16.msra.mxu0 %v4655
  %5615 = vmatprep.subr.bf16.mxu0 %v4649
  %5616 = vmatpush1.bf16.msra.mxu0 %v4648
  %5617 = vmatprep.subr.bf16.mxu0 %v4642
  %5618 = vmatpush1.bf16.msra.mxu0 %v4641
  %5619 = vmatprep.subr.bf16.mxu0 %v4635
  %5620 = vmatpush1.bf16.msra.mxu0 %v4634
  %5621 = vmatprep.subr.bf16.mxu0 %v4628
  %5622 = vmatpush1.bf16.msra.mxu0 %v4627
  %5623 = vmatprep.subr.bf16.mxu0 %v4621
  %5624 = vmatpush1.bf16.msra.mxu0 %v4620
  %5625 = vmatprep.subr.bf16.mxu0 %v4614
  %5626 = vmatpush1.bf16.msra.mxu0 %v4613
  %5627 = vmatprep.subr.bf16.mxu0 %v4607
  %5628 = vmatpush1.bf16.msra.mxu0 %v4606
  %5629 = vmatprep.subr.bf16.mxu0 %v4712
  %5630 = vmatpush2.bf16.msra.mxu0 %v4711
  %5631 = vmatprep.subr.bf16.mxu0 %v4705
  %5632 = vmatpush2.bf16.msra.mxu0 %v4704
  %5633 = vmatprep.subr.bf16.mxu0 %v4698
  %5634 = vmatpush2.bf16.msra.mxu0 %v4697
  %5635 = vmatprep.subr.bf16.mxu0 %v4691
  %5636 = vmatpush2.bf16.msra.mxu0 %v4690
  %5637 = vmatprep.subr.bf16.mxu0 %v4684
  %5638 = vmatpush2.bf16.msra.mxu0 %v4683
  %5639 = vmatprep.subr.bf16.mxu0 %v4677
  %5640 = vmatpush2.bf16.msra.mxu0 %v4676
  %5641 = vmatprep.subr.bf16.mxu0 %v4670
  %5642 = vmatpush2.bf16.msra.mxu0 %v4669
  %5643 = vmatprep.subr.bf16.mxu0 %v4663
  %5644 = vmatpush2.bf16.msra.mxu0 %v4662
  %5645 = vmatprep.mubr.bf16.mxu0 %v2308
  %5646 = vmatmul.mubr.bf16.gmra.mxu0 %v2307
  %v5647 = vpop.f32.mrf.mxu0
  %v5648 = vadd.f32 %v5607, %v5647
  %v5649 = vpop.f32.mrf.mxu0
  %v5650 = vadd.f32 %v5609, %v5649
  %v5651 = vpop.f32.mrf.mxu0
  %v5652 = vpop.f32.mrf.mxu0
  %5653 = vdwg.mxu0
  %5654 = vmatprep.subr.bf16.mxu0 0
  %5655 = vmatpush1.bf16.msra.mxu0 %v4321
  %5656 = vmatprep.subr.bf16.mxu0 0
  %5657 = vmatpush1.bf16.msra.mxu0 %v4314
  %5658 = vmatprep.subr.bf16.mxu0 0
  %5659 = vmatpush1.bf16.msra.mxu0 %v4307
  %5660 = vmatprep.subr.bf16.mxu0 0
  %5661 = vmatpush1.bf16.msra.mxu0 %v4300
  %5662 = vmatprep.subr.bf16.mxu0 0
  %5663 = vmatpush1.bf16.msra.mxu0 %v4293
  %5664 = vmatprep.subr.bf16.mxu0 0
  %5665 = vmatpush1.bf16.msra.mxu0 %v4286
  %5666 = vmatprep.subr.bf16.mxu0 0
  %5667 = vmatpush1.bf16.msra.mxu0 %v4279
  %5668 = vmatprep.subr.bf16.mxu0 0
  %5669 = vmatpush1.bf16.msra.mxu0 %v4272
  %5670 = vmatprep.subr.bf16.mxu0 0
  %5671 = vmatpush2.bf16.msra.mxu0 %v4377
  %5672 = vmatprep.subr.bf16.mxu0 0
  %5673 = vmatpush2.bf16.msra.mxu0 %v4370
  %5674 = vmatprep.subr.bf16.mxu0 0
  %5675 = vmatpush2.bf16.msra.mxu0 %v4363
  %5676 = vmatprep.subr.bf16.mxu0 0
  %5677 = vmatpush2.bf16.msra.mxu0 %v4356
  %5678 = vmatprep.subr.bf16.mxu0 0
  %5679 = vmatpush2.bf16.msra.mxu0 %v4349
  %5680 = vmatprep.subr.bf16.mxu0 0
  %5681 = vmatpush2.bf16.msra.mxu0 %v4342
  %5682 = vmatprep.subr.bf16.mxu0 0
  %5683 = vmatpush2.bf16.msra.mxu0 %v4335
  %5684 = vmatprep.subr.bf16.mxu0 0
  %5685 = vmatpush2.bf16.msra.mxu0 %v4328
  %5686 = vmatprep.mubr.bf16.mxu0 %v2302
  %5687 = vmatmul.mubr.bf16.gmra.mxu0 %v2301
  %v5688 = vpop.f32.mrf.mxu0
  %v5689 = vadd.f32 %v2850, %v5688
  %v5690 = vpop.f32.mrf.mxu0
  %v5691 = vpop.f32.mrf.mxu0
  %v5692 = vpop.f32.mrf.mxu0
  %5693 = vdwg.mxu0
  %5694 = vmatprep.subr.bf16.mxu0 0
  %5695 = vmatpush1.bf16.msra.mxu0 %v4433
  %5696 = vmatprep.subr.bf16.mxu0 0
  %5697 = vmatpush1.bf16.msra.mxu0 %v4426
  %5698 = vmatprep.subr.bf16.mxu0 0
  %5699 = vmatpush1.bf16.msra.mxu0 %v4419
  %5700 = vmatprep.subr.bf16.mxu0 0
  %5701 = vmatpush1.bf16.msra.mxu0 %v4412
  %5702 = vmatprep.subr.bf16.mxu0 0
  %5703 = vmatpush1.bf16.msra.mxu0 %v4405
  %5704 = vmatprep.subr.bf16.mxu0 0
  %5705 = vmatpush1.bf16.msra.mxu0 %v4398
  %5706 = vmatprep.subr.bf16.mxu0 0
  %5707 = vmatpush1.bf16.msra.mxu0 %v4391
  %5708 = vmatprep.subr.bf16.mxu0 0
  %5709 = vmatpush1.bf16.msra.mxu0 %v4384
  %5710 = vmatprep.subr.bf16.mxu0 0
  %5711 = vmatpush2.bf16.msra.mxu0 %v4489
  %5712 = vmatprep.subr.bf16.mxu0 0
  %5713 = vmatpush2.bf16.msra.mxu0 %v4482
  %5714 = vmatprep.subr.bf16.mxu0 0
  %5715 = vmatpush2.bf16.msra.mxu0 %v4475
  %5716 = vmatprep.subr.bf16.mxu0 0
  %5717 = vmatpush2.bf16.msra.mxu0 %v4468
  %5718 = vmatprep.subr.bf16.mxu0 0
  %5719 = vmatpush2.bf16.msra.mxu0 %v4461
  %5720 = vmatprep.subr.bf16.mxu0 0
  %5721 = vmatpush2.bf16.msra.mxu0 %v4454
  %5722 = vmatprep.subr.bf16.mxu0 0
  %5723 = vmatpush2.bf16.msra.mxu0 %v4447
  %5724 = vmatprep.subr.bf16.mxu0 0
  %5725 = vmatpush2.bf16.msra.mxu0 %v4440
  %5726 = vmatprep.mubr.bf16.mxu0 %v2304
  %5727 = vmatmul.mubr.bf16.gmra.mxu0 %v2303
  %v5728 = vpop.f32.mrf.mxu0
  %v5729 = vadd.f32 %v5689, %v5728
  %v5730 = vpop.f32.mrf.mxu0
  %v5731 = vpop.f32.mrf.mxu0
  %v5732 = vpop.f32.mrf.mxu0
  %5733 = vdwg.mxu0
  %5734 = vmatprep.subr.bf16.mxu0 0
  %5735 = vmatpush1.bf16.msra.mxu0 %v4545
  %5736 = vmatprep.subr.bf16.mxu0 0
  %5737 = vmatpush1.bf16.msra.mxu0 %v4538
  %5738 = vmatprep.subr.bf16.mxu0 0
  %5739 = vmatpush1.bf16.msra.mxu0 %v4531
  %5740 = vmatprep.subr.bf16.mxu0 0
  %5741 = vmatpush1.bf16.msra.mxu0 %v4524
  %5742 = vmatprep.subr.bf16.mxu0 0
  %5743 = vmatpush1.bf16.msra.mxu0 %v4517
  %5744 = vmatprep.subr.bf16.mxu0 0
  %5745 = vmatpush1.bf16.msra.mxu0 %v4510
  %5746 = vmatprep.subr.bf16.mxu0 0
  %5747 = vmatpush1.bf16.msra.mxu0 %v4503
  %5748 = vmatprep.subr.bf16.mxu0 0
  %5749 = vmatpush1.bf16.msra.mxu0 %v4496
  %5750 = vmatprep.subr.bf16.mxu0 0
  %5751 = vmatpush2.bf16.msra.mxu0 %v4601
  %5752 = vmatprep.subr.bf16.mxu0 0
  %5753 = vmatpush2.bf16.msra.mxu0 %v4594
  %5754 = vmatprep.subr.bf16.mxu0 0
  %5755 = vmatpush2.bf16.msra.mxu0 %v4587
  %5756 = vmatprep.subr.bf16.mxu0 0
  %5757 = vmatpush2.bf16.msra.mxu0 %v4580
  %5758 = vmatprep.subr.bf16.mxu0 0
  %5759 = vmatpush2.bf16.msra.mxu0 %v4573
  %5760 = vmatprep.subr.bf16.mxu0 0
  %5761 = vmatpush2.bf16.msra.mxu0 %v4566
  %5762 = vmatprep.subr.bf16.mxu0 0
  %5763 = vmatpush2.bf16.msra.mxu0 %v4559
  %5764 = vmatprep.subr.bf16.mxu0 0
  %5765 = vmatpush2.bf16.msra.mxu0 %v4552
  %5766 = vmatprep.mubr.bf16.mxu0 %v2306
  %5767 = vmatmul.mubr.bf16.gmra.mxu0 %v2305
  %v5768 = vpop.f32.mrf.mxu0
  %v5769 = vadd.f32 %v5729, %v5768
  %v5770 = vpop.f32.mrf.mxu0
  %v5771 = vpop.f32.mrf.mxu0
  %v5772 = vpop.f32.mrf.mxu0
  %5773 = vdwg.mxu0
  %5774 = vmatprep.subr.bf16.mxu0 0
  %5775 = vmatpush1.bf16.msra.mxu0 %v4657
  %5776 = vmatprep.subr.bf16.mxu0 0
  %5777 = vmatpush1.bf16.msra.mxu0 %v4650
  %5778 = vmatprep.subr.bf16.mxu0 0
  %5779 = vmatpush1.bf16.msra.mxu0 %v4643
  %5780 = vmatprep.subr.bf16.mxu0 0
  %5781 = vmatpush1.bf16.msra.mxu0 %v4636
  %5782 = vmatprep.subr.bf16.mxu0 0
  %5783 = vmatpush1.bf16.msra.mxu0 %v4629
  %5784 = vmatprep.subr.bf16.mxu0 0
  %5785 = vmatpush1.bf16.msra.mxu0 %v4622
  %5786 = vmatprep.subr.bf16.mxu0 0
  %5787 = vmatpush1.bf16.msra.mxu0 %v4615
  %5788 = vmatprep.subr.bf16.mxu0 0
  %5789 = vmatpush1.bf16.msra.mxu0 %v4608
  %5790 = vmatprep.subr.bf16.mxu0 0
  %5791 = vmatpush2.bf16.msra.mxu0 %v4713
  %5792 = vmatprep.subr.bf16.mxu0 0
  %5793 = vmatpush2.bf16.msra.mxu0 %v4706
  %5794 = vmatprep.subr.bf16.mxu0 0
  %5795 = vmatpush2.bf16.msra.mxu0 %v4699
  %5796 = vmatprep.subr.bf16.mxu0 0
  %5797 = vmatpush2.bf16.msra.mxu0 %v4692
  %5798 = vmatprep.subr.bf16.mxu0 0
  %5799 = vmatpush2.bf16.msra.mxu0 %v4685
  %5800 = vmatprep.subr.bf16.mxu0 0
  %5801 = vmatpush2.bf16.msra.mxu0 %v4678
  %5802 = vmatprep.subr.bf16.mxu0 0
  %5803 = vmatpush2.bf16.msra.mxu0 %v4671
  %5804 = vmatprep.subr.bf16.mxu0 0
  %5805 = vmatpush2.bf16.msra.mxu0 %v4664
  %5806 = vmatprep.mubr.bf16.mxu0 %v2308
  %5807 = vmatmul.mubr.bf16.gmra.mxu0 %v2307
  %v5808 = vpop.f32.mrf.mxu0
  %v5809 = vadd.f32 %v5769, %v5808
  %v5810 = vpop.f32.mrf.mxu0
  %v5811 = vpop.f32.mrf.mxu0
  %v5812 = vpop.f32.mrf.mxu0
  %5813 = vdwg.mxu0
  %v5814 = vsub.f32 0.0, %v5320
  %v5815 = vsub.f32 0.0, %v5322
  %v5816 = vsub.f32 0.0, %v5484
  %v5817 = vsub.f32 0.0, %v5486
  %v5818 = vsub.f32 0.0, %v5648
  %v5819 = vsub.f32 0.0, %v5650
  %v5820 = vsub.f32 0.0, %v5809
  %v5821 = vmul.f32 %v5814, 1.442695
  %v5822 = vpow.pop %v5821
  %v5823 = vmul.f32 %v5815, 1.442695
  %v5824 = vpow.pop %v5823
  %v5825 = vmul.f32 %v5816, 1.442695
  %v5826 = vpow.pop %v5825
  %v5827 = vmul.f32 %v5817, 1.442695
  %v5828 = vpow.pop %v5827
  %v5829 = vmul.f32 %v5818, 1.442695
  %v5830 = vpow.pop %v5829
  %v5831 = vmul.f32 %v5819, 1.442695
  %v5832 = vpow.pop %v5831
  %v5833 = vmul.f32 %v5820, 1.442695
  %v5834 = vpow.pop %v5833
  %v5835 = vadd.f32 %v5822, 1.0
  %v5836 = vadd.f32 %v5824, 1.0
  %v5837 = vadd.f32 %v5826, 1.0
  %v5838 = vadd.f32 %v5828, 1.0
  %v5839 = vadd.f32 %v5830, 1.0
  %v5840 = vadd.f32 %v5832, 1.0
  %v5841 = vadd.f32 %v5834, 1.0
  %v5842 = vrcp.pop %v5835
  %v5843 = vrcp.pop %v5836
  %v5844 = vrcp.pop %v5837
  %v5845 = vrcp.pop %v5838
  %v5846 = vrcp.pop %v5839
  %v5847 = vrcp.pop %v5840
  %v5848 = vrcp.pop %v5841
  %5849 = vst [vmem:[%s7] sm:$0xff] %v5842
  %5850 = vst [vmem:[%s7 + $0x8] sm:$0xff] %v5843
  %5851 = vst [vmem:[%s7 + $0x10] sm:$0xff] %v5844
  %5852 = vst [vmem:[%s7 + $0x18] sm:$0xff] %v5845
  %5853 = vst [vmem:[%s7 + $0x20] sm:$0xff] %v5846
  %5854 = vst [vmem:[%s7 + $0x28] sm:$0xff] %v5847
  %vm5855 = vcmask 130048
  %5856 = vst.msk [vmem:[%s7 + $0x30] sm:$0xff] %vm5855, %v5848
  // Predicated region
  $region30: #{reconstruction_network.1} parent=0 // pred_check
    _
  $region31: #{reconstruction_network.1} parent=0 // pred_check_branch
    %5858 = sbr.rel (0) target = $region33
  $region32: #{reconstruction_network.1} parent=0 // pred_region
    _
  $region33: #{reconstruction_network.1} parent=0 // pred_fallthru
    _
  // Predicated region
  $region34: #{reconstruction_network.1} parent=0 // pred_check
    _
  $region35: #{reconstruction_network.1} parent=0 // pred_check_branch
    %5860 = sbr.rel (0) target = $region37
  $region36: #{reconstruction_network.1} parent=0 // pred_region
    _
  $region37: #{reconstruction_network.1} parent=0 // pred_fallthru
    _

</llo_original>
